<compile_context>
chip_gen: v5e
topology: v5e:2x2
jax: 0.10.0
libtpu: 0.0.40
codegen_flags: <defaults>
</compile_context>

<pallas_src>
import functools

import jax
import jax.numpy as jnp
from jax.experimental import pallas as pl
from jax.experimental.pallas import tpu as pltpu

H1, H2, H3 = 1024, 512, 256
P_DROP = 0.3
NEG_SLOPE = 0.2

# keep an activation iff hash_bits >= round(P_DROP * 2**32)  ->  P(keep) = 0.7
_DROP_THRESHOLD = int(round(P_DROP * (1 << 32)))  # 1288490189


def _leaky_relu(h):
    return jnp.where(h >= 0.0, h, NEG_SLOPE * h)


def _dropout(h, seed_u32, row0, layer_salt):
    """Zero-mask dropout with keep prob 1-P_DROP.

    The 1/(1-p) inverted-dropout scale is folded into the next layer's weights
    by the wrapper, so this is a pure mask.  Randomness comes from a stateless
    counter hash of (seed, layer, global_row, col): portable (no TPU HW PRNG),
    deterministic, and distinct per batch tile because the global row index is
    part of the counter.
    """
    shape = h.shape
    r = jax.lax.broadcasted_iota(jnp.int32, shape, 0) + row0   # global batch row
    c = jax.lax.broadcasted_iota(jnp.int32, shape, 1)          # feature column
    v = r.astype(jnp.uint32) * jnp.uint32(0x9E3779B9)
    v = v + (c.astype(jnp.uint32) ^ (seed_u32 + jnp.uint32(layer_salt)))
    # murmur3 fmix32 finalizer
    v = v ^ (v >> 16)
    v = v * jnp.uint32(0x7FEB352D)
    v = v ^ (v >> 15)
    v = v * jnp.uint32(0x846CA68B)
    v = v ^ (v >> 16)
    keep = v >= jnp.uint32(_DROP_THRESHOLD)        # integer-threshold compare
    return jnp.where(keep, h, 0.0)


def disc_kernel(seed_ref,                                   # scalar prefetch (SMEM)
                x_ref, w1_ref, b1_ref, w2_ref, b2_ref,
                w3_ref, b3_ref, w4_ref, b4_ref,             # inputs (VMEM tiles)
                o_ref, *, training):                        # output
    tb = x_ref.shape[0]
    row0 = pl.program_id(0) * tb                            # global row offset of tile
    seed_u32 = seed_ref[0].astype(jnp.uint32)

    # fc1: bf16 operands on the MXU, f32 accumulation; epilogue in f32.
    h = jnp.dot(x_ref[...], w1_ref[...], preferred_element_type=jnp.float32)
    h = _leaky_relu(h + b1_ref[...])
    if training:
        h = _dropout(h, seed_u32, row0, 0x1000193)

    # fc2
    h = jnp.dot(h.astype(jnp.bfloat16), w2_ref[...],
                preferred_element_type=jnp.float32)
    h = _leaky_relu(h + b2_ref[...])
    if training:
        h = _dropout(h, seed_u32, row0, 0x2000193)

    # fc3
    h = jnp.dot(h.astype(jnp.bfloat16), w3_ref[...],
                preferred_element_type=jnp.float32)
    h = _leaky_relu(h + b3_ref[...])
    if training:
        h = _dropout(h, seed_u32, row0, 0x3000193)

    # fc4 (output width 1): VPU multiply + lane reduction instead of a
    # 1-of-256-columns MXU matmul.
    z = jnp.sum(h * w4_ref[...], axis=-1, keepdims=True) + b4_ref[...]
    o_ref[...] = (1.0 / (1.0 + jnp.exp(-z))).astype(o_ref.dtype)


def _round_up(n, m):
    return ((n + m - 1) // m) * m


def discriminator_forward(x, params, seed, *, tile_b=256, training=True):
    """x: [B, D] float32.  params: (w1,b1,w2,b2,w3,b3,w4,b4), w_i = [fan_in, fan_out].
    Returns sigmoid probabilities [B, 1] float32."""
    B, D = x.shape
    w1, b1, w2, b2, w3, b3, w4, b4 = params

    # Fold the inverted-dropout 1/(1-p) scale of each dropout into the weights
    # of the layer that consumes it:  (mask*h/0.7) @ W == (mask*h) @ (W/0.7).
    if training:
        s = 1.0 / (1.0 - P_DROP)
        w2 = w2 * s
        w3 = w3 * s
        w4 = w4 * s

    # bf16 matmul operands (MXU-native on v5e/v6e/v7x); biases / fc4 row stay f32.
    xb = x.astype(jnp.bfloat16)
    w1b = w1.astype(jnp.bfloat16)
    w2b = w2.astype(jnp.bfloat16)
    w3b = w3.astype(jnp.bfloat16)
    w4r = w4.reshape(1, H3).astype(jnp.float32)

    b1r = b1.reshape(1, H1).astype(jnp.float32)
    b2r = b2.reshape(1, H2).astype(jnp.float32)
    b3r = b3.reshape(1, H3).astype(jnp.float32)
    b4r = b4.reshape(1, 1).astype(jnp.float32)

    # Batch tiling: large tiles (default 256 rows) keep the MXU fed and amortize
    # per-grid-step overhead; pad the batch up to a tile multiple if needed.
    tb = min(tile_b, _round_up(B, 8))
    tb = _round_up(tb, 8)
    Bp = _round_up(B, tb)
    if Bp != B:
        xb = jnp.pad(xb, ((0, Bp - B), (0, 0)))

    def full(shape):
        # Grid-invariant block: weights/biases stay resident in VMEM across steps.
        # (Could additionally be single-buffered via pipeline_mode; left default
        #  since the bf16 weights are only ~2 MiB total here.)
        return pl.BlockSpec(shape, lambda i, seed_ref: (0, 0))

    grid_spec = pltpu.PrefetchScalarGridSpec(
        num_scalar_prefetch=1,
        grid=(Bp // tb,),
        in_specs=[
            pl.BlockSpec((tb, D), lambda i, seed_ref: (i, 0)),   # x tile
            full((D, H1)), full((1, H1)),                        # fc1
            full((H1, H2)), full((1, H2)),                       # fc2
            full((H2, H3)), full((1, H3)),                       # fc3
            full((1, H3)), full((1, 1)),                         # fc4 (row + bias)
        ],
        out_specs=pl.BlockSpec((tb, 1), lambda i, seed_ref: (i, 0)),
    )

    out = pl.pallas_call(
        functools.partial(disc_kernel, training=training),
        out_shape=jax.ShapeDtypeStruct((Bp, 1), jnp.float32),
        grid_spec=grid_spec,
        compiler_params=pltpu.CompilerParams(
            # Batch tiles are fully independent -> parallel (uses both TCs on v7x).
            dimension_semantics=("parallel",),
            vmem_limit_bytes=24 << 20,
        ),
    )(seed, xb, w1b, b1r, w2b, b2r, w3b, b3r, w4r, b4r)

    return out[:B]


def init_params(key, d_input_dim):
    """Deterministic init mimicking nn.Linear default (uniform +/- 1/sqrt(fan_in))."""
    dims = [(d_input_dim, H1), (H1, H2), (H2, H3), (H3, 1)]
    params = []
    for fan_in, fan_out in dims:
        key, kw, kb = jax.random.split(key, 3)
        bound = 1.0 / jnp.sqrt(fan_in)
        w = jax.random.uniform(kw, (fan_in, fan_out), jnp.float32, -bound, bound)
        b = jax.random.uniform(kb, (fan_out,), jnp.float32, -bound, bound)
        params += [w, b]
    return tuple(params)


def _reference_eval(x, params):
    """Pure-JAX reference for eval mode (no dropout)."""
    w1, b1, w2, b2, w3, b3, w4, b4 = params

    def lrelu(v):
        return jnp.where(v >= 0.0, v, NEG_SLOPE * v)

    h = lrelu(x @ w1 + b1)
    h = lrelu(h @ w2 + b2)
    h = lrelu(h @ w3 + b3)
    z = h @ w4 + b4
    return 1.0 / (1.0 + jnp.exp(-z))


if __name__ == "__main__":
    key = jax.random.PRNGKey(0)
    k_x, k_p = jax.random.split(key)

    d_input_dim = 256   # small, lane-friendly input feature count
    batch = 64

    x = jax.random.normal(k_x, (batch, d_input_dim), jnp.float32)
    params = init_params(k_p, d_input_dim)
    seed = jnp.array([1234], dtype=jnp.int32)

    # Training-mode forward (dropout active, matching F.dropout's default).
    out = jax.block_until_ready(discriminator_forward(x, params, seed))
    assert out.shape == (batch, 1)
    assert bool(jnp.all(jnp.isfinite(out)))
    assert bool(jnp.all((out >= 0.0) & (out <= 1.0)))

    # Multi-tile + batch-padding path.
    out2 = jax.block_until_ready(
        discriminator_forward(x[:40], params, seed, tile_b=16))
    assert out2.shape == (40, 1)
    assert bool(jnp.all(jnp.isfinite(out2)))

    # Eval-mode path (no dropout) checked against a pure-JAX reference.
    # TODO(synk): dropout RNG stream differs from torch's RNG; only the
    # Bernoulli(keep=0.7) + inverted-scale semantics match bit-exactly in eval mode.
    out_eval = jax.block_until_ready(
        discriminator_forward(x, params, seed, training=False))
    ref = _reference_eval(x, params)
    assert bool(jnp.all(jnp.abs(out_eval - ref) < 5e-2))

    print("KERNEL_OK")
</pallas_src>

<mosaic_0001>
module attributes {stable_mosaic.version = 11 : i64} {
  func.func @disc_kernel(%arg0: i32, %arg1: memref<1xi32, #tpu.memory_space<smem>>, %arg2: memref<64x256xbf16, #tpu.memory_space<vmem>>, %arg3: memref<256x1024xbf16, #tpu.memory_space<vmem>>, %arg4: memref<1x1024xf32, #tpu.memory_space<vmem>>, %arg5: memref<1024x512xbf16, #tpu.memory_space<vmem>>, %arg6: memref<1x512xf32, #tpu.memory_space<vmem>>, %arg7: memref<512x256xbf16, #tpu.memory_space<vmem>>, %arg8: memref<1x256xf32, #tpu.memory_space<vmem>>, %arg9: memref<1x256xf32, #tpu.memory_space<vmem>>, %arg10: memref<1x1xf32, #tpu.memory_space<vmem>>, %arg11: memref<64x1xf32, #tpu.memory_space<vmem>>) attributes {dimension_semantics = [#tpu.dimension_semantics<parallel>], iteration_bounds = array<i64: 1>, scalar_prefetch = 1 : i64, scratch_operands = 0 : i64, tpu.core_type = #tpu.core_type<tc>, window_params = [{transform_indices = @transform_0, window_bounds = array<i64: 64, 256>}, {pipeline_mode = #tpu.pipeline_mode<synchronous>, transform_indices = @transform_1, window_bounds = array<i64: 256, 1024>}, {pipeline_mode = #tpu.pipeline_mode<synchronous>, transform_indices = @transform_2, window_bounds = array<i64: 1, 1024>}, {pipeline_mode = #tpu.pipeline_mode<synchronous>, transform_indices = @transform_3, window_bounds = array<i64: 1024, 512>}, {pipeline_mode = #tpu.pipeline_mode<synchronous>, transform_indices = @transform_4, window_bounds = array<i64: 1, 512>}, {pipeline_mode = #tpu.pipeline_mode<synchronous>, transform_indices = @transform_5, window_bounds = array<i64: 512, 256>}, {pipeline_mode = #tpu.pipeline_mode<synchronous>, transform_indices = @transform_6, window_bounds = array<i64: 1, 256>}, {pipeline_mode = #tpu.pipeline_mode<synchronous>, transform_indices = @transform_7, window_bounds = array<i64: 1, 256>}, {pipeline_mode = #tpu.pipeline_mode<synchronous>, transform_indices = @transform_8, window_bounds = array<i64: 1, 1>}, {transform_indices = @transform_9, window_bounds = array<i64: 64, 1>}]} {
    %c64_i32 = arith.constant 64 : i32
    %0 = arith.muli %arg0, %c64_i32 : i32
    %c0 = arith.constant 0 : index
    %1 = memref.load %arg1[%c0] : memref<1xi32, #tpu.memory_space<smem>>
    %c0_0 = arith.constant 0 : index
    %c0_1 = arith.constant 0 : index
    %2 = vector.load %arg2[%c0_0, %c0_1] : memref<64x256xbf16, #tpu.memory_space<vmem>>, vector<64x256xbf16>
    %c0_2 = arith.constant 0 : index
    %c0_3 = arith.constant 0 : index
    %3 = vector.load %arg3[%c0_2, %c0_3] : memref<256x1024xbf16, #tpu.memory_space<vmem>>, vector<256x1024xbf16>
    %cst = arith.constant dense<0.000000e+00> : vector<64x1024xf32>
    %4 = tpu.matmul %2, %3, %cst {dimension_numbers = #tpu.dot_dimension_numbers<[1], [0], [0], [1], [0, 0, 1, 1], [], []>} : vector<64x256xbf16>, vector<256x1024xbf16>, vector<64x1024xf32> -> vector<64x1024xf32>
    %c0_4 = arith.constant 0 : index
    %c0_5 = arith.constant 0 : index
    %5 = vector.load %arg4[%c0_4, %c0_5] : memref<1x1024xf32, #tpu.memory_space<vmem>>, vector<1x1024xf32>
    %6 = vector.broadcast %5 : vector<1x1024xf32> to vector<64x1024xf32>
    %7 = arith.addf %4, %6 : vector<64x1024xf32>
    %cst_6 = arith.constant 0.000000e+00 : f32
    %8 = vector.broadcast %cst_6 : f32 to vector<64x1024xf32>
    %9 = arith.cmpf oge, %7, %8 : vector<64x1024xf32>
    %cst_7 = arith.constant 2.000000e-01 : f32
    %10 = vector.broadcast %cst_7 : f32 to vector<64x1024xf32>
    %11 = arith.mulf %10, %7 : vector<64x1024xf32>
    %12 = arith.select %9, %7, %11 : vector<64x1024xi1>, vector<64x1024xf32>
    %13 = tpu.iota {dimensions = array<i32: 0>} : vector<64x1024xi32>
    %14 = vector.broadcast %0 : i32 to vector<64x1024xi32>
    %15 = arith.addi %13, %14 : vector<64x1024xi32>
    %16 = tpu.iota {dimensions = array<i32: 1>} : vector<64x1024xi32>
    %c-1640531527_i32 = arith.constant -1640531527 : i32
    %17 = vector.broadcast %c-1640531527_i32 : i32 to vector<64x1024xi32>
    %18 = arith.muli %15, %17 : vector<64x1024xi32>
    %c16777619_i32 = arith.constant 16777619 : i32
    %19 = arith.addi %1, %c16777619_i32 : i32
    %20 = vector.broadcast %19 : i32 to vector<64x1024xi32>
    %21 = arith.xori %16, %20 : vector<64x1024xi32>
    %22 = arith.addi %18, %21 : vector<64x1024xi32>
    %c16_i32 = arith.constant 16 : i32
    %23 = vector.broadcast %c16_i32 : i32 to vector<64x1024xi32>
    %24 = arith.shrui %22, %23 : vector<64x1024xi32>
    %25 = arith.xori %22, %24 : vector<64x1024xi32>
    %c2146121005_i32 = arith.constant 2146121005 : i32
    %26 = vector.broadcast %c2146121005_i32 : i32 to vector<64x1024xi32>
    %27 = arith.muli %25, %26 : vector<64x1024xi32>
    %c15_i32 = arith.constant 15 : i32
    %28 = vector.broadcast %c15_i32 : i32 to vector<64x1024xi32>
    %29 = arith.shrui %27, %28 : vector<64x1024xi32>
    %30 = arith.xori %27, %29 : vector<64x1024xi32>
    %c-2073254261_i32 = arith.constant -2073254261 : i32
    %31 = vector.broadcast %c-2073254261_i32 : i32 to vector<64x1024xi32>
    %32 = arith.muli %30, %31 : vector<64x1024xi32>
    %c16_i32_8 = arith.constant 16 : i32
    %33 = vector.broadcast %c16_i32_8 : i32 to vector<64x1024xi32>
    %34 = arith.shrui %32, %33 : vector<64x1024xi32>
    %35 = arith.xori %32, %34 : vector<64x1024xi32>
    %c1288490189_i32 = arith.constant 1288490189 : i32
    %36 = vector.broadcast %c1288490189_i32 : i32 to vector<64x1024xi32>
    %37 = arith.cmpi uge, %35, %36 : vector<64x1024xi32>
    %cst_9 = arith.constant 0.000000e+00 : f32
    %38 = vector.broadcast %cst_9 : f32 to vector<64x1024xf32>
    %39 = arith.select %37, %12, %38 : vector<64x1024xi1>, vector<64x1024xf32>
    %40 = arith.truncf %39 : vector<64x1024xf32> to vector<64x1024xbf16>
    %c0_10 = arith.constant 0 : index
    %c0_11 = arith.constant 0 : index
    %41 = vector.load %arg5[%c0_10, %c0_11] : memref<1024x512xbf16, #tpu.memory_space<vmem>>, vector<1024x512xbf16>
    %cst_12 = arith.constant dense<0.000000e+00> : vector<64x512xf32>
    %42 = tpu.matmul %40, %41, %cst_12 {dimension_numbers = #tpu.dot_dimension_numbers<[1], [0], [0], [1], [0, 0, 1, 1], [], []>} : vector<64x1024xbf16>, vector<1024x512xbf16>, vector<64x512xf32> -> vector<64x512xf32>
    %c0_13 = arith.constant 0 : index
    %c0_14 = arith.constant 0 : index
    %43 = vector.load %arg6[%c0_13, %c0_14] : memref<1x512xf32, #tpu.memory_space<vmem>>, vector<1x512xf32>
    %44 = vector.broadcast %43 : vector<1x512xf32> to vector<64x512xf32>
    %45 = arith.addf %42, %44 : vector<64x512xf32>
    %cst_15 = arith.constant 0.000000e+00 : f32
    %46 = vector.broadcast %cst_15 : f32 to vector<64x512xf32>
    %47 = arith.cmpf oge, %45, %46 : vector<64x512xf32>
    %cst_16 = arith.constant 2.000000e-01 : f32
    %48 = vector.broadcast %cst_16 : f32 to vector<64x512xf32>
    %49 = arith.mulf %48, %45 : vector<64x512xf32>
    %50 = arith.select %47, %45, %49 : vector<64x512xi1>, vector<64x512xf32>
    %51 = tpu.iota {dimensions = array<i32: 0>} : vector<64x512xi32>
    %52 = vector.broadcast %0 : i32 to vector<64x512xi32>
    %53 = arith.addi %51, %52 : vector<64x512xi32>
    %54 = tpu.iota {dimensions = array<i32: 1>} : vector<64x512xi32>
    %c-1640531527_i32_17 = arith.constant -1640531527 : i32
    %55 = vector.broadcast %c-1640531527_i32_17 : i32 to vector<64x512xi32>
    %56 = arith.muli %53, %55 : vector<64x512xi32>
    %c33554835_i32 = arith.constant 33554835 : i32
    %57 = arith.addi %1, %c33554835_i32 : i32
    %58 = vector.broadcast %57 : i32 to vector<64x512xi32>
    %59 = arith.xori %54, %58 : vector<64x512xi32>
    %60 = arith.addi %56, %59 : vector<64x512xi32>
    %c16_i32_18 = arith.constant 16 : i32
    %61 = vector.broadcast %c16_i32_18 : i32 to vector<64x512xi32>
    %62 = arith.shrui %60, %61 : vector<64x512xi32>
    %63 = arith.xori %60, %62 : vector<64x512xi32>
    %c2146121005_i32_19 = arith.constant 2146121005 : i32
    %64 = vector.broadcast %c2146121005_i32_19 : i32 to vector<64x512xi32>
    %65 = arith.muli %63, %64 : vector<64x512xi32>
    %c15_i32_20 = arith.constant 15 : i32
    %66 = vector.broadcast %c15_i32_20 : i32 to vector<64x512xi32>
    %67 = arith.shrui %65, %66 : vector<64x512xi32>
    %68 = arith.xori %65, %67 : vector<64x512xi32>
    %c-2073254261_i32_21 = arith.constant -2073254261 : i32
    %69 = vector.broadcast %c-2073254261_i32_21 : i32 to vector<64x512xi32>
    %70 = arith.muli %68, %69 : vector<64x512xi32>
    %c16_i32_22 = arith.constant 16 : i32
    %71 = vector.broadcast %c16_i32_22 : i32 to vector<64x512xi32>
    %72 = arith.shrui %70, %71 : vector<64x512xi32>
    %73 = arith.xori %70, %72 : vector<64x512xi32>
    %c1288490189_i32_23 = arith.constant 1288490189 : i32
    %74 = vector.broadcast %c1288490189_i32_23 : i32 to vector<64x512xi32>
    %75 = arith.cmpi uge, %73, %74 : vector<64x512xi32>
    %cst_24 = arith.constant 0.000000e+00 : f32
    %76 = vector.broadcast %cst_24 : f32 to vector<64x512xf32>
    %77 = arith.select %75, %50, %76 : vector<64x512xi1>, vector<64x512xf32>
    %78 = arith.truncf %77 : vector<64x512xf32> to vector<64x512xbf16>
    %c0_25 = arith.constant 0 : index
    %c0_26 = arith.constant 0 : index
    %79 = vector.load %arg7[%c0_25, %c0_26] : memref<512x256xbf16, #tpu.memory_space<vmem>>, vector<512x256xbf16>
    %cst_27 = arith.constant dense<0.000000e+00> : vector<64x256xf32>
    %80 = tpu.matmul %78, %79, %cst_27 {dimension_numbers = #tpu.dot_dimension_numbers<[1], [0], [0], [1], [0, 0, 1, 1], [], []>} : vector<64x512xbf16>, vector<512x256xbf16>, vector<64x256xf32> -> vector<64x256xf32>
    %c0_28 = arith.constant 0 : index
    %c0_29 = arith.constant 0 : index
    %81 = vector.load %arg8[%c0_28, %c0_29] : memref<1x256xf32, #tpu.memory_space<vmem>>, vector<1x256xf32>
    %82 = vector.broadcast %81 : vector<1x256xf32> to vector<64x256xf32>
    %83 = arith.addf %80, %82 : vector<64x256xf32>
    %cst_30 = arith.constant 0.000000e+00 : f32
    %84 = vector.broadcast %cst_30 : f32 to vector<64x256xf32>
    %85 = arith.cmpf oge, %83, %84 : vector<64x256xf32>
    %cst_31 = arith.constant 2.000000e-01 : f32
    %86 = vector.broadcast %cst_31 : f32 to vector<64x256xf32>
    %87 = arith.mulf %86, %83 : vector<64x256xf32>
    %88 = arith.select %85, %83, %87 : vector<64x256xi1>, vector<64x256xf32>
    %89 = tpu.iota {dimensions = array<i32: 0>} : vector<64x256xi32>
    %90 = vector.broadcast %0 : i32 to vector<64x256xi32>
    %91 = arith.addi %89, %90 : vector<64x256xi32>
    %92 = tpu.iota {dimensions = array<i32: 1>} : vector<64x256xi32>
    %c-1640531527_i32_32 = arith.constant -1640531527 : i32
    %93 = vector.broadcast %c-1640531527_i32_32 : i32 to vector<64x256xi32>
    %94 = arith.muli %91, %93 : vector<64x256xi32>
    %c50332051_i32 = arith.constant 50332051 : i32
    %95 = arith.addi %1, %c50332051_i32 : i32
    %96 = vector.broadcast %95 : i32 to vector<64x256xi32>
    %97 = arith.xori %92, %96 : vector<64x256xi32>
    %98 = arith.addi %94, %97 : vector<64x256xi32>
    %c16_i32_33 = arith.constant 16 : i32
    %99 = vector.broadcast %c16_i32_33 : i32 to vector<64x256xi32>
    %100 = arith.shrui %98, %99 : vector<64x256xi32>
    %101 = arith.xori %98, %100 : vector<64x256xi32>
    %c2146121005_i32_34 = arith.constant 2146121005 : i32
    %102 = vector.broadcast %c2146121005_i32_34 : i32 to vector<64x256xi32>
    %103 = arith.muli %101, %102 : vector<64x256xi32>
    %c15_i32_35 = arith.constant 15 : i32
    %104 = vector.broadcast %c15_i32_35 : i32 to vector<64x256xi32>
    %105 = arith.shrui %103, %104 : vector<64x256xi32>
    %106 = arith.xori %103, %105 : vector<64x256xi32>
    %c-2073254261_i32_36 = arith.constant -2073254261 : i32
    %107 = vector.broadcast %c-2073254261_i32_36 : i32 to vector<64x256xi32>
    %108 = arith.muli %106, %107 : vector<64x256xi32>
    %c16_i32_37 = arith.constant 16 : i32
    %109 = vector.broadcast %c16_i32_37 : i32 to vector<64x256xi32>
    %110 = arith.shrui %108, %109 : vector<64x256xi32>
    %111 = arith.xori %108, %110 : vector<64x256xi32>
    %c1288490189_i32_38 = arith.constant 1288490189 : i32
    %112 = vector.broadcast %c1288490189_i32_38 : i32 to vector<64x256xi32>
    %113 = arith.cmpi uge, %111, %112 : vector<64x256xi32>
    %cst_39 = arith.constant 0.000000e+00 : f32
    %114 = vector.broadcast %cst_39 : f32 to vector<64x256xf32>
    %115 = arith.select %113, %88, %114 : vector<64x256xi1>, vector<64x256xf32>
    %c0_40 = arith.constant 0 : index
    %c0_41 = arith.constant 0 : index
    %116 = vector.load %arg9[%c0_40, %c0_41] : memref<1x256xf32, #tpu.memory_space<vmem>>, vector<1x256xf32>
    %117 = vector.broadcast %116 : vector<1x256xf32> to vector<64x256xf32>
    %118 = arith.mulf %115, %117 : vector<64x256xf32>
    %cst_42 = arith.constant dense<0.000000e+00> : vector<64xf32>
    %119 = vector.multi_reduction <add>, %118, %cst_42 [1] : vector<64x256xf32> to vector<64xf32>
    %120 = vector.shape_cast %119 : vector<64xf32> to vector<64x1xf32>
    %c0_43 = arith.constant 0 : index
    %c0_44 = arith.constant 0 : index
    %121 = vector.load %arg10[%c0_43, %c0_44] : memref<1x1xf32, #tpu.memory_space<vmem>>, vector<1x1xf32>
    %122 = vector.broadcast %121 : vector<1x1xf32> to vector<64x1xf32>
    %123 = arith.addf %120, %122 : vector<64x1xf32>
    %cst_45 = arith.constant 0.000000e+00 : f32
    %124 = vector.broadcast %cst_45 : f32 to vector<64x1xf32>
    %125 = arith.subf %124, %123 : vector<64x1xf32>
    %126 = math.exp %125 : vector<64x1xf32>
    %cst_46 = arith.constant 1.000000e+00 : f32
    %127 = vector.broadcast %cst_46 : f32 to vector<64x1xf32>
    %128 = arith.addf %127, %126 : vector<64x1xf32>
    %cst_47 = arith.constant 1.000000e+00 : f32
    %129 = vector.broadcast %cst_47 : f32 to vector<64x1xf32>
    %130 = arith.divf %129, %128 : vector<64x1xf32>
    %c0_48 = arith.constant 0 : index
    %c0_49 = arith.constant 0 : index
    %131 = vector.load %arg11[%c0_48, %c0_49] : memref<64x1xf32, #tpu.memory_space<vmem>>, vector<64x1xf32>
    tpu.vector_store %arg11[%c0_48, %c0_49], %130 {strides = array<i32>} : memref<64x1xf32, #tpu.memory_space<vmem>>, vector<64x1xf32>,
    return
  }
  func.func @transform_0(%arg0: i32, %arg1: memref<1xi32, #tpu.memory_space<smem>>) -> (i32, i32) {
    %c0_i32 = arith.constant 0 : i32
    %c0_i32_0 = arith.constant 0 : i32
    return %arg0, %c0_i32 : i32, i32
  }
  func.func @transform_1(%arg0: i32, %arg1: memref<1xi32, #tpu.memory_space<smem>>) -> (i32, i32) {
    %c0_i32 = arith.constant 0 : i32
    %c0_i32_0 = arith.constant 0 : i32
    %c0_i32_1 = arith.constant 0 : i32
    return %c0_i32, %c0_i32_0 : i32, i32
  }
  func.func @transform_2(%arg0: i32, %arg1: memref<1xi32, #tpu.memory_space<smem>>) -> (i32, i32) {
    %c0_i32 = arith.constant 0 : i32
    %c0_i32_0 = arith.constant 0 : i32
    %c0_i32_1 = arith.constant 0 : i32
    return %c0_i32, %c0_i32_0 : i32, i32
  }
  func.func @transform_3(%arg0: i32, %arg1: memref<1xi32, #tpu.memory_space<smem>>) -> (i32, i32) {
    %c0_i32 = arith.constant 0 : i32
    %c0_i32_0 = arith.constant 0 : i32
    %c0_i32_1 = arith.constant 0 : i32
    return %c0_i32, %c0_i32_0 : i32, i32
  }
  func.func @transform_4(%arg0: i32, %arg1: memref<1xi32, #tpu.memory_space<smem>>) -> (i32, i32) {
    %c0_i32 = arith.constant 0 : i32
    %c0_i32_0 = arith.constant 0 : i32
    %c0_i32_1 = arith.constant 0 : i32
    return %c0_i32, %c0_i32_0 : i32, i32
  }
  func.func @transform_5(%arg0: i32, %arg1: memref<1xi32, #tpu.memory_space<smem>>) -> (i32, i32) {
    %c0_i32 = arith.constant 0 : i32
    %c0_i32_0 = arith.constant 0 : i32
    %c0_i32_1 = arith.constant 0 : i32
    return %c0_i32, %c0_i32_0 : i32, i32
  }
  func.func @transform_6(%arg0: i32, %arg1: memref<1xi32, #tpu.memory_space<smem>>) -> (i32, i32) {
    %c0_i32 = arith.constant 0 : i32
    %c0_i32_0 = arith.constant 0 : i32
    %c0_i32_1 = arith.constant 0 : i32
    return %c0_i32, %c0_i32_0 : i32, i32
  }
  func.func @transform_7(%arg0: i32, %arg1: memref<1xi32, #tpu.memory_space<smem>>) -> (i32, i32) {
    %c0_i32 = arith.constant 0 : i32
    %c0_i32_0 = arith.constant 0 : i32
    %c0_i32_1 = arith.constant 0 : i32
    return %c0_i32, %c0_i32_0 : i32, i32
  }
  func.func @transform_8(%arg0: i32, %arg1: memref<1xi32, #tpu.memory_space<smem>>) -> (i32, i32) {
    %c0_i32 = arith.constant 0 : i32
    %c0_i32_0 = arith.constant 0 : i32
    %c0_i32_1 = arith.constant 0 : i32
    return %c0_i32, %c0_i32_0 : i32, i32
  }
  func.func @transform_9(%arg0: i32, %arg1: memref<1xi32, #tpu.memory_space<smem>>) -> (i32, i32) {
    %c0_i32 = arith.constant 0 : i32
    %c0_i32_0 = arith.constant 0 : i32
    return %arg0, %c0_i32 : i32, i32
  }
}

</mosaic_0001>

<llo_original>
// kernel: tpu_custom_call.1
$region0: #{tpu_custom_call.1}
  #allocation0 [shape = 'u32[]', space=smem, size = 0x4, offset = 0x4, fixed_abs, tag = 'smem constant byte address 0x4 - core index']
  #allocation1 [shape = 'u32[72,128]{1,0:T(1,128)}', space=vmem, size = 0x9000, scoped, tag = 'internal scratch']
  #allocation2 [shape = 's32[1]{0}', space=sflag, size = 0x4, scoped, tag = 'scoped memory for tpu_custom_call.1']
  #allocation3 [shape = 's32[1]{0:T(128)S(6)}', space=smem, size = 0x200, scoped, tag = 'prefetched SMEM operand 0']
  #allocation4 [shape = 'f32[1,1]{1,0:T(1,128)S(1)}', space=vmem, size = 0x200, scoped, tag = 'scoped memory for tpu_custom_call.1']
  %s0 = inlined_call_operand.<no memory space> [shape: s32[1], index: 0, kind: input, shape index: {}]
  %s1 = inlined_call_operand.hbm [shape: bf16[64,256], index: 1, kind: input, shape index: {}]
  %s2 = inlined_call_operand.hbm [shape: bf16[256,1024], index: 2, kind: input, shape index: {}]
  %s3 = inlined_call_operand.hbm [shape: f32[1,1024], index: 3, kind: input, shape index: {}]
  %s4 = inlined_call_operand.hbm [shape: bf16[1024,512], index: 4, kind: input, shape index: {}]
  %s5 = inlined_call_operand.vmem [shape: f32[1,512], index: 5, kind: input, shape index: {}]
  %s6 = inlined_call_operand.hbm [shape: bf16[512,256], index: 6, kind: input, shape index: {}]
  %s7 = inlined_call_operand.vmem [shape: f32[1,256], index: 7, kind: input, shape index: {}]
  %s8 = inlined_call_operand.vmem [shape: f32[1,256], index: 8, kind: input, shape index: {}]
  %s9 = inlined_call_operand.<no memory space> [shape: f32[1,1], index: 9, kind: input, shape index: {}]
  %s10 = inlined_call_operand.vmem [shape: f32[64,1], index: 10, kind: output, shape index: {}]
  %s11 = sld [smem:[#allocation0]]
  $region66: #{tpu_custom_call.1} parent=0
    _
  %s13 = ssub.s32 1, %s11
  %s14 = scalar_select 0, %s13, %s11
  %15 = sst [smem:[#allocation3]] %s0
  %v16 = vstv %s9
  %17 = vst [vmem:[#allocation4] sm:$0x1] %v16
  $region1: #{tpu_custom_call.1} parent=0
    #allocation5 [shape = 'u8[32768]{0}', space=vmem, size = 0x8000, scoped, tag = 'input window, operand 1, single buffered']
    #allocation6 [shape = 's32[1]{0}', space=sflag, size = 0x4, scoped, tag = 'scoped memory for tpu_custom_call.1']
    #allocation7 [shape = 'u8[524288]{0}', space=vmem, size = 0x80000, scoped, tag = 'input window, operand 2, single buffered']
    #allocation8 [shape = 's32[1]{0}', space=sflag, size = 0x4, scoped, tag = 'scoped memory for tpu_custom_call.1']
    #allocation9 [shape = 'u8[4096]{0}', space=vmem, size = 0x1000, scoped, tag = 'input window, operand 3, single buffered']
    #allocation10 [shape = 'u8[1048576]{0}', space=vmem, size = 0x100000, scoped, tag = 'input window, operand 4, single buffered']
    #allocation11 [shape = 's32[1]{0}', space=sflag, size = 0x4, scoped, tag = 'scoped memory for tpu_custom_call.1']
    #allocation12 [shape = 'u8[262144]{0}', space=vmem, size = 0x40000, scoped, tag = 'input window, operand 6, single buffered']
    %18 = vsyncpa [#allocation6], 0
    %19 = vsyncpa [#allocation8], 0
    %20 = vsyncpa [#allocation11], 0
    // Predicated region
    $region2: #{tpu_custom_call.1} parent=1 // pred_check
      _
    $region3: #{tpu_custom_call.1} parent=1 // pred_check_branch
      %22 = sbr.rel (0) target = $region5
    $region4: #{tpu_custom_call.1} parent=1 // pred_region
      %24 = vsyncadd [#allocation6], 0
      %s25 = sshll.u32 %s1, 4
      %s26 = int_to_ptr.hbm [resolvable:$true] %s25
      %s27 = sshll.u32 [#allocation5], 4
      %s28 = int_to_ptr.vmem [resolvable:$true] %s27
      %33 = dma.hbm_to_vmem [thread:$0]  %s26, 1024, %s28, [#allocation6], 128, 128, 8
    $region5: #{tpu_custom_call.1} parent=1 // pred_fallthru
      _
    // Predicated region
    $region6: #{tpu_custom_call.1} parent=1 // pred_check
      _
    $region7: #{tpu_custom_call.1} parent=1 // pred_check_branch
      %35 = sbr.rel (0) target = $region9
    $region8: #{tpu_custom_call.1} parent=1 // pred_region
      %37 = vsyncadd [#allocation8], 0
      %s38 = sshll.u32 %s2, 4
      %s39 = int_to_ptr.hbm [resolvable:$true] %s38
      %s40 = sshll.u32 [#allocation7], 4
      %s41 = int_to_ptr.vmem [resolvable:$true] %s40
      %46 = dma.hbm_to_vmem [thread:$0]  %s39, 16384, %s41, [#allocation8], 512, 512, 32
    $region9: #{tpu_custom_call.1} parent=1 // pred_fallthru
      _
    // Predicated region
    $region10: #{tpu_custom_call.1} parent=1 // pred_check
      _
    $region11: #{tpu_custom_call.1} parent=1 // pred_check_branch
      %48 = sbr.rel (0) target = $region13
    $region12: #{tpu_custom_call.1} parent=1 // pred_region
      %50 = vsyncadd [#allocation8], 0
      %s52 = sshll.u32 %s3, 4
      %s53 = int_to_ptr.hbm [resolvable:$true] %s52
      %s54 = sshll.u32 [#allocation9], 4
      %s55 = int_to_ptr.vmem [resolvable:$true] %s54
      %57 = dma.hbm_to_vmem [thread:$0]  %s53, 128, %s55, [#allocation8]
    $region13: #{tpu_custom_call.1} parent=1 // pred_fallthru
      _
    // Predicated region
    $region14: #{tpu_custom_call.1} parent=1 // pred_check
      _
    $region15: #{tpu_custom_call.1} parent=1 // pred_check_branch
      %59 = sbr.rel (0) target = $region17
    $region16: #{tpu_custom_call.1} parent=1 // pred_region
      %61 = vsyncadd [#allocation11], 0
      %s62 = sshll.u32 %s4, 4
      %s63 = int_to_ptr.hbm [resolvable:$true] %s62
      %s64 = sshll.u32 [#allocation10], 4
      %s65 = int_to_ptr.vmem [resolvable:$true] %s64
      %70 = dma.hbm_to_vmem [thread:$0]  %s63, 32768, %s65, [#allocation11], 256, 256, 16
    $region17: #{tpu_custom_call.1} parent=1 // pred_fallthru
      _
    // Predicated region
    $region18: #{tpu_custom_call.1} parent=1 // pred_check
      _
    $region19: #{tpu_custom_call.1} parent=1 // pred_check_branch
      %72 = sbr.rel (0) target = $region21
    $region20: #{tpu_custom_call.1} parent=1 // pred_region
      _
    $region21: #{tpu_custom_call.1} parent=1 // pred_fallthru
      _
    // Predicated region
    $region22: #{tpu_custom_call.1} parent=1 // pred_check
      _
    $region23: #{tpu_custom_call.1} parent=1 // pred_check_branch
      %74 = sbr.rel (0) target = $region25
    $region24: #{tpu_custom_call.1} parent=1 // pred_region
      %76 = vsyncadd [#allocation11], 0
      %s77 = sshll.u32 %s6, 4
      %s78 = int_to_ptr.hbm [resolvable:$true] %s77
      %s79 = sshll.u32 [#allocation12], 4
      %s80 = int_to_ptr.vmem [resolvable:$true] %s79
      %85 = dma.hbm_to_vmem [thread:$0]  %s78, 8192, %s80, [#allocation11], 128, 128, 8
    $region25: #{tpu_custom_call.1} parent=1 // pred_fallthru
      _
    // Predicated region
    $region26: #{tpu_custom_call.1} parent=1 // pred_check
      _
    $region27: #{tpu_custom_call.1} parent=1 // pred_check_branch
      %87 = sbr.rel (0) target = $region29
    $region28: #{tpu_custom_call.1} parent=1 // pred_region
      _
    $region29: #{tpu_custom_call.1} parent=1 // pred_fallthru
      _
    // Predicated region
    $region30: #{tpu_custom_call.1} parent=1 // pred_check
      _
    $region31: #{tpu_custom_call.1} parent=1 // pred_check_branch
      %89 = sbr.rel (0) target = $region33
    $region32: #{tpu_custom_call.1} parent=1 // pred_region
      _
    $region33: #{tpu_custom_call.1} parent=1 // pred_fallthru
      _
    // Predicated region
    $region34: #{tpu_custom_call.1} parent=1 // pred_check
      _
    $region35: #{tpu_custom_call.1} parent=1 // pred_check_branch
      %91 = sbr.rel (0) target = $region37
    $region36: #{tpu_custom_call.1} parent=1 // pred_region
      _
    $region37: #{tpu_custom_call.1} parent=1 // pred_fallthru
      _
    // Predicated region
    $region38: #{tpu_custom_call.1} parent=1 // pred_check
      _
    $region39: #{tpu_custom_call.1} parent=1 // pred_check_branch
      %93 = sbr.rel (0) target = $region41
    $region40: #{tpu_custom_call.1} parent=1 // pred_region
      %95 = dma.done [#allocation6], 1024
    $region41: #{tpu_custom_call.1} parent=1 // pred_fallthru
      _
    // Predicated region
    $region42: #{tpu_custom_call.1} parent=1 // pred_check
      _
    $region43: #{tpu_custom_call.1} parent=1 // pred_check_branch
      %97 = sbr.rel (0) target = $region45
    $region44: #{tpu_custom_call.1} parent=1 // pred_region
      %99 = dma.done [#allocation8], 16384
    $region45: #{tpu_custom_call.1} parent=1 // pred_fallthru
      _
    // Predicated region
    $region46: #{tpu_custom_call.1} parent=1 // pred_check
      _
    $region47: #{tpu_custom_call.1} parent=1 // pred_check_branch
      %101 = sbr.rel (0) target = $region49
    $region48: #{tpu_custom_call.1} parent=1 // pred_region
      %103 = dma.done [#allocation8], 128
    $region49: #{tpu_custom_call.1} parent=1 // pred_fallthru
      _
    // Predicated region
    $region50: #{tpu_custom_call.1} parent=1 // pred_check
      _
    $region51: #{tpu_custom_call.1} parent=1 // pred_check_branch
      %105 = sbr.rel (0) target = $region53
    $region52: #{tpu_custom_call.1} parent=1 // pred_region
      %107 = dma.done [#allocation11], 32768
    $region53: #{tpu_custom_call.1} parent=1 // pred_fallthru
      _
    // Predicated region
    $region54: #{tpu_custom_call.1} parent=1 // pred_check
      _
    $region55: #{tpu_custom_call.1} parent=1 // pred_check_branch
      %109 = sbr.rel (0) target = $region57
    $region56: #{tpu_custom_call.1} parent=1 // pred_region
      %111 = dma.done [#allocation11], 8192
    $region57: #{tpu_custom_call.1} parent=1 // pred_fallthru
      _
    %s112 = smul.u32 0, 64
    %s113 = sld [smem:[#allocation3]]
    %v114 = vld [vmem:[#allocation5] sm:$0xff]
    %v115 = vld [vmem:[#allocation5 + $0x8] sm:$0xff]
    %v116 = vld [vmem:[#allocation5 + $0x10] sm:$0xff]
    %v117 = vld [vmem:[#allocation5 + $0x18] sm:$0xff]
    %v118 = vld [vmem:[#allocation5 + $0x20] sm:$0xff]
    %v119 = vld [vmem:[#allocation5 + $0x28] sm:$0xff]
    %v120 = vld [vmem:[#allocation5 + $0x30] sm:$0xff]
    %v121 = vld [vmem:[#allocation5 + $0x38] sm:$0xff]
    %v122 = vld [vmem:[#allocation7] sm:$0xff]
    %v123 = vld [vmem:[#allocation7 + $0x8] sm:$0xff]
    %v124 = vld [vmem:[#allocation7 + $0x10] sm:$0xff]
    %v125 = vld [vmem:[#allocation7 + $0x18] sm:$0xff]
    %v126 = vld [vmem:[#allocation7 + $0x20] sm:$0xff]
    %v127 = vld [vmem:[#allocation7 + $0x28] sm:$0xff]
    %v128 = vld [vmem:[#allocation7 + $0x30] sm:$0xff]
    %v129 = vld [vmem:[#allocation7 + $0x38] sm:$0xff]
    %v130 = vld [vmem:[#allocation7 + $0x40] sm:$0xff]
    %v131 = vld [vmem:[#allocation7 + $0x48] sm:$0xff]
    %v132 = vld [vmem:[#allocation7 + $0x50] sm:$0xff]
    %v133 = vld [vmem:[#allocation7 + $0x58] sm:$0xff]
    %v134 = vld [vmem:[#allocation7 + $0x60] sm:$0xff]
    %v135 = vld [vmem:[#allocation7 + $0x68] sm:$0xff]
    %v136 = vld [vmem:[#allocation7 + $0x70] sm:$0xff]
    %v137 = vld [vmem:[#allocation7 + $0x78] sm:$0xff]
    %v138 = vld [vmem:[#allocation7 + $0x80] sm:$0xff]
    %v139 = vld [vmem:[#allocation7 + $0x88] sm:$0xff]
    %v140 = vld [vmem:[#allocation7 + $0x90] sm:$0xff]
    %v141 = vld [vmem:[#allocation7 + $0x98] sm:$0xff]
    %v142 = vld [vmem:[#allocation7 + $0xa0] sm:$0xff]
    %v143 = vld [vmem:[#allocation7 + $0xa8] sm:$0xff]
    %v144 = vld [vmem:[#allocation7 + $0xb0] sm:$0xff]
    %v145 = vld [vmem:[#allocation7 + $0xb8] sm:$0xff]
    %v146 = vld [vmem:[#allocation7 + $0xc0] sm:$0xff]
    %v147 = vld [vmem:[#allocation7 + $0xc8] sm:$0xff]
    %v148 = vld [vmem:[#allocation7 + $0xd0] sm:$0xff]
    %v149 = vld [vmem:[#allocation7 + $0xd8] sm:$0xff]
    %v150 = vld [vmem:[#allocation7 + $0xe0] sm:$0xff]
    %v151 = vld [vmem:[#allocation7 + $0xe8] sm:$0xff]
    %v152 = vld [vmem:[#allocation7 + $0xf0] sm:$0xff]
    %v153 = vld [vmem:[#allocation7 + $0xf8] sm:$0xff]
    %v154 = vld [vmem:[#allocation7 + $0x100] sm:$0xff]
    %v155 = vld [vmem:[#allocation7 + $0x108] sm:$0xff]
    %v156 = vld [vmem:[#allocation7 + $0x110] sm:$0xff]
    %v157 = vld [vmem:[#allocation7 + $0x118] sm:$0xff]
    %v158 = vld [vmem:[#allocation7 + $0x120] sm:$0xff]
    %v159 = vld [vmem:[#allocation7 + $0x128] sm:$0xff]
    %v160 = vld [vmem:[#allocation7 + $0x130] sm:$0xff]
    %v161 = vld [vmem:[#allocation7 + $0x138] sm:$0xff]
    %v162 = vld [vmem:[#allocation7 + $0x140] sm:$0xff]
    %v163 = vld [vmem:[#allocation7 + $0x148] sm:$0xff]
    %v164 = vld [vmem:[#allocation7 + $0x150] sm:$0xff]
    %v165 = vld [vmem:[#allocation7 + $0x158] sm:$0xff]
    %v166 = vld [vmem:[#allocation7 + $0x160] sm:$0xff]
    %v167 = vld [vmem:[#allocation7 + $0x168] sm:$0xff]
    %v168 = vld [vmem:[#allocation7 + $0x170] sm:$0xff]
    %v169 = vld [vmem:[#allocation7 + $0x178] sm:$0xff]
    %v170 = vld [vmem:[#allocation7 + $0x180] sm:$0xff]
    %v171 = vld [vmem:[#allocation7 + $0x188] sm:$0xff]
    %v172 = vld [vmem:[#allocation7 + $0x190] sm:$0xff]
    %v173 = vld [vmem:[#allocation7 + $0x198] sm:$0xff]
    %v174 = vld [vmem:[#allocation7 + $0x1a0] sm:$0xff]
    %v175 = vld [vmem:[#allocation7 + $0x1a8] sm:$0xff]
    %v176 = vld [vmem:[#allocation7 + $0x1b0] sm:$0xff]
    %v177 = vld [vmem:[#allocation7 + $0x1b8] sm:$0xff]
    %v178 = vld [vmem:[#allocation7 + $0x1c0] sm:$0xff]
    %v179 = vld [vmem:[#allocation7 + $0x1c8] sm:$0xff]
    %v180 = vld [vmem:[#allocation7 + $0x1d0] sm:$0xff]
    %v181 = vld [vmem:[#allocation7 + $0x1d8] sm:$0xff]
    %v182 = vld [vmem:[#allocation7 + $0x1e0] sm:$0xff]
    %v183 = vld [vmem:[#allocation7 + $0x1e8] sm:$0xff]
    %v184 = vld [vmem:[#allocation7 + $0x1f0] sm:$0xff]
    %v185 = vld [vmem:[#allocation7 + $0x1f8] sm:$0xff]
    %v186 = vld [vmem:[#allocation7 + $0x200] sm:$0xff]
    %v187 = vld [vmem:[#allocation7 + $0x208] sm:$0xff]
    %v188 = vld [vmem:[#allocation7 + $0x210] sm:$0xff]
    %v189 = vld [vmem:[#allocation7 + $0x218] sm:$0xff]
    %v190 = vld [vmem:[#allocation7 + $0x220] sm:$0xff]
    %v191 = vld [vmem:[#allocation7 + $0x228] sm:$0xff]
    %v192 = vld [vmem:[#allocation7 + $0x230] sm:$0xff]
    %v193 = vld [vmem:[#allocation7 + $0x238] sm:$0xff]
    %v194 = vld [vmem:[#allocation7 + $0x240] sm:$0xff]
    %v195 = vld [vmem:[#allocation7 + $0x248] sm:$0xff]
    %v196 = vld [vmem:[#allocation7 + $0x250] sm:$0xff]
    %v197 = vld [vmem:[#allocation7 + $0x258] sm:$0xff]
    %v198 = vld [vmem:[#allocation7 + $0x260] sm:$0xff]
    %v199 = vld [vmem:[#allocation7 + $0x268] sm:$0xff]
    %v200 = vld [vmem:[#allocation7 + $0x270] sm:$0xff]
    %v201 = vld [vmem:[#allocation7 + $0x278] sm:$0xff]
    %v202 = vld [vmem:[#allocation7 + $0x280] sm:$0xff]
    %v203 = vld [vmem:[#allocation7 + $0x288] sm:$0xff]
    %v204 = vld [vmem:[#allocation7 + $0x290] sm:$0xff]
    %v205 = vld [vmem:[#allocation7 + $0x298] sm:$0xff]
    %v206 = vld [vmem:[#allocation7 + $0x2a0] sm:$0xff]
    %v207 = vld [vmem:[#allocation7 + $0x2a8] sm:$0xff]
    %v208 = vld [vmem:[#allocation7 + $0x2b0] sm:$0xff]
    %v209 = vld [vmem:[#allocation7 + $0x2b8] sm:$0xff]
    %v210 = vld [vmem:[#allocation7 + $0x2c0] sm:$0xff]
    %v211 = vld [vmem:[#allocation7 + $0x2c8] sm:$0xff]
    %v212 = vld [vmem:[#allocation7 + $0x2d0] sm:$0xff]
    %v213 = vld [vmem:[#allocation7 + $0x2d8] sm:$0xff]
    %v214 = vld [vmem:[#allocation7 + $0x2e0] sm:$0xff]
    %v215 = vld [vmem:[#allocation7 + $0x2e8] sm:$0xff]
    %v216 = vld [vmem:[#allocation7 + $0x2f0] sm:$0xff]
    %v217 = vld [vmem:[#allocation7 + $0x2f8] sm:$0xff]
    %v218 = vld [vmem:[#allocation7 + $0x300] sm:$0xff]
    %v219 = vld [vmem:[#allocation7 + $0x308] sm:$0xff]
    %v220 = vld [vmem:[#allocation7 + $0x310] sm:$0xff]
    %v221 = vld [vmem:[#allocation7 + $0x318] sm:$0xff]
    %v222 = vld [vmem:[#allocation7 + $0x320] sm:$0xff]
    %v223 = vld [vmem:[#allocation7 + $0x328] sm:$0xff]
    %v224 = vld [vmem:[#allocation7 + $0x330] sm:$0xff]
    %v225 = vld [vmem:[#allocation7 + $0x338] sm:$0xff]
    %v226 = vld [vmem:[#allocation7 + $0x340] sm:$0xff]
    %v227 = vld [vmem:[#allocation7 + $0x348] sm:$0xff]
    %v228 = vld [vmem:[#allocation7 + $0x350] sm:$0xff]
    %v229 = vld [vmem:[#allocation7 + $0x358] sm:$0xff]
    %v230 = vld [vmem:[#allocation7 + $0x360] sm:$0xff]
    %v231 = vld [vmem:[#allocation7 + $0x368] sm:$0xff]
    %v232 = vld [vmem:[#allocation7 + $0x370] sm:$0xff]
    %v233 = vld [vmem:[#allocation7 + $0x378] sm:$0xff]
    %v234 = vld [vmem:[#allocation7 + $0x380] sm:$0xff]
    %v235 = vld [vmem:[#allocation7 + $0x388] sm:$0xff]
    %v236 = vld [vmem:[#allocation7 + $0x390] sm:$0xff]
    %v237 = vld [vmem:[#allocation7 + $0x398] sm:$0xff]
    %v238 = vld [vmem:[#allocation7 + $0x3a0] sm:$0xff]
    %v239 = vld [vmem:[#allocation7 + $0x3a8] sm:$0xff]
    %v240 = vld [vmem:[#allocation7 + $0x3b0] sm:$0xff]
    %v241 = vld [vmem:[#allocation7 + $0x3b8] sm:$0xff]
    %v242 = vld [vmem:[#allocation7 + $0x3c0] sm:$0xff]
    %v243 = vld [vmem:[#allocation7 + $0x3c8] sm:$0xff]
    %v244 = vld [vmem:[#allocation7 + $0x3d0] sm:$0xff]
    %v245 = vld [vmem:[#allocation7 + $0x3d8] sm:$0xff]
    %v246 = vld [vmem:[#allocation7 + $0x3e0] sm:$0xff]
    %v247 = vld [vmem:[#allocation7 + $0x3e8] sm:$0xff]
    %v248 = vld [vmem:[#allocation7 + $0x3f0] sm:$0xff]
    %v249 = vld [vmem:[#allocation7 + $0x3f8] sm:$0xff]
    %v250 = vld [vmem:[#allocation9] sm:$0xff]
    %v252 = vperm.slane %v250, 0
    %v253 = vperm.slane %v250, 1
    %v254 = vperm.slane %v250, 2
    %v255 = vperm.slane %v250, 3
    %v256 = vperm.slane %v250, 4
    %v257 = vperm.slane %v250, 5
    %v258 = vperm.slane %v250, 6
    %v259 = vperm.slane %v250, 7
    %v276 = vunpack.c.l.b16 %v114
    %v277 = vunpack.c.h.b16 %v114
    %v278 = vunpack.c.l.b16 %v115
    %v279 = vunpack.c.h.b16 %v115
    %v280 = vunpack.c.l.b16 %v116
    %v281 = vunpack.c.h.b16 %v116
    %v282 = vunpack.c.l.b16 %v117
    %v283 = vunpack.c.h.b16 %v117
    %v284 = vunpack.c.l.b16 %v118
    %v285 = vunpack.c.h.b16 %v118
    %v286 = vunpack.c.l.b16 %v119
    %v287 = vunpack.c.h.b16 %v119
    %v288 = vunpack.c.l.b16 %v120
    %v289 = vunpack.c.h.b16 %v120
    %v290 = vunpack.c.l.b16 %v121
    %v291 = vunpack.c.h.b16 %v121
    %v292 = vpack.c.b16 %v278, %v276
    %v293 = vpack.c.b16 %v279, %v277
    %v294 = vpack.c.b16 %v282, %v280
    %v295 = vpack.c.b16 %v283, %v281
    %v296 = vpack.c.b16 %v286, %v284
    %v297 = vpack.c.b16 %v287, %v285
    %v298 = vpack.c.b16 %v290, %v288
    %v299 = vpack.c.b16 %v291, %v289
    %v436 = vunpack.c.l.b16 %v122
    %v437 = vunpack.c.h.b16 %v122
    %v438 = vunpack.c.l.b16 %v123
    %v439 = vunpack.c.h.b16 %v123
    %v440 = vunpack.c.l.b16 %v124
    %v441 = vunpack.c.h.b16 %v124
    %v442 = vunpack.c.l.b16 %v125
    %v443 = vunpack.c.h.b16 %v125
    %v444 = vunpack.c.l.b16 %v126
    %v445 = vunpack.c.h.b16 %v126
    %v446 = vunpack.c.l.b16 %v127
    %v447 = vunpack.c.h.b16 %v127
    %v448 = vunpack.c.l.b16 %v128
    %v449 = vunpack.c.h.b16 %v128
    %v450 = vunpack.c.l.b16 %v129
    %v451 = vunpack.c.h.b16 %v129
    %v452 = vunpack.c.l.b16 %v130
    %v453 = vunpack.c.h.b16 %v130
    %v454 = vunpack.c.l.b16 %v131
    %v455 = vunpack.c.h.b16 %v131
    %v456 = vunpack.c.l.b16 %v132
    %v457 = vunpack.c.h.b16 %v132
    %v458 = vunpack.c.l.b16 %v133
    %v459 = vunpack.c.h.b16 %v133
    %v460 = vunpack.c.l.b16 %v134
    %v461 = vunpack.c.h.b16 %v134
    %v462 = vunpack.c.l.b16 %v135
    %v463 = vunpack.c.h.b16 %v135
    %v464 = vunpack.c.l.b16 %v136
    %v465 = vunpack.c.h.b16 %v136
    %v466 = vunpack.c.l.b16 %v137
    %v467 = vunpack.c.h.b16 %v137
    %v468 = vunpack.c.l.b16 %v138
    %v469 = vunpack.c.h.b16 %v138
    %v470 = vunpack.c.l.b16 %v139
    %v471 = vunpack.c.h.b16 %v139
    %v472 = vunpack.c.l.b16 %v140
    %v473 = vunpack.c.h.b16 %v140
    %v474 = vunpack.c.l.b16 %v141
    %v475 = vunpack.c.h.b16 %v141
    %v476 = vunpack.c.l.b16 %v142
    %v477 = vunpack.c.h.b16 %v142
    %v478 = vunpack.c.l.b16 %v143
    %v479 = vunpack.c.h.b16 %v143
    %v480 = vunpack.c.l.b16 %v144
    %v481 = vunpack.c.h.b16 %v144
    %v482 = vunpack.c.l.b16 %v145
    %v483 = vunpack.c.h.b16 %v145
    %v484 = vunpack.c.l.b16 %v146
    %v485 = vunpack.c.h.b16 %v146
    %v486 = vunpack.c.l.b16 %v147
    %v487 = vunpack.c.h.b16 %v147
    %v488 = vunpack.c.l.b16 %v148
    %v489 = vunpack.c.h.b16 %v148
    %v490 = vunpack.c.l.b16 %v149
    %v491 = vunpack.c.h.b16 %v149
    %v492 = vunpack.c.l.b16 %v150
    %v493 = vunpack.c.h.b16 %v150
    %v494 = vunpack.c.l.b16 %v151
    %v495 = vunpack.c.h.b16 %v151
    %v496 = vunpack.c.l.b16 %v152
    %v497 = vunpack.c.h.b16 %v152
    %v498 = vunpack.c.l.b16 %v153
    %v499 = vunpack.c.h.b16 %v153
    %v500 = vunpack.c.l.b16 %v154
    %v501 = vunpack.c.h.b16 %v154
    %v502 = vunpack.c.l.b16 %v155
    %v503 = vunpack.c.h.b16 %v155
    %v504 = vunpack.c.l.b16 %v156
    %v505 = vunpack.c.h.b16 %v156
    %v506 = vunpack.c.l.b16 %v157
    %v507 = vunpack.c.h.b16 %v157
    %v508 = vunpack.c.l.b16 %v158
    %v509 = vunpack.c.h.b16 %v158
    %v510 = vunpack.c.l.b16 %v159
    %v511 = vunpack.c.h.b16 %v159
    %v512 = vunpack.c.l.b16 %v160
    %v513 = vunpack.c.h.b16 %v160
    %v514 = vunpack.c.l.b16 %v161
    %v515 = vunpack.c.h.b16 %v161
    %v516 = vunpack.c.l.b16 %v162
    %v517 = vunpack.c.h.b16 %v162
    %v518 = vunpack.c.l.b16 %v163
    %v519 = vunpack.c.h.b16 %v163
    %v520 = vunpack.c.l.b16 %v164
    %v521 = vunpack.c.h.b16 %v164
    %v522 = vunpack.c.l.b16 %v165
    %v523 = vunpack.c.h.b16 %v165
    %v524 = vunpack.c.l.b16 %v166
    %v525 = vunpack.c.h.b16 %v166
    %v526 = vunpack.c.l.b16 %v167
    %v527 = vunpack.c.h.b16 %v167
    %v528 = vunpack.c.l.b16 %v168
    %v529 = vunpack.c.h.b16 %v168
    %v530 = vunpack.c.l.b16 %v169
    %v531 = vunpack.c.h.b16 %v169
    %v532 = vunpack.c.l.b16 %v170
    %v533 = vunpack.c.h.b16 %v170
    %v534 = vunpack.c.l.b16 %v171
    %v535 = vunpack.c.h.b16 %v171
    %v536 = vunpack.c.l.b16 %v172
    %v537 = vunpack.c.h.b16 %v172
    %v538 = vunpack.c.l.b16 %v173
    %v539 = vunpack.c.h.b16 %v173
    %v540 = vunpack.c.l.b16 %v174
    %v541 = vunpack.c.h.b16 %v174
    %v542 = vunpack.c.l.b16 %v175
    %v543 = vunpack.c.h.b16 %v175
    %v544 = vunpack.c.l.b16 %v176
    %v545 = vunpack.c.h.b16 %v176
    %v546 = vunpack.c.l.b16 %v177
    %v547 = vunpack.c.h.b16 %v177
    %v548 = vunpack.c.l.b16 %v178
    %v549 = vunpack.c.h.b16 %v178
    %v550 = vunpack.c.l.b16 %v179
    %v551 = vunpack.c.h.b16 %v179
    %v552 = vunpack.c.l.b16 %v180
    %v553 = vunpack.c.h.b16 %v180
    %v554 = vunpack.c.l.b16 %v181
    %v555 = vunpack.c.h.b16 %v181
    %v556 = vunpack.c.l.b16 %v182
    %v557 = vunpack.c.h.b16 %v182
    %v558 = vunpack.c.l.b16 %v183
    %v559 = vunpack.c.h.b16 %v183
    %v560 = vunpack.c.l.b16 %v184
    %v561 = vunpack.c.h.b16 %v184
    %v562 = vunpack.c.l.b16 %v185
    %v563 = vunpack.c.h.b16 %v185
    %v564 = vunpack.c.l.b16 %v186
    %v565 = vunpack.c.h.b16 %v186
    %v566 = vunpack.c.l.b16 %v187
    %v567 = vunpack.c.h.b16 %v187
    %v568 = vunpack.c.l.b16 %v188
    %v569 = vunpack.c.h.b16 %v188
    %v570 = vunpack.c.l.b16 %v189
    %v571 = vunpack.c.h.b16 %v189
    %v572 = vunpack.c.l.b16 %v190
    %v573 = vunpack.c.h.b16 %v190
    %v574 = vunpack.c.l.b16 %v191
    %v575 = vunpack.c.h.b16 %v191
    %v576 = vunpack.c.l.b16 %v192
    %v577 = vunpack.c.h.b16 %v192
    %v578 = vunpack.c.l.b16 %v193
    %v579 = vunpack.c.h.b16 %v193
    %v580 = vunpack.c.l.b16 %v194
    %v581 = vunpack.c.h.b16 %v194
    %v582 = vunpack.c.l.b16 %v195
    %v583 = vunpack.c.h.b16 %v195
    %v584 = vunpack.c.l.b16 %v196
    %v585 = vunpack.c.h.b16 %v196
    %v586 = vunpack.c.l.b16 %v197
    %v587 = vunpack.c.h.b16 %v197
    %v588 = vunpack.c.l.b16 %v198
    %v589 = vunpack.c.h.b16 %v198
    %v590 = vunpack.c.l.b16 %v199
    %v591 = vunpack.c.h.b16 %v199
    %v592 = vunpack.c.l.b16 %v200
    %v593 = vunpack.c.h.b16 %v200
    %v594 = vunpack.c.l.b16 %v201
    %v595 = vunpack.c.h.b16 %v201
    %v596 = vunpack.c.l.b16 %v202
    %v597 = vunpack.c.h.b16 %v202
    %v598 = vunpack.c.l.b16 %v203
    %v599 = vunpack.c.h.b16 %v203
    %v600 = vunpack.c.l.b16 %v204
    %v601 = vunpack.c.h.b16 %v204
    %v602 = vunpack.c.l.b16 %v205
    %v603 = vunpack.c.h.b16 %v205
    %v604 = vunpack.c.l.b16 %v206
    %v605 = vunpack.c.h.b16 %v206
    %v606 = vunpack.c.l.b16 %v207
    %v607 = vunpack.c.h.b16 %v207
    %v608 = vunpack.c.l.b16 %v208
    %v609 = vunpack.c.h.b16 %v208
    %v610 = vunpack.c.l.b16 %v209
    %v611 = vunpack.c.h.b16 %v209
    %v612 = vunpack.c.l.b16 %v210
    %v613 = vunpack.c.h.b16 %v210
    %v614 = vunpack.c.l.b16 %v211
    %v615 = vunpack.c.h.b16 %v211
    %v616 = vunpack.c.l.b16 %v212
    %v617 = vunpack.c.h.b16 %v212
    %v618 = vunpack.c.l.b16 %v213
    %v619 = vunpack.c.h.b16 %v213
    %v620 = vunpack.c.l.b16 %v214
    %v621 = vunpack.c.h.b16 %v214
    %v622 = vunpack.c.l.b16 %v215
    %v623 = vunpack.c.h.b16 %v215
    %v624 = vunpack.c.l.b16 %v216
    %v625 = vunpack.c.h.b16 %v216
    %v626 = vunpack.c.l.b16 %v217
    %v627 = vunpack.c.h.b16 %v217
    %v628 = vunpack.c.l.b16 %v218
    %v629 = vunpack.c.h.b16 %v218
    %v630 = vunpack.c.l.b16 %v219
    %v631 = vunpack.c.h.b16 %v219
    %v632 = vunpack.c.l.b16 %v220
    %v633 = vunpack.c.h.b16 %v220
    %v634 = vunpack.c.l.b16 %v221
    %v635 = vunpack.c.h.b16 %v221
    %v636 = vunpack.c.l.b16 %v222
    %v637 = vunpack.c.h.b16 %v222
    %v638 = vunpack.c.l.b16 %v223
    %v639 = vunpack.c.h.b16 %v223
    %v640 = vunpack.c.l.b16 %v224
    %v641 = vunpack.c.h.b16 %v224
    %v642 = vunpack.c.l.b16 %v225
    %v643 = vunpack.c.h.b16 %v225
    %v644 = vunpack.c.l.b16 %v226
    %v645 = vunpack.c.h.b16 %v226
    %v646 = vunpack.c.l.b16 %v227
    %v647 = vunpack.c.h.b16 %v227
    %v648 = vunpack.c.l.b16 %v228
    %v649 = vunpack.c.h.b16 %v228
    %v650 = vunpack.c.l.b16 %v229
    %v651 = vunpack.c.h.b16 %v229
    %v652 = vunpack.c.l.b16 %v230
    %v653 = vunpack.c.h.b16 %v230
    %v654 = vunpack.c.l.b16 %v231
    %v655 = vunpack.c.h.b16 %v231
    %v656 = vunpack.c.l.b16 %v232
    %v657 = vunpack.c.h.b16 %v232
    %v658 = vunpack.c.l.b16 %v233
    %v659 = vunpack.c.h.b16 %v233
    %v660 = vunpack.c.l.b16 %v234
    %v661 = vunpack.c.h.b16 %v234
    %v662 = vunpack.c.l.b16 %v235
    %v663 = vunpack.c.h.b16 %v235
    %v664 = vunpack.c.l.b16 %v236
    %v665 = vunpack.c.h.b16 %v236
    %v666 = vunpack.c.l.b16 %v237
    %v667 = vunpack.c.h.b16 %v237
    %v668 = vunpack.c.l.b16 %v238
    %v669 = vunpack.c.h.b16 %v238
    %v670 = vunpack.c.l.b16 %v239
    %v671 = vunpack.c.h.b16 %v239
    %v672 = vunpack.c.l.b16 %v240
    %v673 = vunpack.c.h.b16 %v240
    %v674 = vunpack.c.l.b16 %v241
    %v675 = vunpack.c.h.b16 %v241
    %v676 = vunpack.c.l.b16 %v242
    %v677 = vunpack.c.h.b16 %v242
    %v678 = vunpack.c.l.b16 %v243
    %v679 = vunpack.c.h.b16 %v243
    %v680 = vunpack.c.l.b16 %v244
    %v681 = vunpack.c.h.b16 %v244
    %v682 = vunpack.c.l.b16 %v245
    %v683 = vunpack.c.h.b16 %v245
    %v684 = vunpack.c.l.b16 %v246
    %v685 = vunpack.c.h.b16 %v246
    %v686 = vunpack.c.l.b16 %v247
    %v687 = vunpack.c.h.b16 %v247
    %v688 = vunpack.c.l.b16 %v248
    %v689 = vunpack.c.h.b16 %v248
    %v690 = vunpack.c.l.b16 %v249
    %v691 = vunpack.c.h.b16 %v249
    %v692 = vpack.c.b16 %v444, %v436
    %v693 = vpack.c.b16 %v445, %v437
    %v694 = vpack.c.b16 %v446, %v438
    %v695 = vpack.c.b16 %v447, %v439
    %v696 = vpack.c.b16 %v448, %v440
    %v697 = vpack.c.b16 %v449, %v441
    %v698 = vpack.c.b16 %v450, %v442
    %v699 = vpack.c.b16 %v451, %v443
    %v700 = vpack.c.b16 %v460, %v452
    %v701 = vpack.c.b16 %v461, %v453
    %v702 = vpack.c.b16 %v462, %v454
    %v703 = vpack.c.b16 %v463, %v455
    %v704 = vpack.c.b16 %v464, %v456
    %v705 = vpack.c.b16 %v465, %v457
    %v706 = vpack.c.b16 %v466, %v458
    %v707 = vpack.c.b16 %v467, %v459
    %v708 = vpack.c.b16 %v476, %v468
    %v709 = vpack.c.b16 %v477, %v469
    %v710 = vpack.c.b16 %v478, %v470
    %v711 = vpack.c.b16 %v479, %v471
    %v712 = vpack.c.b16 %v480, %v472
    %v713 = vpack.c.b16 %v481, %v473
    %v714 = vpack.c.b16 %v482, %v474
    %v715 = vpack.c.b16 %v483, %v475
    %v716 = vpack.c.b16 %v492, %v484
    %v717 = vpack.c.b16 %v493, %v485
    %v718 = vpack.c.b16 %v494, %v486
    %v719 = vpack.c.b16 %v495, %v487
    %v720 = vpack.c.b16 %v496, %v488
    %v721 = vpack.c.b16 %v497, %v489
    %v722 = vpack.c.b16 %v498, %v490
    %v723 = vpack.c.b16 %v499, %v491
    %v724 = vpack.c.b16 %v508, %v500
    %v725 = vpack.c.b16 %v509, %v501
    %v726 = vpack.c.b16 %v510, %v502
    %v727 = vpack.c.b16 %v511, %v503
    %v728 = vpack.c.b16 %v512, %v504
    %v729 = vpack.c.b16 %v513, %v505
    %v730 = vpack.c.b16 %v514, %v506
    %v731 = vpack.c.b16 %v515, %v507
    %v732 = vpack.c.b16 %v524, %v516
    %v733 = vpack.c.b16 %v525, %v517
    %v734 = vpack.c.b16 %v526, %v518
    %v735 = vpack.c.b16 %v527, %v519
    %v736 = vpack.c.b16 %v528, %v520
    %v737 = vpack.c.b16 %v529, %v521
    %v738 = vpack.c.b16 %v530, %v522
    %v739 = vpack.c.b16 %v531, %v523
    %v740 = vpack.c.b16 %v540, %v532
    %v741 = vpack.c.b16 %v541, %v533
    %v742 = vpack.c.b16 %v542, %v534
    %v743 = vpack.c.b16 %v543, %v535
    %v744 = vpack.c.b16 %v544, %v536
    %v745 = vpack.c.b16 %v545, %v537
    %v746 = vpack.c.b16 %v546, %v538
    %v747 = vpack.c.b16 %v547, %v539
    %v748 = vpack.c.b16 %v556, %v548
    %v749 = vpack.c.b16 %v557, %v549
    %v750 = vpack.c.b16 %v558, %v550
    %v751 = vpack.c.b16 %v559, %v551
    %v752 = vpack.c.b16 %v560, %v552
    %v753 = vpack.c.b16 %v561, %v553
    %v754 = vpack.c.b16 %v562, %v554
    %v755 = vpack.c.b16 %v563, %v555
    %v756 = vpack.c.b16 %v572, %v564
    %v757 = vpack.c.b16 %v573, %v565
    %v758 = vpack.c.b16 %v574, %v566
    %v759 = vpack.c.b16 %v575, %v567
    %v760 = vpack.c.b16 %v576, %v568
    %v761 = vpack.c.b16 %v577, %v569
    %v762 = vpack.c.b16 %v578, %v570
    %v763 = vpack.c.b16 %v579, %v571
    %v764 = vpack.c.b16 %v588, %v580
    %v765 = vpack.c.b16 %v589, %v581
    %v766 = vpack.c.b16 %v590, %v582
    %v767 = vpack.c.b16 %v591, %v583
    %v768 = vpack.c.b16 %v592, %v584
    %v769 = vpack.c.b16 %v593, %v585
    %v770 = vpack.c.b16 %v594, %v586
    %v771 = vpack.c.b16 %v595, %v587
    %v772 = vpack.c.b16 %v604, %v596
    %v773 = vpack.c.b16 %v605, %v597
    %v774 = vpack.c.b16 %v606, %v598
    %v775 = vpack.c.b16 %v607, %v599
    %v776 = vpack.c.b16 %v608, %v600
    %v777 = vpack.c.b16 %v609, %v601
    %v778 = vpack.c.b16 %v610, %v602
    %v779 = vpack.c.b16 %v611, %v603
    %v780 = vpack.c.b16 %v620, %v612
    %v781 = vpack.c.b16 %v621, %v613
    %v782 = vpack.c.b16 %v622, %v614
    %v783 = vpack.c.b16 %v623, %v615
    %v784 = vpack.c.b16 %v624, %v616
    %v785 = vpack.c.b16 %v625, %v617
    %v786 = vpack.c.b16 %v626, %v618
    %v787 = vpack.c.b16 %v627, %v619
    %v788 = vpack.c.b16 %v636, %v628
    %v789 = vpack.c.b16 %v637, %v629
    %v790 = vpack.c.b16 %v638, %v630
    %v791 = vpack.c.b16 %v639, %v631
    %v792 = vpack.c.b16 %v640, %v632
    %v793 = vpack.c.b16 %v641, %v633
    %v794 = vpack.c.b16 %v642, %v634
    %v795 = vpack.c.b16 %v643, %v635
    %v796 = vpack.c.b16 %v652, %v644
    %v797 = vpack.c.b16 %v653, %v645
    %v798 = vpack.c.b16 %v654, %v646
    %v799 = vpack.c.b16 %v655, %v647
    %v800 = vpack.c.b16 %v656, %v648
    %v801 = vpack.c.b16 %v657, %v649
    %v802 = vpack.c.b16 %v658, %v650
    %v803 = vpack.c.b16 %v659, %v651
    %v804 = vpack.c.b16 %v668, %v660
    %v805 = vpack.c.b16 %v669, %v661
    %v806 = vpack.c.b16 %v670, %v662
    %v807 = vpack.c.b16 %v671, %v663
    %v808 = vpack.c.b16 %v672, %v664
    %v809 = vpack.c.b16 %v673, %v665
    %v810 = vpack.c.b16 %v674, %v666
    %v811 = vpack.c.b16 %v675, %v667
    %v812 = vpack.c.b16 %v684, %v676
    %v813 = vpack.c.b16 %v685, %v677
    %v814 = vpack.c.b16 %v686, %v678
    %v815 = vpack.c.b16 %v687, %v679
    %v816 = vpack.c.b16 %v688, %v680
    %v817 = vpack.c.b16 %v689, %v681
    %v818 = vpack.c.b16 %v690, %v682
    %v819 = vpack.c.b16 %v691, %v683
    %948 = vmatpush.bf16.msra.mxu0 %v748
    %949 = vmatpush.bf16.msra.mxu0 %v740
    %950 = vmatpush.bf16.msra.mxu0 %v732
    %951 = vmatpush.bf16.msra.mxu0 %v724
    %952 = vmatpush.bf16.msra.mxu0 %v716
    %953 = vmatpush.bf16.msra.mxu0 %v708
    %954 = vmatpush.bf16.msra.mxu0 %v700
    %955 = vmatpush.bf16.msra.mxu0 %v692
    %956 = vmatmul.bf16.gmra.mxu0 %v292
    %v957 = vpop.f32.mrf.mxu0
    %v958 = vadd.f32 %v252, %v957
    %v959 = vpop.f32.mrf.mxu0
    %v960 = vadd.f32 %v252, %v959
    %961 = vmatmul.bf16.gmra.mxu0 %v294
    %v962 = vpop.f32.mrf.mxu0
    %v963 = vadd.f32 %v252, %v962
    %v964 = vpop.f32.mrf.mxu0
    %v965 = vadd.f32 %v252, %v964
    %966 = vmatmul.bf16.gmra.mxu0 %v296
    %v967 = vpop.f32.mrf.mxu0
    %v968 = vadd.f32 %v252, %v967
    %v969 = vpop.f32.mrf.mxu0
    %v970 = vadd.f32 %v252, %v969
    %971 = vmatmul.bf16.gmra.mxu0 %v298
    %v972 = vpop.f32.mrf.mxu0
    %v973 = vadd.f32 %v252, %v972
    %v974 = vpop.f32.mrf.mxu0
    %v975 = vadd.f32 %v252, %v974
    %976 = vdwg.mxu0
    %977 = vmatpush.bf16.msra.mxu0 %v812
    %978 = vmatpush.bf16.msra.mxu0 %v804
    %979 = vmatpush.bf16.msra.mxu0 %v796
    %980 = vmatpush.bf16.msra.mxu0 %v788
    %981 = vmatpush.bf16.msra.mxu0 %v780
    %982 = vmatpush.bf16.msra.mxu0 %v772
    %983 = vmatpush.bf16.msra.mxu0 %v764
    %984 = vmatpush.bf16.msra.mxu0 %v756
    %985 = vmatmul.bf16.gmra.mxu0 %v293
    %v986 = vpop.f32.mrf.mxu0
    %v987 = vadd.f32 %v958, %v986
    %v988 = vpop.f32.mrf.mxu0
    %v989 = vadd.f32 %v960, %v988
    %990 = vmatmul.bf16.gmra.mxu0 %v295
    %v991 = vpop.f32.mrf.mxu0
    %v992 = vadd.f32 %v963, %v991
    %v993 = vpop.f32.mrf.mxu0
    %v994 = vadd.f32 %v965, %v993
    %995 = vmatmul.bf16.gmra.mxu0 %v297
    %v996 = vpop.f32.mrf.mxu0
    %v997 = vadd.f32 %v968, %v996
    %v998 = vpop.f32.mrf.mxu0
    %v999 = vadd.f32 %v970, %v998
    %1000 = vmatmul.bf16.gmra.mxu0 %v299
    %v1001 = vpop.f32.mrf.mxu0
    %v1002 = vadd.f32 %v973, %v1001
    %v1003 = vpop.f32.mrf.mxu0
    %v1004 = vadd.f32 %v975, %v1003
    %1005 = vdwg.mxu0
    %1006 = vmatpush.bf16.msra.mxu0 %v749
    %1007 = vmatpush.bf16.msra.mxu0 %v741
    %1008 = vmatpush.bf16.msra.mxu0 %v733
    %1009 = vmatpush.bf16.msra.mxu0 %v725
    %1010 = vmatpush.bf16.msra.mxu0 %v717
    %1011 = vmatpush.bf16.msra.mxu0 %v709
    %1012 = vmatpush.bf16.msra.mxu0 %v701
    %1013 = vmatpush.bf16.msra.mxu0 %v693
    %1014 = vmatmul.bf16.gmra.mxu0 %v292
    %v1015 = vpop.f32.mrf.mxu0
    %v1016 = vadd.f32 %v253, %v1015
    %v1017 = vpop.f32.mrf.mxu0
    %v1018 = vadd.f32 %v253, %v1017
    %1019 = vmatmul.bf16.gmra.mxu0 %v294
    %v1020 = vpop.f32.mrf.mxu0
    %v1021 = vadd.f32 %v253, %v1020
    %v1022 = vpop.f32.mrf.mxu0
    %v1023 = vadd.f32 %v253, %v1022
    %1024 = vmatmul.bf16.gmra.mxu0 %v296
    %v1025 = vpop.f32.mrf.mxu0
    %v1026 = vadd.f32 %v253, %v1025
    %v1027 = vpop.f32.mrf.mxu0
    %v1028 = vadd.f32 %v253, %v1027
    %1029 = vmatmul.bf16.gmra.mxu0 %v298
    %v1030 = vpop.f32.mrf.mxu0
    %v1031 = vadd.f32 %v253, %v1030
    %v1032 = vpop.f32.mrf.mxu0
    %v1033 = vadd.f32 %v253, %v1032
    %1034 = vdwg.mxu0
    %1035 = vmatpush.bf16.msra.mxu0 %v813
    %1036 = vmatpush.bf16.msra.mxu0 %v805
    %1037 = vmatpush.bf16.msra.mxu0 %v797
    %1038 = vmatpush.bf16.msra.mxu0 %v789
    %1039 = vmatpush.bf16.msra.mxu0 %v781
    %1040 = vmatpush.bf16.msra.mxu0 %v773
    %1041 = vmatpush.bf16.msra.mxu0 %v765
    %1042 = vmatpush.bf16.msra.mxu0 %v757
    %1043 = vmatmul.bf16.gmra.mxu0 %v293
    %v1044 = vpop.f32.mrf.mxu0
    %v1045 = vadd.f32 %v1016, %v1044
    %v1046 = vpop.f32.mrf.mxu0
    %v1047 = vadd.f32 %v1018, %v1046
    %1048 = vmatmul.bf16.gmra.mxu0 %v295
    %v1049 = vpop.f32.mrf.mxu0
    %v1050 = vadd.f32 %v1021, %v1049
    %v1051 = vpop.f32.mrf.mxu0
    %v1052 = vadd.f32 %v1023, %v1051
    %1053 = vmatmul.bf16.gmra.mxu0 %v297
    %v1054 = vpop.f32.mrf.mxu0
    %v1055 = vadd.f32 %v1026, %v1054
    %v1056 = vpop.f32.mrf.mxu0
    %v1057 = vadd.f32 %v1028, %v1056
    %1058 = vmatmul.bf16.gmra.mxu0 %v299
    %v1059 = vpop.f32.mrf.mxu0
    %v1060 = vadd.f32 %v1031, %v1059
    %v1061 = vpop.f32.mrf.mxu0
    %v1062 = vadd.f32 %v1033, %v1061
    %1063 = vdwg.mxu0
    %1064 = vmatpush.bf16.msra.mxu0 %v750
    %1065 = vmatpush.bf16.msra.mxu0 %v742
    %1066 = vmatpush.bf16.msra.mxu0 %v734
    %1067 = vmatpush.bf16.msra.mxu0 %v726
    %1068 = vmatpush.bf16.msra.mxu0 %v718
    %1069 = vmatpush.bf16.msra.mxu0 %v710
    %1070 = vmatpush.bf16.msra.mxu0 %v702
    %1071 = vmatpush.bf16.msra.mxu0 %v694
    %1072 = vmatmul.bf16.gmra.mxu0 %v292
    %v1073 = vpop.f32.mrf.mxu0
    %v1074 = vadd.f32 %v254, %v1073
    %v1075 = vpop.f32.mrf.mxu0
    %v1076 = vadd.f32 %v254, %v1075
    %1077 = vmatmul.bf16.gmra.mxu0 %v294
    %v1078 = vpop.f32.mrf.mxu0
    %v1079 = vadd.f32 %v254, %v1078
    %v1080 = vpop.f32.mrf.mxu0
    %v1081 = vadd.f32 %v254, %v1080
    %1082 = vmatmul.bf16.gmra.mxu0 %v296
    %v1083 = vpop.f32.mrf.mxu0
    %v1084 = vadd.f32 %v254, %v1083
    %v1085 = vpop.f32.mrf.mxu0
    %v1086 = vadd.f32 %v254, %v1085
    %1087 = vmatmul.bf16.gmra.mxu0 %v298
    %v1088 = vpop.f32.mrf.mxu0
    %v1089 = vadd.f32 %v254, %v1088
    %v1090 = vpop.f32.mrf.mxu0
    %v1091 = vadd.f32 %v254, %v1090
    %1092 = vdwg.mxu0
    %1093 = vmatpush.bf16.msra.mxu0 %v814
    %1094 = vmatpush.bf16.msra.mxu0 %v806
    %1095 = vmatpush.bf16.msra.mxu0 %v798
    %1096 = vmatpush.bf16.msra.mxu0 %v790
    %1097 = vmatpush.bf16.msra.mxu0 %v782
    %1098 = vmatpush.bf16.msra.mxu0 %v774
    %1099 = vmatpush.bf16.msra.mxu0 %v766
    %1100 = vmatpush.bf16.msra.mxu0 %v758
    %1101 = vmatmul.bf16.gmra.mxu0 %v293
    %v1102 = vpop.f32.mrf.mxu0
    %v1103 = vadd.f32 %v1074, %v1102
    %v1104 = vpop.f32.mrf.mxu0
    %v1105 = vadd.f32 %v1076, %v1104
    %1106 = vmatmul.bf16.gmra.mxu0 %v295
    %v1107 = vpop.f32.mrf.mxu0
    %v1108 = vadd.f32 %v1079, %v1107
    %v1109 = vpop.f32.mrf.mxu0
    %v1110 = vadd.f32 %v1081, %v1109
    %1111 = vmatmul.bf16.gmra.mxu0 %v297
    %v1112 = vpop.f32.mrf.mxu0
    %v1113 = vadd.f32 %v1084, %v1112
    %v1114 = vpop.f32.mrf.mxu0
    %v1115 = vadd.f32 %v1086, %v1114
    %1116 = vmatmul.bf16.gmra.mxu0 %v299
    %v1117 = vpop.f32.mrf.mxu0
    %v1118 = vadd.f32 %v1089, %v1117
    %v1119 = vpop.f32.mrf.mxu0
    %v1120 = vadd.f32 %v1091, %v1119
    %1121 = vdwg.mxu0
    %1122 = vmatpush.bf16.msra.mxu0 %v751
    %1123 = vmatpush.bf16.msra.mxu0 %v743
    %1124 = vmatpush.bf16.msra.mxu0 %v735
    %1125 = vmatpush.bf16.msra.mxu0 %v727
    %1126 = vmatpush.bf16.msra.mxu0 %v719
    %1127 = vmatpush.bf16.msra.mxu0 %v711
    %1128 = vmatpush.bf16.msra.mxu0 %v703
    %1129 = vmatpush.bf16.msra.mxu0 %v695
    %1130 = vmatmul.bf16.gmra.mxu0 %v292
    %v1131 = vpop.f32.mrf.mxu0
    %v1132 = vadd.f32 %v255, %v1131
    %v1133 = vpop.f32.mrf.mxu0
    %v1134 = vadd.f32 %v255, %v1133
    %1135 = vmatmul.bf16.gmra.mxu0 %v294
    %v1136 = vpop.f32.mrf.mxu0
    %v1137 = vadd.f32 %v255, %v1136
    %v1138 = vpop.f32.mrf.mxu0
    %v1139 = vadd.f32 %v255, %v1138
    %1140 = vmatmul.bf16.gmra.mxu0 %v296
    %v1141 = vpop.f32.mrf.mxu0
    %v1142 = vadd.f32 %v255, %v1141
    %v1143 = vpop.f32.mrf.mxu0
    %v1144 = vadd.f32 %v255, %v1143
    %1145 = vmatmul.bf16.gmra.mxu0 %v298
    %v1146 = vpop.f32.mrf.mxu0
    %v1147 = vadd.f32 %v255, %v1146
    %v1148 = vpop.f32.mrf.mxu0
    %v1149 = vadd.f32 %v255, %v1148
    %1150 = vdwg.mxu0
    %1151 = vmatpush.bf16.msra.mxu0 %v815
    %1152 = vmatpush.bf16.msra.mxu0 %v807
    %1153 = vmatpush.bf16.msra.mxu0 %v799
    %1154 = vmatpush.bf16.msra.mxu0 %v791
    %1155 = vmatpush.bf16.msra.mxu0 %v783
    %1156 = vmatpush.bf16.msra.mxu0 %v775
    %1157 = vmatpush.bf16.msra.mxu0 %v767
    %1158 = vmatpush.bf16.msra.mxu0 %v759
    %1159 = vmatmul.bf16.gmra.mxu0 %v293
    %v1160 = vpop.f32.mrf.mxu0
    %v1161 = vadd.f32 %v1132, %v1160
    %v1162 = vpop.f32.mrf.mxu0
    %v1163 = vadd.f32 %v1134, %v1162
    %1164 = vmatmul.bf16.gmra.mxu0 %v295
    %v1165 = vpop.f32.mrf.mxu0
    %v1166 = vadd.f32 %v1137, %v1165
    %v1167 = vpop.f32.mrf.mxu0
    %v1168 = vadd.f32 %v1139, %v1167
    %1169 = vmatmul.bf16.gmra.mxu0 %v297
    %v1170 = vpop.f32.mrf.mxu0
    %v1171 = vadd.f32 %v1142, %v1170
    %v1172 = vpop.f32.mrf.mxu0
    %v1173 = vadd.f32 %v1144, %v1172
    %1174 = vmatmul.bf16.gmra.mxu0 %v299
    %v1175 = vpop.f32.mrf.mxu0
    %v1176 = vadd.f32 %v1147, %v1175
    %v1177 = vpop.f32.mrf.mxu0
    %v1178 = vadd.f32 %v1149, %v1177
    %1179 = vdwg.mxu0
    %1180 = vmatpush.bf16.msra.mxu0 %v752
    %1181 = vmatpush.bf16.msra.mxu0 %v744
    %1182 = vmatpush.bf16.msra.mxu0 %v736
    %1183 = vmatpush.bf16.msra.mxu0 %v728
    %1184 = vmatpush.bf16.msra.mxu0 %v720
    %1185 = vmatpush.bf16.msra.mxu0 %v712
    %1186 = vmatpush.bf16.msra.mxu0 %v704
    %1187 = vmatpush.bf16.msra.mxu0 %v696
    %1188 = vmatmul.bf16.gmra.mxu0 %v292
    %v1189 = vpop.f32.mrf.mxu0
    %v1190 = vadd.f32 %v256, %v1189
    %v1191 = vpop.f32.mrf.mxu0
    %v1192 = vadd.f32 %v256, %v1191
    %1193 = vmatmul.bf16.gmra.mxu0 %v294
    %v1194 = vpop.f32.mrf.mxu0
    %v1195 = vadd.f32 %v256, %v1194
    %v1196 = vpop.f32.mrf.mxu0
    %v1197 = vadd.f32 %v256, %v1196
    %1198 = vmatmul.bf16.gmra.mxu0 %v296
    %v1199 = vpop.f32.mrf.mxu0
    %v1200 = vadd.f32 %v256, %v1199
    %v1201 = vpop.f32.mrf.mxu0
    %v1202 = vadd.f32 %v256, %v1201
    %1203 = vmatmul.bf16.gmra.mxu0 %v298
    %v1204 = vpop.f32.mrf.mxu0
    %v1205 = vadd.f32 %v256, %v1204
    %v1206 = vpop.f32.mrf.mxu0
    %v1207 = vadd.f32 %v256, %v1206
    %1208 = vdwg.mxu0
    %1209 = vmatpush.bf16.msra.mxu0 %v816
    %1210 = vmatpush.bf16.msra.mxu0 %v808
    %1211 = vmatpush.bf16.msra.mxu0 %v800
    %1212 = vmatpush.bf16.msra.mxu0 %v792
    %1213 = vmatpush.bf16.msra.mxu0 %v784
    %1214 = vmatpush.bf16.msra.mxu0 %v776
    %1215 = vmatpush.bf16.msra.mxu0 %v768
    %1216 = vmatpush.bf16.msra.mxu0 %v760
    %1217 = vmatmul.bf16.gmra.mxu0 %v293
    %v1218 = vpop.f32.mrf.mxu0
    %v1219 = vadd.f32 %v1190, %v1218
    %v1220 = vpop.f32.mrf.mxu0
    %v1221 = vadd.f32 %v1192, %v1220
    %1222 = vmatmul.bf16.gmra.mxu0 %v295
    %v1223 = vpop.f32.mrf.mxu0
    %v1224 = vadd.f32 %v1195, %v1223
    %v1225 = vpop.f32.mrf.mxu0
    %v1226 = vadd.f32 %v1197, %v1225
    %1227 = vmatmul.bf16.gmra.mxu0 %v297
    %v1228 = vpop.f32.mrf.mxu0
    %v1229 = vadd.f32 %v1200, %v1228
    %v1230 = vpop.f32.mrf.mxu0
    %v1231 = vadd.f32 %v1202, %v1230
    %1232 = vmatmul.bf16.gmra.mxu0 %v299
    %v1233 = vpop.f32.mrf.mxu0
    %v1234 = vadd.f32 %v1205, %v1233
    %v1235 = vpop.f32.mrf.mxu0
    %v1236 = vadd.f32 %v1207, %v1235
    %1237 = vdwg.mxu0
    %1238 = vmatpush.bf16.msra.mxu0 %v753
    %1239 = vmatpush.bf16.msra.mxu0 %v745
    %1240 = vmatpush.bf16.msra.mxu0 %v737
    %1241 = vmatpush.bf16.msra.mxu0 %v729
    %1242 = vmatpush.bf16.msra.mxu0 %v721
    %1243 = vmatpush.bf16.msra.mxu0 %v713
    %1244 = vmatpush.bf16.msra.mxu0 %v705
    %1245 = vmatpush.bf16.msra.mxu0 %v697
    %1246 = vmatmul.bf16.gmra.mxu0 %v292
    %v1247 = vpop.f32.mrf.mxu0
    %v1248 = vadd.f32 %v257, %v1247
    %v1249 = vpop.f32.mrf.mxu0
    %v1250 = vadd.f32 %v257, %v1249
    %1251 = vmatmul.bf16.gmra.mxu0 %v294
    %v1252 = vpop.f32.mrf.mxu0
    %v1253 = vadd.f32 %v257, %v1252
    %v1254 = vpop.f32.mrf.mxu0
    %v1255 = vadd.f32 %v257, %v1254
    %1256 = vmatmul.bf16.gmra.mxu0 %v296
    %v1257 = vpop.f32.mrf.mxu0
    %v1258 = vadd.f32 %v257, %v1257
    %v1259 = vpop.f32.mrf.mxu0
    %v1260 = vadd.f32 %v257, %v1259
    %1261 = vmatmul.bf16.gmra.mxu0 %v298
    %v1262 = vpop.f32.mrf.mxu0
    %v1263 = vadd.f32 %v257, %v1262
    %v1264 = vpop.f32.mrf.mxu0
    %v1265 = vadd.f32 %v257, %v1264
    %1266 = vdwg.mxu0
    %1267 = vmatpush.bf16.msra.mxu0 %v817
    %1268 = vmatpush.bf16.msra.mxu0 %v809
    %1269 = vmatpush.bf16.msra.mxu0 %v801
    %1270 = vmatpush.bf16.msra.mxu0 %v793
    %1271 = vmatpush.bf16.msra.mxu0 %v785
    %1272 = vmatpush.bf16.msra.mxu0 %v777
    %1273 = vmatpush.bf16.msra.mxu0 %v769
    %1274 = vmatpush.bf16.msra.mxu0 %v761
    %1275 = vmatmul.bf16.gmra.mxu0 %v293
    %v1276 = vpop.f32.mrf.mxu0
    %v1277 = vadd.f32 %v1248, %v1276
    %v1278 = vpop.f32.mrf.mxu0
    %v1279 = vadd.f32 %v1250, %v1278
    %1280 = vmatmul.bf16.gmra.mxu0 %v295
    %v1281 = vpop.f32.mrf.mxu0
    %v1282 = vadd.f32 %v1253, %v1281
    %v1283 = vpop.f32.mrf.mxu0
    %v1284 = vadd.f32 %v1255, %v1283
    %1285 = vmatmul.bf16.gmra.mxu0 %v297
    %v1286 = vpop.f32.mrf.mxu0
    %v1287 = vadd.f32 %v1258, %v1286
    %v1288 = vpop.f32.mrf.mxu0
    %v1289 = vadd.f32 %v1260, %v1288
    %1290 = vmatmul.bf16.gmra.mxu0 %v299
    %v1291 = vpop.f32.mrf.mxu0
    %v1292 = vadd.f32 %v1263, %v1291
    %v1293 = vpop.f32.mrf.mxu0
    %v1294 = vadd.f32 %v1265, %v1293
    %1295 = vdwg.mxu0
    %1296 = vmatpush.bf16.msra.mxu0 %v754
    %1297 = vmatpush.bf16.msra.mxu0 %v746
    %1298 = vmatpush.bf16.msra.mxu0 %v738
    %1299 = vmatpush.bf16.msra.mxu0 %v730
    %1300 = vmatpush.bf16.msra.mxu0 %v722
    %1301 = vmatpush.bf16.msra.mxu0 %v714
    %1302 = vmatpush.bf16.msra.mxu0 %v706
    %1303 = vmatpush.bf16.msra.mxu0 %v698
    %1304 = vmatmul.bf16.gmra.mxu0 %v292
    %v1305 = vpop.f32.mrf.mxu0
    %v1306 = vadd.f32 %v258, %v1305
    %v1307 = vpop.f32.mrf.mxu0
    %v1308 = vadd.f32 %v258, %v1307
    %1309 = vmatmul.bf16.gmra.mxu0 %v294
    %v1310 = vpop.f32.mrf.mxu0
    %v1311 = vadd.f32 %v258, %v1310
    %v1312 = vpop.f32.mrf.mxu0
    %v1313 = vadd.f32 %v258, %v1312
    %1314 = vmatmul.bf16.gmra.mxu0 %v296
    %v1315 = vpop.f32.mrf.mxu0
    %v1316 = vadd.f32 %v258, %v1315
    %v1317 = vpop.f32.mrf.mxu0
    %v1318 = vadd.f32 %v258, %v1317
    %1319 = vmatmul.bf16.gmra.mxu0 %v298
    %v1320 = vpop.f32.mrf.mxu0
    %v1321 = vadd.f32 %v258, %v1320
    %v1322 = vpop.f32.mrf.mxu0
    %v1323 = vadd.f32 %v258, %v1322
    %1324 = vdwg.mxu0
    %1325 = vmatpush.bf16.msra.mxu0 %v818
    %1326 = vmatpush.bf16.msra.mxu0 %v810
    %1327 = vmatpush.bf16.msra.mxu0 %v802
    %1328 = vmatpush.bf16.msra.mxu0 %v794
    %1329 = vmatpush.bf16.msra.mxu0 %v786
    %1330 = vmatpush.bf16.msra.mxu0 %v778
    %1331 = vmatpush.bf16.msra.mxu0 %v770
    %1332 = vmatpush.bf16.msra.mxu0 %v762
    %1333 = vmatmul.bf16.gmra.mxu0 %v293
    %v1334 = vpop.f32.mrf.mxu0
    %v1335 = vadd.f32 %v1306, %v1334
    %v1336 = vpop.f32.mrf.mxu0
    %v1337 = vadd.f32 %v1308, %v1336
    %1338 = vmatmul.bf16.gmra.mxu0 %v295
    %v1339 = vpop.f32.mrf.mxu0
    %v1340 = vadd.f32 %v1311, %v1339
    %v1341 = vpop.f32.mrf.mxu0
    %v1342 = vadd.f32 %v1313, %v1341
    %1343 = vmatmul.bf16.gmra.mxu0 %v297
    %v1344 = vpop.f32.mrf.mxu0
    %v1345 = vadd.f32 %v1316, %v1344
    %v1346 = vpop.f32.mrf.mxu0
    %v1347 = vadd.f32 %v1318, %v1346
    %1348 = vmatmul.bf16.gmra.mxu0 %v299
    %v1349 = vpop.f32.mrf.mxu0
    %v1350 = vadd.f32 %v1321, %v1349
    %v1351 = vpop.f32.mrf.mxu0
    %v1352 = vadd.f32 %v1323, %v1351
    %1353 = vdwg.mxu0
    %1354 = vmatpush.bf16.msra.mxu0 %v755
    %1355 = vmatpush.bf16.msra.mxu0 %v747
    %1356 = vmatpush.bf16.msra.mxu0 %v739
    %1357 = vmatpush.bf16.msra.mxu0 %v731
    %1358 = vmatpush.bf16.msra.mxu0 %v723
    %1359 = vmatpush.bf16.msra.mxu0 %v715
    %1360 = vmatpush.bf16.msra.mxu0 %v707
    %1361 = vmatpush.bf16.msra.mxu0 %v699
    %1362 = vmatmul.bf16.gmra.mxu0 %v292
    %v1363 = vpop.f32.mrf.mxu0
    %v1364 = vadd.f32 %v259, %v1363
    %v1365 = vpop.f32.mrf.mxu0
    %v1366 = vadd.f32 %v259, %v1365
    %1367 = vmatmul.bf16.gmra.mxu0 %v294
    %v1368 = vpop.f32.mrf.mxu0
    %v1369 = vadd.f32 %v259, %v1368
    %v1370 = vpop.f32.mrf.mxu0
    %v1371 = vadd.f32 %v259, %v1370
    %1372 = vmatmul.bf16.gmra.mxu0 %v296
    %v1373 = vpop.f32.mrf.mxu0
    %v1374 = vadd.f32 %v259, %v1373
    %v1375 = vpop.f32.mrf.mxu0
    %v1376 = vadd.f32 %v259, %v1375
    %1377 = vmatmul.bf16.gmra.mxu0 %v298
    %v1378 = vpop.f32.mrf.mxu0
    %v1379 = vadd.f32 %v259, %v1378
    %v1380 = vpop.f32.mrf.mxu0
    %v1381 = vadd.f32 %v259, %v1380
    %1382 = vdwg.mxu0
    %1383 = vmatpush.bf16.msra.mxu0 %v819
    %1384 = vmatpush.bf16.msra.mxu0 %v811
    %1385 = vmatpush.bf16.msra.mxu0 %v803
    %1386 = vmatpush.bf16.msra.mxu0 %v795
    %1387 = vmatpush.bf16.msra.mxu0 %v787
    %1388 = vmatpush.bf16.msra.mxu0 %v779
    %1389 = vmatpush.bf16.msra.mxu0 %v771
    %1390 = vmatpush.bf16.msra.mxu0 %v763
    %1391 = vmatmul.bf16.gmra.mxu0 %v293
    %v1392 = vpop.f32.mrf.mxu0
    %v1393 = vadd.f32 %v1364, %v1392
    %v1394 = vpop.f32.mrf.mxu0
    %v1395 = vadd.f32 %v1366, %v1394
    %1396 = vmatmul.bf16.gmra.mxu0 %v295
    %v1397 = vpop.f32.mrf.mxu0
    %v1398 = vadd.f32 %v1369, %v1397
    %v1399 = vpop.f32.mrf.mxu0
    %v1400 = vadd.f32 %v1371, %v1399
    %1401 = vmatmul.bf16.gmra.mxu0 %v297
    %v1402 = vpop.f32.mrf.mxu0
    %v1403 = vadd.f32 %v1374, %v1402
    %v1404 = vpop.f32.mrf.mxu0
    %v1405 = vadd.f32 %v1376, %v1404
    %1406 = vmatmul.bf16.gmra.mxu0 %v299
    %v1407 = vpop.f32.mrf.mxu0
    %v1408 = vadd.f32 %v1379, %v1407
    %v1409 = vpop.f32.mrf.mxu0
    %v1410 = vadd.f32 %v1381, %v1409
    %1411 = vdwg.mxu0
    %vm1412 = vcmp.ge.f32.partialorder %v987, 0.0
    %vm1413 = vcmp.ge.f32.partialorder %v1045, 0.0
    %vm1414 = vcmp.ge.f32.partialorder %v1103, 0.0
    %vm1415 = vcmp.ge.f32.partialorder %v1161, 0.0
    %vm1416 = vcmp.ge.f32.partialorder %v1219, 0.0
    %vm1417 = vcmp.ge.f32.partialorder %v1277, 0.0
    %vm1418 = vcmp.ge.f32.partialorder %v1335, 0.0
    %vm1419 = vcmp.ge.f32.partialorder %v1393, 0.0
    %vm1420 = vcmp.ge.f32.partialorder %v989, 0.0
    %vm1421 = vcmp.ge.f32.partialorder %v1047, 0.0
    %vm1422 = vcmp.ge.f32.partialorder %v1105, 0.0
    %vm1423 = vcmp.ge.f32.partialorder %v1163, 0.0
    %vm1424 = vcmp.ge.f32.partialorder %v1221, 0.0
    %vm1425 = vcmp.ge.f32.partialorder %v1279, 0.0
    %vm1426 = vcmp.ge.f32.partialorder %v1337, 0.0
    %vm1427 = vcmp.ge.f32.partialorder %v1395, 0.0
    %vm1428 = vcmp.ge.f32.partialorder %v992, 0.0
    %vm1429 = vcmp.ge.f32.partialorder %v1050, 0.0
    %vm1430 = vcmp.ge.f32.partialorder %v1108, 0.0
    %vm1431 = vcmp.ge.f32.partialorder %v1166, 0.0
    %vm1432 = vcmp.ge.f32.partialorder %v1224, 0.0
    %vm1433 = vcmp.ge.f32.partialorder %v1282, 0.0
    %vm1434 = vcmp.ge.f32.partialorder %v1340, 0.0
    %vm1435 = vcmp.ge.f32.partialorder %v1398, 0.0
    %vm1436 = vcmp.ge.f32.partialorder %v994, 0.0
    %vm1437 = vcmp.ge.f32.partialorder %v1052, 0.0
    %vm1438 = vcmp.ge.f32.partialorder %v1110, 0.0
    %vm1439 = vcmp.ge.f32.partialorder %v1168, 0.0
    %vm1440 = vcmp.ge.f32.partialorder %v1226, 0.0
    %vm1441 = vcmp.ge.f32.partialorder %v1284, 0.0
    %vm1442 = vcmp.ge.f32.partialorder %v1342, 0.0
    %vm1443 = vcmp.ge.f32.partialorder %v1400, 0.0
    %vm1444 = vcmp.ge.f32.partialorder %v997, 0.0
    %vm1445 = vcmp.ge.f32.partialorder %v1055, 0.0
    %vm1446 = vcmp.ge.f32.partialorder %v1113, 0.0
    %vm1447 = vcmp.ge.f32.partialorder %v1171, 0.0
    %vm1448 = vcmp.ge.f32.partialorder %v1229, 0.0
    %vm1449 = vcmp.ge.f32.partialorder %v1287, 0.0
    %vm1450 = vcmp.ge.f32.partialorder %v1345, 0.0
    %vm1451 = vcmp.ge.f32.partialorder %v1403, 0.0
    %vm1452 = vcmp.ge.f32.partialorder %v999, 0.0
    %vm1453 = vcmp.ge.f32.partialorder %v1057, 0.0
    %vm1454 = vcmp.ge.f32.partialorder %v1115, 0.0
    %vm1455 = vcmp.ge.f32.partialorder %v1173, 0.0
    %vm1456 = vcmp.ge.f32.partialorder %v1231, 0.0
    %vm1457 = vcmp.ge.f32.partialorder %v1289, 0.0
    %vm1458 = vcmp.ge.f32.partialorder %v1347, 0.0
    %vm1459 = vcmp.ge.f32.partialorder %v1405, 0.0
    %vm1460 = vcmp.ge.f32.partialorder %v1002, 0.0
    %vm1461 = vcmp.ge.f32.partialorder %v1060, 0.0
    %vm1462 = vcmp.ge.f32.partialorder %v1118, 0.0
    %vm1463 = vcmp.ge.f32.partialorder %v1176, 0.0
    %vm1464 = vcmp.ge.f32.partialorder %v1234, 0.0
    %vm1465 = vcmp.ge.f32.partialorder %v1292, 0.0
    %vm1466 = vcmp.ge.f32.partialorder %v1350, 0.0
    %vm1467 = vcmp.ge.f32.partialorder %v1408, 0.0
    %vm1468 = vcmp.ge.f32.partialorder %v1004, 0.0
    %vm1469 = vcmp.ge.f32.partialorder %v1062, 0.0
    %vm1470 = vcmp.ge.f32.partialorder %v1120, 0.0
    %vm1471 = vcmp.ge.f32.partialorder %v1178, 0.0
    %vm1472 = vcmp.ge.f32.partialorder %v1236, 0.0
    %vm1473 = vcmp.ge.f32.partialorder %v1294, 0.0
    %vm1474 = vcmp.ge.f32.partialorder %v1352, 0.0
    %vm1475 = vcmp.ge.f32.partialorder %v1410, 0.0
    %v1476 = vmul.f32 %v987, 0.2
    %v1477 = vmul.f32 %v1045, 0.2
    %v1478 = vmul.f32 %v1103, 0.2
    %v1479 = vmul.f32 %v1161, 0.2
    %v1480 = vmul.f32 %v1219, 0.2
    %v1481 = vmul.f32 %v1277, 0.2
    %v1482 = vmul.f32 %v1335, 0.2
    %v1483 = vmul.f32 %v1393, 0.2
    %v1484 = vmul.f32 %v989, 0.2
    %v1485 = vmul.f32 %v1047, 0.2
    %v1486 = vmul.f32 %v1105, 0.2
    %v1487 = vmul.f32 %v1163, 0.2
    %v1488 = vmul.f32 %v1221, 0.2
    %v1489 = vmul.f32 %v1279, 0.2
    %v1490 = vmul.f32 %v1337, 0.2
    %v1491 = vmul.f32 %v1395, 0.2
    %v1492 = vmul.f32 %v992, 0.2
    %v1493 = vmul.f32 %v1050, 0.2
    %v1494 = vmul.f32 %v1108, 0.2
    %v1495 = vmul.f32 %v1166, 0.2
    %v1496 = vmul.f32 %v1224, 0.2
    %v1497 = vmul.f32 %v1282, 0.2
    %v1498 = vmul.f32 %v1340, 0.2
    %v1499 = vmul.f32 %v1398, 0.2
    %v1500 = vmul.f32 %v994, 0.2
    %v1501 = vmul.f32 %v1052, 0.2
    %v1502 = vmul.f32 %v1110, 0.2
    %v1503 = vmul.f32 %v1168, 0.2
    %v1504 = vmul.f32 %v1226, 0.2
    %v1505 = vmul.f32 %v1284, 0.2
    %v1506 = vmul.f32 %v1342, 0.2
    %v1507 = vmul.f32 %v1400, 0.2
    %v1508 = vmul.f32 %v997, 0.2
    %v1509 = vmul.f32 %v1055, 0.2
    %v1510 = vmul.f32 %v1113, 0.2
    %v1511 = vmul.f32 %v1171, 0.2
    %v1512 = vmul.f32 %v1229, 0.2
    %v1513 = vmul.f32 %v1287, 0.2
    %v1514 = vmul.f32 %v1345, 0.2
    %v1515 = vmul.f32 %v1403, 0.2
    %v1516 = vmul.f32 %v999, 0.2
    %v1517 = vmul.f32 %v1057, 0.2
    %v1518 = vmul.f32 %v1115, 0.2
    %v1519 = vmul.f32 %v1173, 0.2
    %v1520 = vmul.f32 %v1231, 0.2
    %v1521 = vmul.f32 %v1289, 0.2
    %v1522 = vmul.f32 %v1347, 0.2
    %v1523 = vmul.f32 %v1405, 0.2
    %v1524 = vmul.f32 %v1002, 0.2
    %v1525 = vmul.f32 %v1060, 0.2
    %v1526 = vmul.f32 %v1118, 0.2
    %v1527 = vmul.f32 %v1176, 0.2
    %v1528 = vmul.f32 %v1234, 0.2
    %v1529 = vmul.f32 %v1292, 0.2
    %v1530 = vmul.f32 %v1350, 0.2
    %v1531 = vmul.f32 %v1408, 0.2
    %v1532 = vmul.f32 %v1004, 0.2
    %v1533 = vmul.f32 %v1062, 0.2
    %v1534 = vmul.f32 %v1120, 0.2
    %v1535 = vmul.f32 %v1178, 0.2
    %v1536 = vmul.f32 %v1236, 0.2
    %v1537 = vmul.f32 %v1294, 0.2
    %v1538 = vmul.f32 %v1352, 0.2
    %v1539 = vmul.f32 %v1410, 0.2
    %v1540 = vsel %vm1412, %v987, %v1476
    %v1541 = vsel %vm1413, %v1045, %v1477
    %v1542 = vsel %vm1414, %v1103, %v1478
    %v1543 = vsel %vm1415, %v1161, %v1479
    %v1544 = vsel %vm1416, %v1219, %v1480
    %v1545 = vsel %vm1417, %v1277, %v1481
    %v1546 = vsel %vm1418, %v1335, %v1482
    %v1547 = vsel %vm1419, %v1393, %v1483
    %v1548 = vsel %vm1420, %v989, %v1484
    %v1549 = vsel %vm1421, %v1047, %v1485
    %v1550 = vsel %vm1422, %v1105, %v1486
    %v1551 = vsel %vm1423, %v1163, %v1487
    %v1552 = vsel %vm1424, %v1221, %v1488
    %v1553 = vsel %vm1425, %v1279, %v1489
    %v1554 = vsel %vm1426, %v1337, %v1490
    %v1555 = vsel %vm1427, %v1395, %v1491
    %v1556 = vsel %vm1428, %v992, %v1492
    %v1557 = vsel %vm1429, %v1050, %v1493
    %v1558 = vsel %vm1430, %v1108, %v1494
    %v1559 = vsel %vm1431, %v1166, %v1495
    %v1560 = vsel %vm1432, %v1224, %v1496
    %v1561 = vsel %vm1433, %v1282, %v1497
    %v1562 = vsel %vm1434, %v1340, %v1498
    %v1563 = vsel %vm1435, %v1398, %v1499
    %v1564 = vsel %vm1436, %v994, %v1500
    %v1565 = vsel %vm1437, %v1052, %v1501
    %v1566 = vsel %vm1438, %v1110, %v1502
    %v1567 = vsel %vm1439, %v1168, %v1503
    %v1568 = vsel %vm1440, %v1226, %v1504
    %v1569 = vsel %vm1441, %v1284, %v1505
    %v1570 = vsel %vm1442, %v1342, %v1506
    %v1571 = vsel %vm1443, %v1400, %v1507
    %v1572 = vsel %vm1444, %v997, %v1508
    %v1573 = vsel %vm1445, %v1055, %v1509
    %v1574 = vsel %vm1446, %v1113, %v1510
    %v1575 = vsel %vm1447, %v1171, %v1511
    %v1576 = vsel %vm1448, %v1229, %v1512
    %v1577 = vsel %vm1449, %v1287, %v1513
    %v1578 = vsel %vm1450, %v1345, %v1514
    %v1579 = vsel %vm1451, %v1403, %v1515
    %v1580 = vsel %vm1452, %v999, %v1516
    %v1581 = vsel %vm1453, %v1057, %v1517
    %v1582 = vsel %vm1454, %v1115, %v1518
    %v1583 = vsel %vm1455, %v1173, %v1519
    %v1584 = vsel %vm1456, %v1231, %v1520
    %v1585 = vsel %vm1457, %v1289, %v1521
    %v1586 = vsel %vm1458, %v1347, %v1522
    %v1587 = vsel %vm1459, %v1405, %v1523
    %v1588 = vsel %vm1460, %v1002, %v1524
    %v1589 = vsel %vm1461, %v1060, %v1525
    %v1590 = vsel %vm1462, %v1118, %v1526
    %v1591 = vsel %vm1463, %v1176, %v1527
    %v1592 = vsel %vm1464, %v1234, %v1528
    %v1593 = vsel %vm1465, %v1292, %v1529
    %v1594 = vsel %vm1466, %v1350, %v1530
    %v1595 = vsel %vm1467, %v1408, %v1531
    %v1596 = vsel %vm1468, %v1004, %v1532
    %v1597 = vsel %vm1469, %v1062, %v1533
    %v1598 = vsel %vm1470, %v1120, %v1534
    %v1599 = vsel %vm1471, %v1178, %v1535
    %v1600 = vsel %vm1472, %v1236, %v1536
    %v1601 = vsel %vm1473, %v1294, %v1537
    %v1602 = vsel %vm1474, %v1352, %v1538
    %v1603 = vsel %vm1475, %v1410, %v1539
    %v1604 = vlaneseq
    %v1605 = vshrl.u32 %v1604, 7
    %v1606 = vadd.s32 %v1605, 8
    %v1607 = vadd.s32 %v1605, 16
    %v1608 = vadd.s32 %v1605, 24
    %v1609 = vadd.s32 %v1605, 32
    %v1610 = vadd.s32 %v1605, 40
    %v1611 = vadd.s32 %v1605, 48
    %v1612 = vadd.s32 %v1605, 56
    %v1613 = vstv %s112
    %v1614 = vadd.s32 %v1605, %v1613
    %v1615 = vadd.s32 %v1606, %v1613
    %v1616 = vadd.s32 %v1607, %v1613
    %v1617 = vadd.s32 %v1608, %v1613
    %v1618 = vadd.s32 %v1609, %v1613
    %v1619 = vadd.s32 %v1610, %v1613
    %v1620 = vadd.s32 %v1611, %v1613
    %v1621 = vadd.s32 %v1612, %v1613
    %v1622 = vlaneseq
    %v1623 = vand.u32 %v1622, 127
    %v1624 = vadd.s32 %v1623, 128
    %v1625 = vadd.s32 %v1623, 256
    %v1626 = vadd.s32 %v1623, 384
    %v1627 = vadd.s32 %v1623, 512
    %v1628 = vadd.s32 %v1623, 640
    %v1629 = vadd.s32 %v1623, 768
    %v1630 = vadd.s32 %v1623, 896
    %v1631 = vmul.u32 %v1614, 2654435769
    %v1632 = vmul.u32 %v1615, 2654435769
    %v1633 = vmul.u32 %v1616, 2654435769
    %v1634 = vmul.u32 %v1617, 2654435769
    %v1635 = vmul.u32 %v1618, 2654435769
    %v1636 = vmul.u32 %v1619, 2654435769
    %v1637 = vmul.u32 %v1620, 2654435769
    %v1638 = vmul.u32 %v1621, 2654435769
    %s1639 = sadd.s32 %s113, 16777619
    %v1640 = vstv %s1639
    %v1641 = vxor.u32 %v1623, %v1640
    %v1642 = vxor.u32 %v1624, %v1640
    %v1643 = vxor.u32 %v1625, %v1640
    %v1644 = vxor.u32 %v1626, %v1640
    %v1645 = vxor.u32 %v1627, %v1640
    %v1646 = vxor.u32 %v1628, %v1640
    %v1647 = vxor.u32 %v1629, %v1640
    %v1648 = vxor.u32 %v1630, %v1640
    %v1649 = vadd.s32 %v1631, %v1641
    %v1650 = vadd.s32 %v1631, %v1642
    %v1651 = vadd.s32 %v1631, %v1643
    %v1652 = vadd.s32 %v1631, %v1644
    %v1653 = vadd.s32 %v1631, %v1645
    %v1654 = vadd.s32 %v1631, %v1646
    %v1655 = vadd.s32 %v1631, %v1647
    %v1656 = vadd.s32 %v1631, %v1648
    %v1657 = vadd.s32 %v1632, %v1641
    %v1658 = vadd.s32 %v1632, %v1642
    %v1659 = vadd.s32 %v1632, %v1643
    %v1660 = vadd.s32 %v1632, %v1644
    %v1661 = vadd.s32 %v1632, %v1645
    %v1662 = vadd.s32 %v1632, %v1646
    %v1663 = vadd.s32 %v1632, %v1647
    %v1664 = vadd.s32 %v1632, %v1648
    %v1665 = vadd.s32 %v1633, %v1641
    %v1666 = vadd.s32 %v1633, %v1642
    %v1667 = vadd.s32 %v1633, %v1643
    %v1668 = vadd.s32 %v1633, %v1644
    %v1669 = vadd.s32 %v1633, %v1645
    %v1670 = vadd.s32 %v1633, %v1646
    %v1671 = vadd.s32 %v1633, %v1647
    %v1672 = vadd.s32 %v1633, %v1648
    %v1673 = vadd.s32 %v1634, %v1641
    %v1674 = vadd.s32 %v1634, %v1642
    %v1675 = vadd.s32 %v1634, %v1643
    %v1676 = vadd.s32 %v1634, %v1644
    %v1677 = vadd.s32 %v1634, %v1645
    %v1678 = vadd.s32 %v1634, %v1646
    %v1679 = vadd.s32 %v1634, %v1647
    %v1680 = vadd.s32 %v1634, %v1648
    %v1681 = vadd.s32 %v1635, %v1641
    %v1682 = vadd.s32 %v1635, %v1642
    %v1683 = vadd.s32 %v1635, %v1643
    %v1684 = vadd.s32 %v1635, %v1644
    %v1685 = vadd.s32 %v1635, %v1645
    %v1686 = vadd.s32 %v1635, %v1646
    %v1687 = vadd.s32 %v1635, %v1647
    %v1688 = vadd.s32 %v1635, %v1648
    %v1689 = vadd.s32 %v1636, %v1641
    %v1690 = vadd.s32 %v1636, %v1642
    %v1691 = vadd.s32 %v1636, %v1643
    %v1692 = vadd.s32 %v1636, %v1644
    %v1693 = vadd.s32 %v1636, %v1645
    %v1694 = vadd.s32 %v1636, %v1646
    %v1695 = vadd.s32 %v1636, %v1647
    %v1696 = vadd.s32 %v1636, %v1648
    %v1697 = vadd.s32 %v1637, %v1641
    %v1698 = vadd.s32 %v1637, %v1642
    %v1699 = vadd.s32 %v1637, %v1643
    %v1700 = vadd.s32 %v1637, %v1644
    %v1701 = vadd.s32 %v1637, %v1645
    %v1702 = vadd.s32 %v1637, %v1646
    %v1703 = vadd.s32 %v1637, %v1647
    %v1704 = vadd.s32 %v1637, %v1648
    %v1705 = vadd.s32 %v1638, %v1641
    %v1706 = vadd.s32 %v1638, %v1642
    %v1707 = vadd.s32 %v1638, %v1643
    %v1708 = vadd.s32 %v1638, %v1644
    %v1709 = vadd.s32 %v1638, %v1645
    %v1710 = vadd.s32 %v1638, %v1646
    %v1711 = vadd.s32 %v1638, %v1647
    %v1712 = vadd.s32 %v1638, %v1648
    %v1713 = vshrl.u32 %v1649, 16
    %v1714 = vshrl.u32 %v1650, 16
    %v1715 = vshrl.u32 %v1651, 16
    %v1716 = vshrl.u32 %v1652, 16
    %v1717 = vshrl.u32 %v1653, 16
    %v1718 = vshrl.u32 %v1654, 16
    %v1719 = vshrl.u32 %v1655, 16
    %v1720 = vshrl.u32 %v1656, 16
    %v1721 = vshrl.u32 %v1657, 16
    %v1722 = vshrl.u32 %v1658, 16
    %v1723 = vshrl.u32 %v1659, 16
    %v1724 = vshrl.u32 %v1660, 16
    %v1725 = vshrl.u32 %v1661, 16
    %v1726 = vshrl.u32 %v1662, 16
    %v1727 = vshrl.u32 %v1663, 16
    %v1728 = vshrl.u32 %v1664, 16
    %v1729 = vshrl.u32 %v1665, 16
    %v1730 = vshrl.u32 %v1666, 16
    %v1731 = vshrl.u32 %v1667, 16
    %v1732 = vshrl.u32 %v1668, 16
    %v1733 = vshrl.u32 %v1669, 16
    %v1734 = vshrl.u32 %v1670, 16
    %v1735 = vshrl.u32 %v1671, 16
    %v1736 = vshrl.u32 %v1672, 16
    %v1737 = vshrl.u32 %v1673, 16
    %v1738 = vshrl.u32 %v1674, 16
    %v1739 = vshrl.u32 %v1675, 16
    %v1740 = vshrl.u32 %v1676, 16
    %v1741 = vshrl.u32 %v1677, 16
    %v1742 = vshrl.u32 %v1678, 16
    %v1743 = vshrl.u32 %v1679, 16
    %v1744 = vshrl.u32 %v1680, 16
    %v1745 = vshrl.u32 %v1681, 16
    %v1746 = vshrl.u32 %v1682, 16
    %v1747 = vshrl.u32 %v1683, 16
    %v1748 = vshrl.u32 %v1684, 16
    %v1749 = vshrl.u32 %v1685, 16
    %v1750 = vshrl.u32 %v1686, 16
    %v1751 = vshrl.u32 %v1687, 16
    %v1752 = vshrl.u32 %v1688, 16
    %v1753 = vshrl.u32 %v1689, 16
    %v1754 = vshrl.u32 %v1690, 16
    %v1755 = vshrl.u32 %v1691, 16
    %v1756 = vshrl.u32 %v1692, 16
    %v1757 = vshrl.u32 %v1693, 16
    %v1758 = vshrl.u32 %v1694, 16
    %v1759 = vshrl.u32 %v1695, 16
    %v1760 = vshrl.u32 %v1696, 16
    %v1761 = vshrl.u32 %v1697, 16
    %v1762 = vshrl.u32 %v1698, 16
    %v1763 = vshrl.u32 %v1699, 16
    %v1764 = vshrl.u32 %v1700, 16
    %v1765 = vshrl.u32 %v1701, 16
    %v1766 = vshrl.u32 %v1702, 16
    %v1767 = vshrl.u32 %v1703, 16
    %v1768 = vshrl.u32 %v1704, 16
    %v1769 = vshrl.u32 %v1705, 16
    %v1770 = vshrl.u32 %v1706, 16
    %v1771 = vshrl.u32 %v1707, 16
    %v1772 = vshrl.u32 %v1708, 16
    %v1773 = vshrl.u32 %v1709, 16
    %v1774 = vshrl.u32 %v1710, 16
    %v1775 = vshrl.u32 %v1711, 16
    %v1776 = vshrl.u32 %v1712, 16
    %v1777 = vxor.u32 %v1649, %v1713
    %v1778 = vxor.u32 %v1650, %v1714
    %v1779 = vxor.u32 %v1651, %v1715
    %v1780 = vxor.u32 %v1652, %v1716
    %v1781 = vxor.u32 %v1653, %v1717
    %v1782 = vxor.u32 %v1654, %v1718
    %v1783 = vxor.u32 %v1655, %v1719
    %v1784 = vxor.u32 %v1656, %v1720
    %v1785 = vxor.u32 %v1657, %v1721
    %v1786 = vxor.u32 %v1658, %v1722
    %v1787 = vxor.u32 %v1659, %v1723
    %v1788 = vxor.u32 %v1660, %v1724
    %v1789 = vxor.u32 %v1661, %v1725
    %v1790 = vxor.u32 %v1662, %v1726
    %v1791 = vxor.u32 %v1663, %v1727
    %v1792 = vxor.u32 %v1664, %v1728
    %v1793 = vxor.u32 %v1665, %v1729
    %v1794 = vxor.u32 %v1666, %v1730
    %v1795 = vxor.u32 %v1667, %v1731
    %v1796 = vxor.u32 %v1668, %v1732
    %v1797 = vxor.u32 %v1669, %v1733
    %v1798 = vxor.u32 %v1670, %v1734
    %v1799 = vxor.u32 %v1671, %v1735
    %v1800 = vxor.u32 %v1672, %v1736
    %v1801 = vxor.u32 %v1673, %v1737
    %v1802 = vxor.u32 %v1674, %v1738
    %v1803 = vxor.u32 %v1675, %v1739
    %v1804 = vxor.u32 %v1676, %v1740
    %v1805 = vxor.u32 %v1677, %v1741
    %v1806 = vxor.u32 %v1678, %v1742
    %v1807 = vxor.u32 %v1679, %v1743
    %v1808 = vxor.u32 %v1680, %v1744
    %v1809 = vxor.u32 %v1681, %v1745
    %v1810 = vxor.u32 %v1682, %v1746
    %v1811 = vxor.u32 %v1683, %v1747
    %v1812 = vxor.u32 %v1684, %v1748
    %v1813 = vxor.u32 %v1685, %v1749
    %v1814 = vxor.u32 %v1686, %v1750
    %v1815 = vxor.u32 %v1687, %v1751
    %v1816 = vxor.u32 %v1688, %v1752
    %v1817 = vxor.u32 %v1689, %v1753
    %v1818 = vxor.u32 %v1690, %v1754
    %v1819 = vxor.u32 %v1691, %v1755
    %v1820 = vxor.u32 %v1692, %v1756
    %v1821 = vxor.u32 %v1693, %v1757
    %v1822 = vxor.u32 %v1694, %v1758
    %v1823 = vxor.u32 %v1695, %v1759
    %v1824 = vxor.u32 %v1696, %v1760
    %v1825 = vxor.u32 %v1697, %v1761
    %v1826 = vxor.u32 %v1698, %v1762
    %v1827 = vxor.u32 %v1699, %v1763
    %v1828 = vxor.u32 %v1700, %v1764
    %v1829 = vxor.u32 %v1701, %v1765
    %v1830 = vxor.u32 %v1702, %v1766
    %v1831 = vxor.u32 %v1703, %v1767
    %v1832 = vxor.u32 %v1704, %v1768
    %v1833 = vxor.u32 %v1705, %v1769
    %v1834 = vxor.u32 %v1706, %v1770
    %v1835 = vxor.u32 %v1707, %v1771
    %v1836 = vxor.u32 %v1708, %v1772
    %v1837 = vxor.u32 %v1709, %v1773
    %v1838 = vxor.u32 %v1710, %v1774
    %v1839 = vxor.u32 %v1711, %v1775
    %v1840 = vxor.u32 %v1712, %v1776
    %v1841 = vmul.u32 %v1777, 2146121005
    %v1842 = vmul.u32 %v1778, 2146121005
    %v1843 = vmul.u32 %v1779, 2146121005
    %v1844 = vmul.u32 %v1780, 2146121005
    %v1845 = vmul.u32 %v1781, 2146121005
    %v1846 = vmul.u32 %v1782, 2146121005
    %v1847 = vmul.u32 %v1783, 2146121005
    %v1848 = vmul.u32 %v1784, 2146121005
    %v1849 = vmul.u32 %v1785, 2146121005
    %v1850 = vmul.u32 %v1786, 2146121005
    %v1851 = vmul.u32 %v1787, 2146121005
    %v1852 = vmul.u32 %v1788, 2146121005
    %v1853 = vmul.u32 %v1789, 2146121005
    %v1854 = vmul.u32 %v1790, 2146121005
    %v1855 = vmul.u32 %v1791, 2146121005
    %v1856 = vmul.u32 %v1792, 2146121005
    %v1857 = vmul.u32 %v1793, 2146121005
    %v1858 = vmul.u32 %v1794, 2146121005
    %v1859 = vmul.u32 %v1795, 2146121005
    %v1860 = vmul.u32 %v1796, 2146121005
    %v1861 = vmul.u32 %v1797, 2146121005
    %v1862 = vmul.u32 %v1798, 2146121005
    %v1863 = vmul.u32 %v1799, 2146121005
    %v1864 = vmul.u32 %v1800, 2146121005
    %v1865 = vmul.u32 %v1801, 2146121005
    %v1866 = vmul.u32 %v1802, 2146121005
    %v1867 = vmul.u32 %v1803, 2146121005
    %v1868 = vmul.u32 %v1804, 2146121005
    %v1869 = vmul.u32 %v1805, 2146121005
    %v1870 = vmul.u32 %v1806, 2146121005
    %v1871 = vmul.u32 %v1807, 2146121005
    %v1872 = vmul.u32 %v1808, 2146121005
    %v1873 = vmul.u32 %v1809, 2146121005
    %v1874 = vmul.u32 %v1810, 2146121005
    %v1875 = vmul.u32 %v1811, 2146121005
    %v1876 = vmul.u32 %v1812, 2146121005
    %v1877 = vmul.u32 %v1813, 2146121005
    %v1878 = vmul.u32 %v1814, 2146121005
    %v1879 = vmul.u32 %v1815, 2146121005
    %v1880 = vmul.u32 %v1816, 2146121005
    %v1881 = vmul.u32 %v1817, 2146121005
    %v1882 = vmul.u32 %v1818, 2146121005
    %v1883 = vmul.u32 %v1819, 2146121005
    %v1884 = vmul.u32 %v1820, 2146121005
    %v1885 = vmul.u32 %v1821, 2146121005
    %v1886 = vmul.u32 %v1822, 2146121005
    %v1887 = vmul.u32 %v1823, 2146121005
    %v1888 = vmul.u32 %v1824, 2146121005
    %v1889 = vmul.u32 %v1825, 2146121005
    %v1890 = vmul.u32 %v1826, 2146121005
    %v1891 = vmul.u32 %v1827, 2146121005
    %v1892 = vmul.u32 %v1828, 2146121005
    %v1893 = vmul.u32 %v1829, 2146121005
    %v1894 = vmul.u32 %v1830, 2146121005
    %v1895 = vmul.u32 %v1831, 2146121005
    %v1896 = vmul.u32 %v1832, 2146121005
    %v1897 = vmul.u32 %v1833, 2146121005
    %v1898 = vmul.u32 %v1834, 2146121005
    %v1899 = vmul.u32 %v1835, 2146121005
    %v1900 = vmul.u32 %v1836, 2146121005
    %v1901 = vmul.u32 %v1837, 2146121005
    %v1902 = vmul.u32 %v1838, 2146121005
    %v1903 = vmul.u32 %v1839, 2146121005
    %v1904 = vmul.u32 %v1840, 2146121005
    %v1905 = vshrl.u32 %v1841, 15
    %v1906 = vshrl.u32 %v1842, 15
    %v1907 = vshrl.u32 %v1843, 15
    %v1908 = vshrl.u32 %v1844, 15
    %v1909 = vshrl.u32 %v1845, 15
    %v1910 = vshrl.u32 %v1846, 15
    %v1911 = vshrl.u32 %v1847, 15
    %v1912 = vshrl.u32 %v1848, 15
    %v1913 = vshrl.u32 %v1849, 15
    %v1914 = vshrl.u32 %v1850, 15
    %v1915 = vshrl.u32 %v1851, 15
    %v1916 = vshrl.u32 %v1852, 15
    %v1917 = vshrl.u32 %v1853, 15
    %v1918 = vshrl.u32 %v1854, 15
    %v1919 = vshrl.u32 %v1855, 15
    %v1920 = vshrl.u32 %v1856, 15
    %v1921 = vshrl.u32 %v1857, 15
    %v1922 = vshrl.u32 %v1858, 15
    %v1923 = vshrl.u32 %v1859, 15
    %v1924 = vshrl.u32 %v1860, 15
    %v1925 = vshrl.u32 %v1861, 15
    %v1926 = vshrl.u32 %v1862, 15
    %v1927 = vshrl.u32 %v1863, 15
    %v1928 = vshrl.u32 %v1864, 15
    %v1929 = vshrl.u32 %v1865, 15
    %v1930 = vshrl.u32 %v1866, 15
    %v1931 = vshrl.u32 %v1867, 15
    %v1932 = vshrl.u32 %v1868, 15
    %v1933 = vshrl.u32 %v1869, 15
    %v1934 = vshrl.u32 %v1870, 15
    %v1935 = vshrl.u32 %v1871, 15
    %v1936 = vshrl.u32 %v1872, 15
    %v1937 = vshrl.u32 %v1873, 15
    %v1938 = vshrl.u32 %v1874, 15
    %v1939 = vshrl.u32 %v1875, 15
    %v1940 = vshrl.u32 %v1876, 15
    %v1941 = vshrl.u32 %v1877, 15
    %v1942 = vshrl.u32 %v1878, 15
    %v1943 = vshrl.u32 %v1879, 15
    %v1944 = vshrl.u32 %v1880, 15
    %v1945 = vshrl.u32 %v1881, 15
    %v1946 = vshrl.u32 %v1882, 15
    %v1947 = vshrl.u32 %v1883, 15
    %v1948 = vshrl.u32 %v1884, 15
    %v1949 = vshrl.u32 %v1885, 15
    %v1950 = vshrl.u32 %v1886, 15
    %v1951 = vshrl.u32 %v1887, 15
    %v1952 = vshrl.u32 %v1888, 15
    %v1953 = vshrl.u32 %v1889, 15
    %v1954 = vshrl.u32 %v1890, 15
    %v1955 = vshrl.u32 %v1891, 15
    %v1956 = vshrl.u32 %v1892, 15
    %v1957 = vshrl.u32 %v1893, 15
    %v1958 = vshrl.u32 %v1894, 15
    %v1959 = vshrl.u32 %v1895, 15
    %v1960 = vshrl.u32 %v1896, 15
    %v1961 = vshrl.u32 %v1897, 15
    %v1962 = vshrl.u32 %v1898, 15
    %v1963 = vshrl.u32 %v1899, 15
    %v1964 = vshrl.u32 %v1900, 15
    %v1965 = vshrl.u32 %v1901, 15
    %v1966 = vshrl.u32 %v1902, 15
    %v1967 = vshrl.u32 %v1903, 15
    %v1968 = vshrl.u32 %v1904, 15
    %v1969 = vxor.u32 %v1841, %v1905
    %v1970 = vxor.u32 %v1842, %v1906
    %v1971 = vxor.u32 %v1843, %v1907
    %v1972 = vxor.u32 %v1844, %v1908
    %v1973 = vxor.u32 %v1845, %v1909
    %v1974 = vxor.u32 %v1846, %v1910
    %v1975 = vxor.u32 %v1847, %v1911
    %v1976 = vxor.u32 %v1848, %v1912
    %v1977 = vxor.u32 %v1849, %v1913
    %v1978 = vxor.u32 %v1850, %v1914
    %v1979 = vxor.u32 %v1851, %v1915
    %v1980 = vxor.u32 %v1852, %v1916
    %v1981 = vxor.u32 %v1853, %v1917
    %v1982 = vxor.u32 %v1854, %v1918
    %v1983 = vxor.u32 %v1855, %v1919
    %v1984 = vxor.u32 %v1856, %v1920
    %v1985 = vxor.u32 %v1857, %v1921
    %v1986 = vxor.u32 %v1858, %v1922
    %v1987 = vxor.u32 %v1859, %v1923
    %v1988 = vxor.u32 %v1860, %v1924
    %v1989 = vxor.u32 %v1861, %v1925
    %v1990 = vxor.u32 %v1862, %v1926
    %v1991 = vxor.u32 %v1863, %v1927
    %v1992 = vxor.u32 %v1864, %v1928
    %v1993 = vxor.u32 %v1865, %v1929
    %v1994 = vxor.u32 %v1866, %v1930
    %v1995 = vxor.u32 %v1867, %v1931
    %v1996 = vxor.u32 %v1868, %v1932
    %v1997 = vxor.u32 %v1869, %v1933
    %v1998 = vxor.u32 %v1870, %v1934
    %v1999 = vxor.u32 %v1871, %v1935
    %v2000 = vxor.u32 %v1872, %v1936
    %v2001 = vxor.u32 %v1873, %v1937
    %v2002 = vxor.u32 %v1874, %v1938
    %v2003 = vxor.u32 %v1875, %v1939
    %v2004 = vxor.u32 %v1876, %v1940
    %v2005 = vxor.u32 %v1877, %v1941
    %v2006 = vxor.u32 %v1878, %v1942
    %v2007 = vxor.u32 %v1879, %v1943
    %v2008 = vxor.u32 %v1880, %v1944
    %v2009 = vxor.u32 %v1881, %v1945
    %v2010 = vxor.u32 %v1882, %v1946
    %v2011 = vxor.u32 %v1883, %v1947
    %v2012 = vxor.u32 %v1884, %v1948
    %v2013 = vxor.u32 %v1885, %v1949
    %v2014 = vxor.u32 %v1886, %v1950
    %v2015 = vxor.u32 %v1887, %v1951
    %v2016 = vxor.u32 %v1888, %v1952
    %v2017 = vxor.u32 %v1889, %v1953
    %v2018 = vxor.u32 %v1890, %v1954
    %v2019 = vxor.u32 %v1891, %v1955
    %v2020 = vxor.u32 %v1892, %v1956
    %v2021 = vxor.u32 %v1893, %v1957
    %v2022 = vxor.u32 %v1894, %v1958
    %v2023 = vxor.u32 %v1895, %v1959
    %v2024 = vxor.u32 %v1896, %v1960
    %v2025 = vxor.u32 %v1897, %v1961
    %v2026 = vxor.u32 %v1898, %v1962
    %v2027 = vxor.u32 %v1899, %v1963
    %v2028 = vxor.u32 %v1900, %v1964
    %v2029 = vxor.u32 %v1901, %v1965
    %v2030 = vxor.u32 %v1902, %v1966
    %v2031 = vxor.u32 %v1903, %v1967
    %v2032 = vxor.u32 %v1904, %v1968
    %v2033 = vmul.u32 %v1969, 2221713035
    %v2034 = vmul.u32 %v1970, 2221713035
    %v2035 = vmul.u32 %v1971, 2221713035
    %v2036 = vmul.u32 %v1972, 2221713035
    %v2037 = vmul.u32 %v1973, 2221713035
    %v2038 = vmul.u32 %v1974, 2221713035
    %v2039 = vmul.u32 %v1975, 2221713035
    %v2040 = vmul.u32 %v1976, 2221713035
    %v2041 = vmul.u32 %v1977, 2221713035
    %v2042 = vmul.u32 %v1978, 2221713035
    %v2043 = vmul.u32 %v1979, 2221713035
    %v2044 = vmul.u32 %v1980, 2221713035
    %v2045 = vmul.u32 %v1981, 2221713035
    %v2046 = vmul.u32 %v1982, 2221713035
    %v2047 = vmul.u32 %v1983, 2221713035
    %v2048 = vmul.u32 %v1984, 2221713035
    %v2049 = vmul.u32 %v1985, 2221713035
    %v2050 = vmul.u32 %v1986, 2221713035
    %v2051 = vmul.u32 %v1987, 2221713035
    %v2052 = vmul.u32 %v1988, 2221713035
    %v2053 = vmul.u32 %v1989, 2221713035
    %v2054 = vmul.u32 %v1990, 2221713035
    %v2055 = vmul.u32 %v1991, 2221713035
    %v2056 = vmul.u32 %v1992, 2221713035
    %v2057 = vmul.u32 %v1993, 2221713035
    %v2058 = vmul.u32 %v1994, 2221713035
    %v2059 = vmul.u32 %v1995, 2221713035
    %v2060 = vmul.u32 %v1996, 2221713035
    %v2061 = vmul.u32 %v1997, 2221713035
    %v2062 = vmul.u32 %v1998, 2221713035
    %v2063 = vmul.u32 %v1999, 2221713035
    %v2064 = vmul.u32 %v2000, 2221713035
    %v2065 = vmul.u32 %v2001, 2221713035
    %v2066 = vmul.u32 %v2002, 2221713035
    %v2067 = vmul.u32 %v2003, 2221713035
    %v2068 = vmul.u32 %v2004, 2221713035
    %v2069 = vmul.u32 %v2005, 2221713035
    %v2070 = vmul.u32 %v2006, 2221713035
    %v2071 = vmul.u32 %v2007, 2221713035
    %v2072 = vmul.u32 %v2008, 2221713035
    %v2073 = vmul.u32 %v2009, 2221713035
    %v2074 = vmul.u32 %v2010, 2221713035
    %v2075 = vmul.u32 %v2011, 2221713035
    %v2076 = vmul.u32 %v2012, 2221713035
    %v2077 = vmul.u32 %v2013, 2221713035
    %v2078 = vmul.u32 %v2014, 2221713035
    %v2079 = vmul.u32 %v2015, 2221713035
    %v2080 = vmul.u32 %v2016, 2221713035
    %v2081 = vmul.u32 %v2017, 2221713035
    %v2082 = vmul.u32 %v2018, 2221713035
    %v2083 = vmul.u32 %v2019, 2221713035
    %v2084 = vmul.u32 %v2020, 2221713035
    %v2085 = vmul.u32 %v2021, 2221713035
    %v2086 = vmul.u32 %v2022, 2221713035
    %v2087 = vmul.u32 %v2023, 2221713035
    %v2088 = vmul.u32 %v2024, 2221713035
    %v2089 = vmul.u32 %v2025, 2221713035
    %v2090 = vmul.u32 %v2026, 2221713035
    %v2091 = vmul.u32 %v2027, 2221713035
    %v2092 = vmul.u32 %v2028, 2221713035
    %v2093 = vmul.u32 %v2029, 2221713035
    %v2094 = vmul.u32 %v2030, 2221713035
    %v2095 = vmul.u32 %v2031, 2221713035
    %v2096 = vmul.u32 %v2032, 2221713035
    %v2097 = vshrl.u32 %v2033, 16
    %v2098 = vshrl.u32 %v2034, 16
    %v2099 = vshrl.u32 %v2035, 16
    %v2100 = vshrl.u32 %v2036, 16
    %v2101 = vshrl.u32 %v2037, 16
    %v2102 = vshrl.u32 %v2038, 16
    %v2103 = vshrl.u32 %v2039, 16
    %v2104 = vshrl.u32 %v2040, 16
    %v2105 = vshrl.u32 %v2041, 16
    %v2106 = vshrl.u32 %v2042, 16
    %v2107 = vshrl.u32 %v2043, 16
    %v2108 = vshrl.u32 %v2044, 16
    %v2109 = vshrl.u32 %v2045, 16
    %v2110 = vshrl.u32 %v2046, 16
    %v2111 = vshrl.u32 %v2047, 16
    %v2112 = vshrl.u32 %v2048, 16
    %v2113 = vshrl.u32 %v2049, 16
    %v2114 = vshrl.u32 %v2050, 16
    %v2115 = vshrl.u32 %v2051, 16
    %v2116 = vshrl.u32 %v2052, 16
    %v2117 = vshrl.u32 %v2053, 16
    %v2118 = vshrl.u32 %v2054, 16
    %v2119 = vshrl.u32 %v2055, 16
    %v2120 = vshrl.u32 %v2056, 16
    %v2121 = vshrl.u32 %v2057, 16
    %v2122 = vshrl.u32 %v2058, 16
    %v2123 = vshrl.u32 %v2059, 16
    %v2124 = vshrl.u32 %v2060, 16
    %v2125 = vshrl.u32 %v2061, 16
    %v2126 = vshrl.u32 %v2062, 16
    %v2127 = vshrl.u32 %v2063, 16
    %v2128 = vshrl.u32 %v2064, 16
    %v2129 = vshrl.u32 %v2065, 16
    %v2130 = vshrl.u32 %v2066, 16
    %v2131 = vshrl.u32 %v2067, 16
    %v2132 = vshrl.u32 %v2068, 16
    %v2133 = vshrl.u32 %v2069, 16
    %v2134 = vshrl.u32 %v2070, 16
    %v2135 = vshrl.u32 %v2071, 16
    %v2136 = vshrl.u32 %v2072, 16
    %v2137 = vshrl.u32 %v2073, 16
    %v2138 = vshrl.u32 %v2074, 16
    %v2139 = vshrl.u32 %v2075, 16
    %v2140 = vshrl.u32 %v2076, 16
    %v2141 = vshrl.u32 %v2077, 16
    %v2142 = vshrl.u32 %v2078, 16
    %v2143 = vshrl.u32 %v2079, 16
    %v2144 = vshrl.u32 %v2080, 16
    %v2145 = vshrl.u32 %v2081, 16
    %v2146 = vshrl.u32 %v2082, 16
    %v2147 = vshrl.u32 %v2083, 16
    %v2148 = vshrl.u32 %v2084, 16
    %v2149 = vshrl.u32 %v2085, 16
    %v2150 = vshrl.u32 %v2086, 16
    %v2151 = vshrl.u32 %v2087, 16
    %v2152 = vshrl.u32 %v2088, 16
    %v2153 = vshrl.u32 %v2089, 16
    %v2154 = vshrl.u32 %v2090, 16
    %v2155 = vshrl.u32 %v2091, 16
    %v2156 = vshrl.u32 %v2092, 16
    %v2157 = vshrl.u32 %v2093, 16
    %v2158 = vshrl.u32 %v2094, 16
    %v2159 = vshrl.u32 %v2095, 16
    %v2160 = vshrl.u32 %v2096, 16
    %v2161 = vxor.u32 %v2033, %v2097
    %v2162 = vxor.u32 %v2034, %v2098
    %v2163 = vxor.u32 %v2035, %v2099
    %v2164 = vxor.u32 %v2036, %v2100
    %v2165 = vxor.u32 %v2037, %v2101
    %v2166 = vxor.u32 %v2038, %v2102
    %v2167 = vxor.u32 %v2039, %v2103
    %v2168 = vxor.u32 %v2040, %v2104
    %v2169 = vxor.u32 %v2041, %v2105
    %v2170 = vxor.u32 %v2042, %v2106
    %v2171 = vxor.u32 %v2043, %v2107
    %v2172 = vxor.u32 %v2044, %v2108
    %v2173 = vxor.u32 %v2045, %v2109
    %v2174 = vxor.u32 %v2046, %v2110
    %v2175 = vxor.u32 %v2047, %v2111
    %v2176 = vxor.u32 %v2048, %v2112
    %v2177 = vxor.u32 %v2049, %v2113
    %v2178 = vxor.u32 %v2050, %v2114
    %v2179 = vxor.u32 %v2051, %v2115
    %v2180 = vxor.u32 %v2052, %v2116
    %v2181 = vxor.u32 %v2053, %v2117
    %v2182 = vxor.u32 %v2054, %v2118
    %v2183 = vxor.u32 %v2055, %v2119
    %v2184 = vxor.u32 %v2056, %v2120
    %v2185 = vxor.u32 %v2057, %v2121
    %v2186 = vxor.u32 %v2058, %v2122
    %v2187 = vxor.u32 %v2059, %v2123
    %v2188 = vxor.u32 %v2060, %v2124
    %v2189 = vxor.u32 %v2061, %v2125
    %v2190 = vxor.u32 %v2062, %v2126
    %v2191 = vxor.u32 %v2063, %v2127
    %v2192 = vxor.u32 %v2064, %v2128
    %v2193 = vxor.u32 %v2065, %v2129
    %v2194 = vxor.u32 %v2066, %v2130
    %v2195 = vxor.u32 %v2067, %v2131
    %v2196 = vxor.u32 %v2068, %v2132
    %v2197 = vxor.u32 %v2069, %v2133
    %v2198 = vxor.u32 %v2070, %v2134
    %v2199 = vxor.u32 %v2071, %v2135
    %v2200 = vxor.u32 %v2072, %v2136
    %v2201 = vxor.u32 %v2073, %v2137
    %v2202 = vxor.u32 %v2074, %v2138
    %v2203 = vxor.u32 %v2075, %v2139
    %v2204 = vxor.u32 %v2076, %v2140
    %v2205 = vxor.u32 %v2077, %v2141
    %v2206 = vxor.u32 %v2078, %v2142
    %v2207 = vxor.u32 %v2079, %v2143
    %v2208 = vxor.u32 %v2080, %v2144
    %v2209 = vxor.u32 %v2081, %v2145
    %v2210 = vxor.u32 %v2082, %v2146
    %v2211 = vxor.u32 %v2083, %v2147
    %v2212 = vxor.u32 %v2084, %v2148
    %v2213 = vxor.u32 %v2085, %v2149
    %v2214 = vxor.u32 %v2086, %v2150
    %v2215 = vxor.u32 %v2087, %v2151
    %v2216 = vxor.u32 %v2088, %v2152
    %v2217 = vxor.u32 %v2089, %v2153
    %v2218 = vxor.u32 %v2090, %v2154
    %v2219 = vxor.u32 %v2091, %v2155
    %v2220 = vxor.u32 %v2092, %v2156
    %v2221 = vxor.u32 %v2093, %v2157
    %v2222 = vxor.u32 %v2094, %v2158
    %v2223 = vxor.u32 %v2095, %v2159
    %v2224 = vxor.u32 %v2096, %v2160
    %v2225 = vadd.s32 %v2161, 2147483648
    %vm2227 = vcmp.ge.s32.totalorder %v2225, 3435973837
    %v2228 = vadd.s32 %v2162, 2147483648
    %vm2230 = vcmp.ge.s32.totalorder %v2228, 3435973837
    %v2231 = vadd.s32 %v2163, 2147483648
    %vm2233 = vcmp.ge.s32.totalorder %v2231, 3435973837
    %v2234 = vadd.s32 %v2164, 2147483648
    %vm2236 = vcmp.ge.s32.totalorder %v2234, 3435973837
    %v2237 = vadd.s32 %v2165, 2147483648
    %vm2239 = vcmp.ge.s32.totalorder %v2237, 3435973837
    %v2240 = vadd.s32 %v2166, 2147483648
    %vm2242 = vcmp.ge.s32.totalorder %v2240, 3435973837
    %v2243 = vadd.s32 %v2167, 2147483648
    %vm2245 = vcmp.ge.s32.totalorder %v2243, 3435973837
    %v2246 = vadd.s32 %v2168, 2147483648
    %vm2248 = vcmp.ge.s32.totalorder %v2246, 3435973837
    %v2249 = vadd.s32 %v2169, 2147483648
    %vm2251 = vcmp.ge.s32.totalorder %v2249, 3435973837
    %v2252 = vadd.s32 %v2170, 2147483648
    %vm2254 = vcmp.ge.s32.totalorder %v2252, 3435973837
    %v2255 = vadd.s32 %v2171, 2147483648
    %vm2257 = vcmp.ge.s32.totalorder %v2255, 3435973837
    %v2258 = vadd.s32 %v2172, 2147483648
    %vm2260 = vcmp.ge.s32.totalorder %v2258, 3435973837
    %v2261 = vadd.s32 %v2173, 2147483648
    %vm2263 = vcmp.ge.s32.totalorder %v2261, 3435973837
    %v2264 = vadd.s32 %v2174, 2147483648
    %vm2266 = vcmp.ge.s32.totalorder %v2264, 3435973837
    %v2267 = vadd.s32 %v2175, 2147483648
    %vm2269 = vcmp.ge.s32.totalorder %v2267, 3435973837
    %v2270 = vadd.s32 %v2176, 2147483648
    %vm2272 = vcmp.ge.s32.totalorder %v2270, 3435973837
    %v2273 = vadd.s32 %v2177, 2147483648
    %vm2275 = vcmp.ge.s32.totalorder %v2273, 3435973837
    %v2276 = vadd.s32 %v2178, 2147483648
    %vm2278 = vcmp.ge.s32.totalorder %v2276, 3435973837
    %v2279 = vadd.s32 %v2179, 2147483648
    %vm2281 = vcmp.ge.s32.totalorder %v2279, 3435973837
    %v2282 = vadd.s32 %v2180, 2147483648
    %vm2284 = vcmp.ge.s32.totalorder %v2282, 3435973837
    %v2285 = vadd.s32 %v2181, 2147483648
    %vm2287 = vcmp.ge.s32.totalorder %v2285, 3435973837
    %v2288 = vadd.s32 %v2182, 2147483648
    %vm2290 = vcmp.ge.s32.totalorder %v2288, 3435973837
    %v2291 = vadd.s32 %v2183, 2147483648
    %vm2293 = vcmp.ge.s32.totalorder %v2291, 3435973837
    %v2294 = vadd.s32 %v2184, 2147483648
    %vm2296 = vcmp.ge.s32.totalorder %v2294, 3435973837
    %v2297 = vadd.s32 %v2185, 2147483648
    %vm2299 = vcmp.ge.s32.totalorder %v2297, 3435973837
    %v2300 = vadd.s32 %v2186, 2147483648
    %vm2302 = vcmp.ge.s32.totalorder %v2300, 3435973837
    %v2303 = vadd.s32 %v2187, 2147483648
    %vm2305 = vcmp.ge.s32.totalorder %v2303, 3435973837
    %v2306 = vadd.s32 %v2188, 2147483648
    %vm2308 = vcmp.ge.s32.totalorder %v2306, 3435973837
    %v2309 = vadd.s32 %v2189, 2147483648
    %vm2311 = vcmp.ge.s32.totalorder %v2309, 3435973837
    %v2312 = vadd.s32 %v2190, 2147483648
    %vm2314 = vcmp.ge.s32.totalorder %v2312, 3435973837
    %v2315 = vadd.s32 %v2191, 2147483648
    %vm2317 = vcmp.ge.s32.totalorder %v2315, 3435973837
    %v2318 = vadd.s32 %v2192, 2147483648
    %vm2320 = vcmp.ge.s32.totalorder %v2318, 3435973837
    %v2321 = vadd.s32 %v2193, 2147483648
    %vm2323 = vcmp.ge.s32.totalorder %v2321, 3435973837
    %v2324 = vadd.s32 %v2194, 2147483648
    %vm2326 = vcmp.ge.s32.totalorder %v2324, 3435973837
    %v2327 = vadd.s32 %v2195, 2147483648
    %vm2329 = vcmp.ge.s32.totalorder %v2327, 3435973837
    %v2330 = vadd.s32 %v2196, 2147483648
    %vm2332 = vcmp.ge.s32.totalorder %v2330, 3435973837
    %v2333 = vadd.s32 %v2197, 2147483648
    %vm2335 = vcmp.ge.s32.totalorder %v2333, 3435973837
    %v2336 = vadd.s32 %v2198, 2147483648
    %vm2338 = vcmp.ge.s32.totalorder %v2336, 3435973837
    %v2339 = vadd.s32 %v2199, 2147483648
    %vm2341 = vcmp.ge.s32.totalorder %v2339, 3435973837
    %v2342 = vadd.s32 %v2200, 2147483648
    %vm2344 = vcmp.ge.s32.totalorder %v2342, 3435973837
    %v2345 = vadd.s32 %v2201, 2147483648
    %vm2347 = vcmp.ge.s32.totalorder %v2345, 3435973837
    %v2348 = vadd.s32 %v2202, 2147483648
    %vm2350 = vcmp.ge.s32.totalorder %v2348, 3435973837
    %v2351 = vadd.s32 %v2203, 2147483648
    %vm2353 = vcmp.ge.s32.totalorder %v2351, 3435973837
    %v2354 = vadd.s32 %v2204, 2147483648
    %vm2356 = vcmp.ge.s32.totalorder %v2354, 3435973837
    %v2357 = vadd.s32 %v2205, 2147483648
    %vm2359 = vcmp.ge.s32.totalorder %v2357, 3435973837
    %v2360 = vadd.s32 %v2206, 2147483648
    %vm2362 = vcmp.ge.s32.totalorder %v2360, 3435973837
    %v2363 = vadd.s32 %v2207, 2147483648
    %vm2365 = vcmp.ge.s32.totalorder %v2363, 3435973837
    %v2366 = vadd.s32 %v2208, 2147483648
    %vm2368 = vcmp.ge.s32.totalorder %v2366, 3435973837
    %v2369 = vadd.s32 %v2209, 2147483648
    %vm2371 = vcmp.ge.s32.totalorder %v2369, 3435973837
    %v2372 = vadd.s32 %v2210, 2147483648
    %vm2374 = vcmp.ge.s32.totalorder %v2372, 3435973837
    %v2375 = vadd.s32 %v2211, 2147483648
    %vm2377 = vcmp.ge.s32.totalorder %v2375, 3435973837
    %v2378 = vadd.s32 %v2212, 2147483648
    %vm2380 = vcmp.ge.s32.totalorder %v2378, 3435973837
    %v2381 = vadd.s32 %v2213, 2147483648
    %vm2383 = vcmp.ge.s32.totalorder %v2381, 3435973837
    %v2384 = vadd.s32 %v2214, 2147483648
    %vm2386 = vcmp.ge.s32.totalorder %v2384, 3435973837
    %v2387 = vadd.s32 %v2215, 2147483648
    %vm2389 = vcmp.ge.s32.totalorder %v2387, 3435973837
    %v2390 = vadd.s32 %v2216, 2147483648
    %vm2392 = vcmp.ge.s32.totalorder %v2390, 3435973837
    %v2393 = vadd.s32 %v2217, 2147483648
    %vm2395 = vcmp.ge.s32.totalorder %v2393, 3435973837
    %v2396 = vadd.s32 %v2218, 2147483648
    %vm2398 = vcmp.ge.s32.totalorder %v2396, 3435973837
    %v2399 = vadd.s32 %v2219, 2147483648
    %vm2401 = vcmp.ge.s32.totalorder %v2399, 3435973837
    %v2402 = vadd.s32 %v2220, 2147483648
    %vm2404 = vcmp.ge.s32.totalorder %v2402, 3435973837
    %v2405 = vadd.s32 %v2221, 2147483648
    %vm2407 = vcmp.ge.s32.totalorder %v2405, 3435973837
    %v2408 = vadd.s32 %v2222, 2147483648
    %vm2410 = vcmp.ge.s32.totalorder %v2408, 3435973837
    %v2411 = vadd.s32 %v2223, 2147483648
    %vm2413 = vcmp.ge.s32.totalorder %v2411, 3435973837
    %v2414 = vadd.s32 %v2224, 2147483648
    %vm2416 = vcmp.ge.s32.totalorder %v2414, 3435973837
    %v2417 = vsel %vm2227, %v1540, 0.0
    %v2418 = vsel %vm2230, %v1541, 0.0
    %v2419 = vsel %vm2233, %v1542, 0.0
    %v2420 = vsel %vm2236, %v1543, 0.0
    %v2421 = vsel %vm2239, %v1544, 0.0
    %v2422 = vsel %vm2242, %v1545, 0.0
    %v2423 = vsel %vm2245, %v1546, 0.0
    %v2424 = vsel %vm2248, %v1547, 0.0
    %v2425 = vsel %vm2251, %v1548, 0.0
    %v2426 = vsel %vm2254, %v1549, 0.0
    %v2427 = vsel %vm2257, %v1550, 0.0
    %v2428 = vsel %vm2260, %v1551, 0.0
    %v2429 = vsel %vm2263, %v1552, 0.0
    %v2430 = vsel %vm2266, %v1553, 0.0
    %v2431 = vsel %vm2269, %v1554, 0.0
    %v2432 = vsel %vm2272, %v1555, 0.0
    %v2433 = vsel %vm2275, %v1556, 0.0
    %v2434 = vsel %vm2278, %v1557, 0.0
    %v2435 = vsel %vm2281, %v1558, 0.0
    %v2436 = vsel %vm2284, %v1559, 0.0
    %v2437 = vsel %vm2287, %v1560, 0.0
    %v2438 = vsel %vm2290, %v1561, 0.0
    %v2439 = vsel %vm2293, %v1562, 0.0
    %v2440 = vsel %vm2296, %v1563, 0.0
    %v2441 = vsel %vm2299, %v1564, 0.0
    %v2442 = vsel %vm2302, %v1565, 0.0
    %v2443 = vsel %vm2305, %v1566, 0.0
    %v2444 = vsel %vm2308, %v1567, 0.0
    %v2445 = vsel %vm2311, %v1568, 0.0
    %v2446 = vsel %vm2314, %v1569, 0.0
    %v2447 = vsel %vm2317, %v1570, 0.0
    %v2448 = vsel %vm2320, %v1571, 0.0
    %v2449 = vsel %vm2323, %v1572, 0.0
    %v2450 = vsel %vm2326, %v1573, 0.0
    %v2451 = vsel %vm2329, %v1574, 0.0
    %v2452 = vsel %vm2332, %v1575, 0.0
    %v2453 = vsel %vm2335, %v1576, 0.0
    %v2454 = vsel %vm2338, %v1577, 0.0
    %v2455 = vsel %vm2341, %v1578, 0.0
    %v2456 = vsel %vm2344, %v1579, 0.0
    %v2457 = vsel %vm2347, %v1580, 0.0
    %v2458 = vsel %vm2350, %v1581, 0.0
    %v2459 = vsel %vm2353, %v1582, 0.0
    %v2460 = vsel %vm2356, %v1583, 0.0
    %v2461 = vsel %vm2359, %v1584, 0.0
    %v2462 = vsel %vm2362, %v1585, 0.0
    %v2463 = vsel %vm2365, %v1586, 0.0
    %v2464 = vsel %vm2368, %v1587, 0.0
    %v2465 = vsel %vm2371, %v1588, 0.0
    %v2466 = vsel %vm2374, %v1589, 0.0
    %v2467 = vsel %vm2377, %v1590, 0.0
    %v2468 = vsel %vm2380, %v1591, 0.0
    %v2469 = vsel %vm2383, %v1592, 0.0
    %v2470 = vsel %vm2386, %v1593, 0.0
    %v2471 = vsel %vm2389, %v1594, 0.0
    %v2472 = vsel %vm2392, %v1595, 0.0
    %v2473 = vsel %vm2395, %v1596, 0.0
    %v2474 = vsel %vm2398, %v1597, 0.0
    %v2475 = vsel %vm2401, %v1598, 0.0
    %v2476 = vsel %vm2404, %v1599, 0.0
    %v2477 = vsel %vm2407, %v1600, 0.0
    %v2478 = vsel %vm2410, %v1601, 0.0
    %v2479 = vsel %vm2413, %v1602, 0.0
    %v2480 = vsel %vm2416, %v1603, 0.0
    %v2481 = vpack.c.bf16 %v2425, %v2417
    %v2482 = vpack.c.bf16 %v2426, %v2418
    %v2483 = vpack.c.bf16 %v2427, %v2419
    %v2484 = vpack.c.bf16 %v2428, %v2420
    %v2485 = vpack.c.bf16 %v2429, %v2421
    %v2486 = vpack.c.bf16 %v2430, %v2422
    %v2487 = vpack.c.bf16 %v2431, %v2423
    %v2488 = vpack.c.bf16 %v2432, %v2424
    %v2489 = vpack.c.bf16 %v2441, %v2433
    %v2490 = vpack.c.bf16 %v2442, %v2434
    %v2491 = vpack.c.bf16 %v2443, %v2435
    %v2492 = vpack.c.bf16 %v2444, %v2436
    %v2493 = vpack.c.bf16 %v2445, %v2437
    %v2494 = vpack.c.bf16 %v2446, %v2438
    %v2495 = vpack.c.bf16 %v2447, %v2439
    %v2496 = vpack.c.bf16 %v2448, %v2440
    %v2497 = vpack.c.bf16 %v2457, %v2449
    %v2498 = vpack.c.bf16 %v2458, %v2450
    %v2499 = vpack.c.bf16 %v2459, %v2451
    %v2500 = vpack.c.bf16 %v2460, %v2452
    %v2501 = vpack.c.bf16 %v2461, %v2453
    %v2502 = vpack.c.bf16 %v2462, %v2454
    %v2503 = vpack.c.bf16 %v2463, %v2455
    %v2504 = vpack.c.bf16 %v2464, %v2456
    %v2505 = vpack.c.bf16 %v2473, %v2465
    %v2506 = vpack.c.bf16 %v2474, %v2466
    %v2507 = vpack.c.bf16 %v2475, %v2467
    %v2508 = vpack.c.bf16 %v2476, %v2468
    %v2509 = vpack.c.bf16 %v2477, %v2469
    %v2510 = vpack.c.bf16 %v2478, %v2470
    %v2511 = vpack.c.bf16 %v2479, %v2471
    %v2512 = vpack.c.bf16 %v2480, %v2472
    %v2513 = vld [vmem:[#allocation10] sm:$0xff]
    %v2514 = vld [vmem:[#allocation10 + $0x8] sm:$0xff]
    %v2515 = vld [vmem:[#allocation10 + $0x10] sm:$0xff]
    %v2516 = vld [vmem:[#allocation10 + $0x18] sm:$0xff]
    %v2517 = vld [vmem:[#allocation10 + $0x20] sm:$0xff]
    %v2518 = vld [vmem:[#allocation10 + $0x28] sm:$0xff]
    %v2519 = vld [vmem:[#allocation10 + $0x30] sm:$0xff]
    %v2520 = vld [vmem:[#allocation10 + $0x38] sm:$0xff]
    %v2521 = vld [vmem:[#allocation10 + $0x40] sm:$0xff]
    %v2522 = vld [vmem:[#allocation10 + $0x48] sm:$0xff]
    %v2523 = vld [vmem:[#allocation10 + $0x50] sm:$0xff]
    %v2524 = vld [vmem:[#allocation10 + $0x58] sm:$0xff]
    %v2525 = vld [vmem:[#allocation10 + $0x60] sm:$0xff]
    %v2526 = vld [vmem:[#allocation10 + $0x68] sm:$0xff]
    %v2527 = vld [vmem:[#allocation10 + $0x70] sm:$0xff]
    %v2528 = vld [vmem:[#allocation10 + $0x78] sm:$0xff]
    %v2529 = vld [vmem:[#allocation10 + $0x80] sm:$0xff]
    %v2530 = vld [vmem:[#allocation10 + $0x88] sm:$0xff]
    %v2531 = vld [vmem:[#allocation10 + $0x90] sm:$0xff]
    %v2532 = vld [vmem:[#allocation10 + $0x98] sm:$0xff]
    %v2533 = vld [vmem:[#allocation10 + $0xa0] sm:$0xff]
    %v2534 = vld [vmem:[#allocation10 + $0xa8] sm:$0xff]
    %v2535 = vld [vmem:[#allocation10 + $0xb0] sm:$0xff]
    %v2536 = vld [vmem:[#allocation10 + $0xb8] sm:$0xff]
    %v2537 = vld [vmem:[#allocation10 + $0xc0] sm:$0xff]
    %v2538 = vld [vmem:[#allocation10 + $0xc8] sm:$0xff]
    %v2539 = vld [vmem:[#allocation10 + $0xd0] sm:$0xff]
    %v2540 = vld [vmem:[#allocation10 + $0xd8] sm:$0xff]
    %v2541 = vld [vmem:[#allocation10 + $0xe0] sm:$0xff]
    %v2542 = vld [vmem:[#allocation10 + $0xe8] sm:$0xff]
    %v2543 = vld [vmem:[#allocation10 + $0xf0] sm:$0xff]
    %v2544 = vld [vmem:[#allocation10 + $0xf8] sm:$0xff]
    %v2545 = vld [vmem:[#allocation10 + $0x100] sm:$0xff]
    %v2546 = vld [vmem:[#allocation10 + $0x108] sm:$0xff]
    %v2547 = vld [vmem:[#allocation10 + $0x110] sm:$0xff]
    %v2548 = vld [vmem:[#allocation10 + $0x118] sm:$0xff]
    %v2549 = vld [vmem:[#allocation10 + $0x120] sm:$0xff]
    %v2550 = vld [vmem:[#allocation10 + $0x128] sm:$0xff]
    %v2551 = vld [vmem:[#allocation10 + $0x130] sm:$0xff]
    %v2552 = vld [vmem:[#allocation10 + $0x138] sm:$0xff]
    %v2553 = vld [vmem:[#allocation10 + $0x140] sm:$0xff]
    %v2554 = vld [vmem:[#allocation10 + $0x148] sm:$0xff]
    %v2555 = vld [vmem:[#allocation10 + $0x150] sm:$0xff]
    %v2556 = vld [vmem:[#allocation10 + $0x158] sm:$0xff]
    %v2557 = vld [vmem:[#allocation10 + $0x160] sm:$0xff]
    %v2558 = vld [vmem:[#allocation10 + $0x168] sm:$0xff]
    %v2559 = vld [vmem:[#allocation10 + $0x170] sm:$0xff]
    %v2560 = vld [vmem:[#allocation10 + $0x178] sm:$0xff]
    %v2561 = vld [vmem:[#allocation10 + $0x180] sm:$0xff]
    %v2562 = vld [vmem:[#allocation10 + $0x188] sm:$0xff]
    %v2563 = vld [vmem:[#allocation10 + $0x190] sm:$0xff]
    %v2564 = vld [vmem:[#allocation10 + $0x198] sm:$0xff]
    %v2565 = vld [vmem:[#allocation10 + $0x1a0] sm:$0xff]
    %v2566 = vld [vmem:[#allocation10 + $0x1a8] sm:$0xff]
    %v2567 = vld [vmem:[#allocation10 + $0x1b0] sm:$0xff]
    %v2568 = vld [vmem:[#allocation10 + $0x1b8] sm:$0xff]
    %v2569 = vld [vmem:[#allocation10 + $0x1c0] sm:$0xff]
    %v2570 = vld [vmem:[#allocation10 + $0x1c8] sm:$0xff]
    %v2571 = vld [vmem:[#allocation10 + $0x1d0] sm:$0xff]
    %v2572 = vld [vmem:[#allocation10 + $0x1d8] sm:$0xff]
    %v2573 = vld [vmem:[#allocation10 + $0x1e0] sm:$0xff]
    %v2574 = vld [vmem:[#allocation10 + $0x1e8] sm:$0xff]
    %v2575 = vld [vmem:[#allocation10 + $0x1f0] sm:$0xff]
    %v2576 = vld [vmem:[#allocation10 + $0x1f8] sm:$0xff]
    %v2577 = vld [vmem:[#allocation10 + $0x200] sm:$0xff]
    %v2578 = vld [vmem:[#allocation10 + $0x208] sm:$0xff]
    %v2579 = vld [vmem:[#allocation10 + $0x210] sm:$0xff]
    %v2580 = vld [vmem:[#allocation10 + $0x218] sm:$0xff]
    %v2581 = vld [vmem:[#allocation10 + $0x220] sm:$0xff]
    %v2582 = vld [vmem:[#allocation10 + $0x228] sm:$0xff]
    %v2583 = vld [vmem:[#allocation10 + $0x230] sm:$0xff]
    %v2584 = vld [vmem:[#allocation10 + $0x238] sm:$0xff]
    %v2585 = vld [vmem:[#allocation10 + $0x240] sm:$0xff]
    %v2586 = vld [vmem:[#allocation10 + $0x248] sm:$0xff]
    %v2587 = vld [vmem:[#allocation10 + $0x250] sm:$0xff]
    %v2588 = vld [vmem:[#allocation10 + $0x258] sm:$0xff]
    %v2589 = vld [vmem:[#allocation10 + $0x260] sm:$0xff]
    %v2590 = vld [vmem:[#allocation10 + $0x268] sm:$0xff]
    %v2591 = vld [vmem:[#allocation10 + $0x270] sm:$0xff]
    %v2592 = vld [vmem:[#allocation10 + $0x278] sm:$0xff]
    %v2593 = vld [vmem:[#allocation10 + $0x280] sm:$0xff]
    %v2594 = vld [vmem:[#allocation10 + $0x288] sm:$0xff]
    %v2595 = vld [vmem:[#allocation10 + $0x290] sm:$0xff]
    %v2596 = vld [vmem:[#allocation10 + $0x298] sm:$0xff]
    %v2597 = vld [vmem:[#allocation10 + $0x2a0] sm:$0xff]
    %v2598 = vld [vmem:[#allocation10 + $0x2a8] sm:$0xff]
    %v2599 = vld [vmem:[#allocation10 + $0x2b0] sm:$0xff]
    %v2600 = vld [vmem:[#allocation10 + $0x2b8] sm:$0xff]
    %v2601 = vld [vmem:[#allocation10 + $0x2c0] sm:$0xff]
    %v2602 = vld [vmem:[#allocation10 + $0x2c8] sm:$0xff]
    %v2603 = vld [vmem:[#allocation10 + $0x2d0] sm:$0xff]
    %v2604 = vld [vmem:[#allocation10 + $0x2d8] sm:$0xff]
    %v2605 = vld [vmem:[#allocation10 + $0x2e0] sm:$0xff]
    %v2606 = vld [vmem:[#allocation10 + $0x2e8] sm:$0xff]
    %v2607 = vld [vmem:[#allocation10 + $0x2f0] sm:$0xff]
    %v2608 = vld [vmem:[#allocation10 + $0x2f8] sm:$0xff]
    %v2609 = vld [vmem:[#allocation10 + $0x300] sm:$0xff]
    %v2610 = vld [vmem:[#allocation10 + $0x308] sm:$0xff]
    %v2611 = vld [vmem:[#allocation10 + $0x310] sm:$0xff]
    %v2612 = vld [vmem:[#allocation10 + $0x318] sm:$0xff]
    %v2613 = vld [vmem:[#allocation10 + $0x320] sm:$0xff]
    %v2614 = vld [vmem:[#allocation10 + $0x328] sm:$0xff]
    %v2615 = vld [vmem:[#allocation10 + $0x330] sm:$0xff]
    %v2616 = vld [vmem:[#allocation10 + $0x338] sm:$0xff]
    %v2617 = vld [vmem:[#allocation10 + $0x340] sm:$0xff]
    %v2618 = vld [vmem:[#allocation10 + $0x348] sm:$0xff]
    %v2619 = vld [vmem:[#allocation10 + $0x350] sm:$0xff]
    %v2620 = vld [vmem:[#allocation10 + $0x358] sm:$0xff]
    %v2621 = vld [vmem:[#allocation10 + $0x360] sm:$0xff]
    %v2622 = vld [vmem:[#allocation10 + $0x368] sm:$0xff]
    %v2623 = vld [vmem:[#allocation10 + $0x370] sm:$0xff]
    %v2624 = vld [vmem:[#allocation10 + $0x378] sm:$0xff]
    %v2625 = vld [vmem:[#allocation10 + $0x380] sm:$0xff]
    %v2626 = vld [vmem:[#allocation10 + $0x388] sm:$0xff]
    %v2627 = vld [vmem:[#allocation10 + $0x390] sm:$0xff]
    %v2628 = vld [vmem:[#allocation10 + $0x398] sm:$0xff]
    %v2629 = vld [vmem:[#allocation10 + $0x3a0] sm:$0xff]
    %v2630 = vld [vmem:[#allocation10 + $0x3a8] sm:$0xff]
    %v2631 = vld [vmem:[#allocation10 + $0x3b0] sm:$0xff]
    %v2632 = vld [vmem:[#allocation10 + $0x3b8] sm:$0xff]
    %v2633 = vld [vmem:[#allocation10 + $0x3c0] sm:$0xff]
    %v2634 = vld [vmem:[#allocation10 + $0x3c8] sm:$0xff]
    %v2635 = vld [vmem:[#allocation10 + $0x3d0] sm:$0xff]
    %v2636 = vld [vmem:[#allocation10 + $0x3d8] sm:$0xff]
    %v2637 = vld [vmem:[#allocation10 + $0x3e0] sm:$0xff]
    %v2638 = vld [vmem:[#allocation10 + $0x3e8] sm:$0xff]
    %v2639 = vld [vmem:[#allocation10 + $0x3f0] sm:$0xff]
    %v2640 = vld [vmem:[#allocation10 + $0x3f8] sm:$0xff]
    %v2641 = vld [vmem:[#allocation10 + $0x400] sm:$0xff]
    %v2642 = vld [vmem:[#allocation10 + $0x408] sm:$0xff]
    %v2643 = vld [vmem:[#allocation10 + $0x410] sm:$0xff]
    %v2644 = vld [vmem:[#allocation10 + $0x418] sm:$0xff]
    %v2645 = vld [vmem:[#allocation10 + $0x420] sm:$0xff]
    %v2646 = vld [vmem:[#allocation10 + $0x428] sm:$0xff]
    %v2647 = vld [vmem:[#allocation10 + $0x430] sm:$0xff]
    %v2648 = vld [vmem:[#allocation10 + $0x438] sm:$0xff]
    %v2649 = vld [vmem:[#allocation10 + $0x440] sm:$0xff]
    %v2650 = vld [vmem:[#allocation10 + $0x448] sm:$0xff]
    %v2651 = vld [vmem:[#allocation10 + $0x450] sm:$0xff]
    %v2652 = vld [vmem:[#allocation10 + $0x458] sm:$0xff]
    %v2653 = vld [vmem:[#allocation10 + $0x460] sm:$0xff]
    %v2654 = vld [vmem:[#allocation10 + $0x468] sm:$0xff]
    %v2655 = vld [vmem:[#allocation10 + $0x470] sm:$0xff]
    %v2656 = vld [vmem:[#allocation10 + $0x478] sm:$0xff]
    %v2657 = vld [vmem:[#allocation10 + $0x480] sm:$0xff]
    %v2658 = vld [vmem:[#allocation10 + $0x488] sm:$0xff]
    %v2659 = vld [vmem:[#allocation10 + $0x490] sm:$0xff]
    %v2660 = vld [vmem:[#allocation10 + $0x498] sm:$0xff]
    %v2661 = vld [vmem:[#allocation10 + $0x4a0] sm:$0xff]
    %v2662 = vld [vmem:[#allocation10 + $0x4a8] sm:$0xff]
    %v2663 = vld [vmem:[#allocation10 + $0x4b0] sm:$0xff]
    %v2664 = vld [vmem:[#allocation10 + $0x4b8] sm:$0xff]
    %v2665 = vld [vmem:[#allocation10 + $0x4c0] sm:$0xff]
    %v2666 = vld [vmem:[#allocation10 + $0x4c8] sm:$0xff]
    %v2667 = vld [vmem:[#allocation10 + $0x4d0] sm:$0xff]
    %v2668 = vld [vmem:[#allocation10 + $0x4d8] sm:$0xff]
    %v2669 = vld [vmem:[#allocation10 + $0x4e0] sm:$0xff]
    %v2670 = vld [vmem:[#allocation10 + $0x4e8] sm:$0xff]
    %v2671 = vld [vmem:[#allocation10 + $0x4f0] sm:$0xff]
    %v2672 = vld [vmem:[#allocation10 + $0x4f8] sm:$0xff]
    %v2673 = vld [vmem:[#allocation10 + $0x500] sm:$0xff]
    %v2674 = vld [vmem:[#allocation10 + $0x508] sm:$0xff]
    %v2675 = vld [vmem:[#allocation10 + $0x510] sm:$0xff]
    %v2676 = vld [vmem:[#allocation10 + $0x518] sm:$0xff]
    %v2677 = vld [vmem:[#allocation10 + $0x520] sm:$0xff]
    %v2678 = vld [vmem:[#allocation10 + $0x528] sm:$0xff]
    %v2679 = vld [vmem:[#allocation10 + $0x530] sm:$0xff]
    %v2680 = vld [vmem:[#allocation10 + $0x538] sm:$0xff]
    %v2681 = vld [vmem:[#allocation10 + $0x540] sm:$0xff]
    %v2682 = vld [vmem:[#allocation10 + $0x548] sm:$0xff]
    %v2683 = vld [vmem:[#allocation10 + $0x550] sm:$0xff]
    %v2684 = vld [vmem:[#allocation10 + $0x558] sm:$0xff]
    %v2685 = vld [vmem:[#allocation10 + $0x560] sm:$0xff]
    %v2686 = vld [vmem:[#allocation10 + $0x568] sm:$0xff]
    %v2687 = vld [vmem:[#allocation10 + $0x570] sm:$0xff]
    %v2688 = vld [vmem:[#allocation10 + $0x578] sm:$0xff]
    %v2689 = vld [vmem:[#allocation10 + $0x580] sm:$0xff]
    %v2690 = vld [vmem:[#allocation10 + $0x588] sm:$0xff]
    %v2691 = vld [vmem:[#allocation10 + $0x590] sm:$0xff]
    %v2692 = vld [vmem:[#allocation10 + $0x598] sm:$0xff]
    %v2693 = vld [vmem:[#allocation10 + $0x5a0] sm:$0xff]
    %v2694 = vld [vmem:[#allocation10 + $0x5a8] sm:$0xff]
    %v2695 = vld [vmem:[#allocation10 + $0x5b0] sm:$0xff]
    %v2696 = vld [vmem:[#allocation10 + $0x5b8] sm:$0xff]
    %v2697 = vld [vmem:[#allocation10 + $0x5c0] sm:$0xff]
    %v2698 = vld [vmem:[#allocation10 + $0x5c8] sm:$0xff]
    %v2699 = vld [vmem:[#allocation10 + $0x5d0] sm:$0xff]
    %v2700 = vld [vmem:[#allocation10 + $0x5d8] sm:$0xff]
    %v2701 = vld [vmem:[#allocation10 + $0x5e0] sm:$0xff]
    %v2702 = vld [vmem:[#allocation10 + $0x5e8] sm:$0xff]
    %v2703 = vld [vmem:[#allocation10 + $0x5f0] sm:$0xff]
    %v2704 = vld [vmem:[#allocation10 + $0x5f8] sm:$0xff]
    %v2705 = vld [vmem:[#allocation10 + $0x600] sm:$0xff]
    %v2706 = vld [vmem:[#allocation10 + $0x608] sm:$0xff]
    %v2707 = vld [vmem:[#allocation10 + $0x610] sm:$0xff]
    %v2708 = vld [vmem:[#allocation10 + $0x618] sm:$0xff]
    %v2709 = vld [vmem:[#allocation10 + $0x620] sm:$0xff]
    %v2710 = vld [vmem:[#allocation10 + $0x628] sm:$0xff]
    %v2711 = vld [vmem:[#allocation10 + $0x630] sm:$0xff]
    %v2712 = vld [vmem:[#allocation10 + $0x638] sm:$0xff]
    %v2713 = vld [vmem:[#allocation10 + $0x640] sm:$0xff]
    %v2714 = vld [vmem:[#allocation10 + $0x648] sm:$0xff]
    %v2715 = vld [vmem:[#allocation10 + $0x650] sm:$0xff]
    %v2716 = vld [vmem:[#allocation10 + $0x658] sm:$0xff]
    %v2717 = vld [vmem:[#allocation10 + $0x660] sm:$0xff]
    %v2718 = vld [vmem:[#allocation10 + $0x668] sm:$0xff]
    %v2719 = vld [vmem:[#allocation10 + $0x670] sm:$0xff]
    %v2720 = vld [vmem:[#allocation10 + $0x678] sm:$0xff]
    %v2721 = vld [vmem:[#allocation10 + $0x680] sm:$0xff]
    %v2722 = vld [vmem:[#allocation10 + $0x688] sm:$0xff]
    %v2723 = vld [vmem:[#allocation10 + $0x690] sm:$0xff]
    %v2724 = vld [vmem:[#allocation10 + $0x698] sm:$0xff]
    %v2725 = vld [vmem:[#allocation10 + $0x6a0] sm:$0xff]
    %v2726 = vld [vmem:[#allocation10 + $0x6a8] sm:$0xff]
    %v2727 = vld [vmem:[#allocation10 + $0x6b0] sm:$0xff]
    %v2728 = vld [vmem:[#allocation10 + $0x6b8] sm:$0xff]
    %v2729 = vld [vmem:[#allocation10 + $0x6c0] sm:$0xff]
    %v2730 = vld [vmem:[#allocation10 + $0x6c8] sm:$0xff]
    %v2731 = vld [vmem:[#allocation10 + $0x6d0] sm:$0xff]
    %v2732 = vld [vmem:[#allocation10 + $0x6d8] sm:$0xff]
    %v2733 = vld [vmem:[#allocation10 + $0x6e0] sm:$0xff]
    %v2734 = vld [vmem:[#allocation10 + $0x6e8] sm:$0xff]
    %v2735 = vld [vmem:[#allocation10 + $0x6f0] sm:$0xff]
    %v2736 = vld [vmem:[#allocation10 + $0x6f8] sm:$0xff]
    %v2737 = vld [vmem:[#allocation10 + $0x700] sm:$0xff]
    %v2738 = vld [vmem:[#allocation10 + $0x708] sm:$0xff]
    %v2739 = vld [vmem:[#allocation10 + $0x710] sm:$0xff]
    %v2740 = vld [vmem:[#allocation10 + $0x718] sm:$0xff]
    %v2741 = vld [vmem:[#allocation10 + $0x720] sm:$0xff]
    %v2742 = vld [vmem:[#allocation10 + $0x728] sm:$0xff]
    %v2743 = vld [vmem:[#allocation10 + $0x730] sm:$0xff]
    %v2744 = vld [vmem:[#allocation10 + $0x738] sm:$0xff]
    %v2745 = vld [vmem:[#allocation10 + $0x740] sm:$0xff]
    %v2746 = vld [vmem:[#allocation10 + $0x748] sm:$0xff]
    %v2747 = vld [vmem:[#allocation10 + $0x750] sm:$0xff]
    %v2748 = vld [vmem:[#allocation10 + $0x758] sm:$0xff]
    %v2749 = vld [vmem:[#allocation10 + $0x760] sm:$0xff]
    %v2750 = vld [vmem:[#allocation10 + $0x768] sm:$0xff]
    %v2751 = vld [vmem:[#allocation10 + $0x770] sm:$0xff]
    %v2752 = vld [vmem:[#allocation10 + $0x778] sm:$0xff]
    %v2753 = vld [vmem:[#allocation10 + $0x780] sm:$0xff]
    %v2754 = vld [vmem:[#allocation10 + $0x788] sm:$0xff]
    %v2755 = vld [vmem:[#allocation10 + $0x790] sm:$0xff]
    %v2756 = vld [vmem:[#allocation10 + $0x798] sm:$0xff]
    %v2757 = vld [vmem:[#allocation10 + $0x7a0] sm:$0xff]
    %v2758 = vld [vmem:[#allocation10 + $0x7a8] sm:$0xff]
    %v2759 = vld [vmem:[#allocation10 + $0x7b0] sm:$0xff]
    %v2760 = vld [vmem:[#allocation10 + $0x7b8] sm:$0xff]
    %v2761 = vld [vmem:[#allocation10 + $0x7c0] sm:$0xff]
    %v2762 = vld [vmem:[#allocation10 + $0x7c8] sm:$0xff]
    %v2763 = vld [vmem:[#allocation10 + $0x7d0] sm:$0xff]
    %v2764 = vld [vmem:[#allocation10 + $0x7d8] sm:$0xff]
    %v2765 = vld [vmem:[#allocation10 + $0x7e0] sm:$0xff]
    %v2766 = vld [vmem:[#allocation10 + $0x7e8] sm:$0xff]
    %v2767 = vld [vmem:[#allocation10 + $0x7f0] sm:$0xff]
    %v2768 = vld [vmem:[#allocation10 + $0x7f8] sm:$0xff]
    %v2769 = vld [vmem:[%s5] sm:$0xf]
    %v2771 = vperm.slane %v2769, 0
    %v2772 = vperm.slane %v2769, 1
    %v2773 = vperm.slane %v2769, 2
    %v2774 = vperm.slane %v2769, 3
    %v3035 = vunpack.c.l.b16 %v2513
    %v3036 = vunpack.c.h.b16 %v2513
    %v3037 = vunpack.c.l.b16 %v2514
    %v3038 = vunpack.c.h.b16 %v2514
    %v3039 = vunpack.c.l.b16 %v2515
    %v3040 = vunpack.c.h.b16 %v2515
    %v3041 = vunpack.c.l.b16 %v2516
    %v3042 = vunpack.c.h.b16 %v2516
    %v3043 = vunpack.c.l.b16 %v2517
    %v3044 = vunpack.c.h.b16 %v2517
    %v3045 = vunpack.c.l.b16 %v2518
    %v3046 = vunpack.c.h.b16 %v2518
    %v3047 = vunpack.c.l.b16 %v2519
    %v3048 = vunpack.c.h.b16 %v2519
    %v3049 = vunpack.c.l.b16 %v2520
    %v3050 = vunpack.c.h.b16 %v2520
    %v3051 = vunpack.c.l.b16 %v2521
    %v3052 = vunpack.c.h.b16 %v2521
    %v3053 = vunpack.c.l.b16 %v2522
    %v3054 = vunpack.c.h.b16 %v2522
    %v3055 = vunpack.c.l.b16 %v2523
    %v3056 = vunpack.c.h.b16 %v2523
    %v3057 = vunpack.c.l.b16 %v2524
    %v3058 = vunpack.c.h.b16 %v2524
    %v3059 = vunpack.c.l.b16 %v2525
    %v3060 = vunpack.c.h.b16 %v2525
    %v3061 = vunpack.c.l.b16 %v2526
    %v3062 = vunpack.c.h.b16 %v2526
    %v3063 = vunpack.c.l.b16 %v2527
    %v3064 = vunpack.c.h.b16 %v2527
    %v3065 = vunpack.c.l.b16 %v2528
    %v3066 = vunpack.c.h.b16 %v2528
    %v3067 = vunpack.c.l.b16 %v2529
    %v3068 = vunpack.c.h.b16 %v2529
    %v3069 = vunpack.c.l.b16 %v2530
    %v3070 = vunpack.c.h.b16 %v2530
    %v3071 = vunpack.c.l.b16 %v2531
    %v3072 = vunpack.c.h.b16 %v2531
    %v3073 = vunpack.c.l.b16 %v2532
    %v3074 = vunpack.c.h.b16 %v2532
    %v3075 = vunpack.c.l.b16 %v2533
    %v3076 = vunpack.c.h.b16 %v2533
    %v3077 = vunpack.c.l.b16 %v2534
    %v3078 = vunpack.c.h.b16 %v2534
    %v3079 = vunpack.c.l.b16 %v2535
    %v3080 = vunpack.c.h.b16 %v2535
    %v3081 = vunpack.c.l.b16 %v2536
    %v3082 = vunpack.c.h.b16 %v2536
    %v3083 = vunpack.c.l.b16 %v2537
    %v3084 = vunpack.c.h.b16 %v2537
    %v3085 = vunpack.c.l.b16 %v2538
    %v3086 = vunpack.c.h.b16 %v2538
    %v3087 = vunpack.c.l.b16 %v2539
    %v3088 = vunpack.c.h.b16 %v2539
    %v3089 = vunpack.c.l.b16 %v2540
    %v3090 = vunpack.c.h.b16 %v2540
    %v3091 = vunpack.c.l.b16 %v2541
    %v3092 = vunpack.c.h.b16 %v2541
    %v3093 = vunpack.c.l.b16 %v2542
    %v3094 = vunpack.c.h.b16 %v2542
    %v3095 = vunpack.c.l.b16 %v2543
    %v3096 = vunpack.c.h.b16 %v2543
    %v3097 = vunpack.c.l.b16 %v2544
    %v3098 = vunpack.c.h.b16 %v2544
    %v3099 = vunpack.c.l.b16 %v2545
    %v3100 = vunpack.c.h.b16 %v2545
    %v3101 = vunpack.c.l.b16 %v2546
    %v3102 = vunpack.c.h.b16 %v2546
    %v3103 = vunpack.c.l.b16 %v2547
    %v3104 = vunpack.c.h.b16 %v2547
    %v3105 = vunpack.c.l.b16 %v2548
    %v3106 = vunpack.c.h.b16 %v2548
    %v3107 = vunpack.c.l.b16 %v2549
    %v3108 = vunpack.c.h.b16 %v2549
    %v3109 = vunpack.c.l.b16 %v2550
    %v3110 = vunpack.c.h.b16 %v2550
    %v3111 = vunpack.c.l.b16 %v2551
    %v3112 = vunpack.c.h.b16 %v2551
    %v3113 = vunpack.c.l.b16 %v2552
    %v3114 = vunpack.c.h.b16 %v2552
    %v3115 = vunpack.c.l.b16 %v2553
    %v3116 = vunpack.c.h.b16 %v2553
    %v3117 = vunpack.c.l.b16 %v2554
    %v3118 = vunpack.c.h.b16 %v2554
    %v3119 = vunpack.c.l.b16 %v2555
    %v3120 = vunpack.c.h.b16 %v2555
    %v3121 = vunpack.c.l.b16 %v2556
    %v3122 = vunpack.c.h.b16 %v2556
    %v3123 = vunpack.c.l.b16 %v2557
    %v3124 = vunpack.c.h.b16 %v2557
    %v3125 = vunpack.c.l.b16 %v2558
    %v3126 = vunpack.c.h.b16 %v2558
    %v3127 = vunpack.c.l.b16 %v2559
    %v3128 = vunpack.c.h.b16 %v2559
    %v3129 = vunpack.c.l.b16 %v2560
    %v3130 = vunpack.c.h.b16 %v2560
    %v3131 = vunpack.c.l.b16 %v2561
    %v3132 = vunpack.c.h.b16 %v2561
    %v3133 = vunpack.c.l.b16 %v2562
    %v3134 = vunpack.c.h.b16 %v2562
    %v3135 = vunpack.c.l.b16 %v2563
    %v3136 = vunpack.c.h.b16 %v2563
    %v3137 = vunpack.c.l.b16 %v2564
    %v3138 = vunpack.c.h.b16 %v2564
    %v3139 = vunpack.c.l.b16 %v2565
    %v3140 = vunpack.c.h.b16 %v2565
    %v3141 = vunpack.c.l.b16 %v2566
    %v3142 = vunpack.c.h.b16 %v2566
    %v3143 = vunpack.c.l.b16 %v2567
    %v3144 = vunpack.c.h.b16 %v2567
    %v3145 = vunpack.c.l.b16 %v2568
    %v3146 = vunpack.c.h.b16 %v2568
    %v3147 = vunpack.c.l.b16 %v2569
    %v3148 = vunpack.c.h.b16 %v2569
    %v3149 = vunpack.c.l.b16 %v2570
    %v3150 = vunpack.c.h.b16 %v2570
    %v3151 = vunpack.c.l.b16 %v2571
    %v3152 = vunpack.c.h.b16 %v2571
    %v3153 = vunpack.c.l.b16 %v2572
    %v3154 = vunpack.c.h.b16 %v2572
    %v3155 = vunpack.c.l.b16 %v2573
    %v3156 = vunpack.c.h.b16 %v2573
    %v3157 = vunpack.c.l.b16 %v2574
    %v3158 = vunpack.c.h.b16 %v2574
    %v3159 = vunpack.c.l.b16 %v2575
    %v3160 = vunpack.c.h.b16 %v2575
    %v3161 = vunpack.c.l.b16 %v2576
    %v3162 = vunpack.c.h.b16 %v2576
    %v3163 = vunpack.c.l.b16 %v2577
    %v3164 = vunpack.c.h.b16 %v2577
    %v3165 = vunpack.c.l.b16 %v2578
    %v3166 = vunpack.c.h.b16 %v2578
    %v3167 = vunpack.c.l.b16 %v2579
    %v3168 = vunpack.c.h.b16 %v2579
    %v3169 = vunpack.c.l.b16 %v2580
    %v3170 = vunpack.c.h.b16 %v2580
    %v3171 = vunpack.c.l.b16 %v2581
    %v3172 = vunpack.c.h.b16 %v2581
    %v3173 = vunpack.c.l.b16 %v2582
    %v3174 = vunpack.c.h.b16 %v2582
    %v3175 = vunpack.c.l.b16 %v2583
    %v3176 = vunpack.c.h.b16 %v2583
    %v3177 = vunpack.c.l.b16 %v2584
    %v3178 = vunpack.c.h.b16 %v2584
    %v3179 = vunpack.c.l.b16 %v2585
    %v3180 = vunpack.c.h.b16 %v2585
    %v3181 = vunpack.c.l.b16 %v2586
    %v3182 = vunpack.c.h.b16 %v2586
    %v3183 = vunpack.c.l.b16 %v2587
    %v3184 = vunpack.c.h.b16 %v2587
    %v3185 = vunpack.c.l.b16 %v2588
    %v3186 = vunpack.c.h.b16 %v2588
    %v3187 = vunpack.c.l.b16 %v2589
    %v3188 = vunpack.c.h.b16 %v2589
    %v3189 = vunpack.c.l.b16 %v2590
    %v3190 = vunpack.c.h.b16 %v2590
    %v3191 = vunpack.c.l.b16 %v2591
    %v3192 = vunpack.c.h.b16 %v2591
    %v3193 = vunpack.c.l.b16 %v2592
    %v3194 = vunpack.c.h.b16 %v2592
    %v3195 = vunpack.c.l.b16 %v2593
    %v3196 = vunpack.c.h.b16 %v2593
    %v3197 = vunpack.c.l.b16 %v2594
    %v3198 = vunpack.c.h.b16 %v2594
    %v3199 = vunpack.c.l.b16 %v2595
    %v3200 = vunpack.c.h.b16 %v2595
    %v3201 = vunpack.c.l.b16 %v2596
    %v3202 = vunpack.c.h.b16 %v2596
    %v3203 = vunpack.c.l.b16 %v2597
    %v3204 = vunpack.c.h.b16 %v2597
    %v3205 = vunpack.c.l.b16 %v2598
    %v3206 = vunpack.c.h.b16 %v2598
    %v3207 = vunpack.c.l.b16 %v2599
    %v3208 = vunpack.c.h.b16 %v2599
    %v3209 = vunpack.c.l.b16 %v2600
    %v3210 = vunpack.c.h.b16 %v2600
    %v3211 = vunpack.c.l.b16 %v2601
    %v3212 = vunpack.c.h.b16 %v2601
    %v3213 = vunpack.c.l.b16 %v2602
    %v3214 = vunpack.c.h.b16 %v2602
    %v3215 = vunpack.c.l.b16 %v2603
    %v3216 = vunpack.c.h.b16 %v2603
    %v3217 = vunpack.c.l.b16 %v2604
    %v3218 = vunpack.c.h.b16 %v2604
    %v3219 = vunpack.c.l.b16 %v2605
    %v3220 = vunpack.c.h.b16 %v2605
    %v3221 = vunpack.c.l.b16 %v2606
    %v3222 = vunpack.c.h.b16 %v2606
    %v3223 = vunpack.c.l.b16 %v2607
    %v3224 = vunpack.c.h.b16 %v2607
    %v3225 = vunpack.c.l.b16 %v2608
    %v3226 = vunpack.c.h.b16 %v2608
    %v3227 = vunpack.c.l.b16 %v2609
    %v3228 = vunpack.c.h.b16 %v2609
    %v3229 = vunpack.c.l.b16 %v2610
    %v3230 = vunpack.c.h.b16 %v2610
    %v3231 = vunpack.c.l.b16 %v2611
    %v3232 = vunpack.c.h.b16 %v2611
    %v3233 = vunpack.c.l.b16 %v2612
    %v3234 = vunpack.c.h.b16 %v2612
    %v3235 = vunpack.c.l.b16 %v2613
    %v3236 = vunpack.c.h.b16 %v2613
    %v3237 = vunpack.c.l.b16 %v2614
    %v3238 = vunpack.c.h.b16 %v2614
    %v3239 = vunpack.c.l.b16 %v2615
    %v3240 = vunpack.c.h.b16 %v2615
    %v3241 = vunpack.c.l.b16 %v2616
    %v3242 = vunpack.c.h.b16 %v2616
    %v3243 = vunpack.c.l.b16 %v2617
    %v3244 = vunpack.c.h.b16 %v2617
    %v3245 = vunpack.c.l.b16 %v2618
    %v3246 = vunpack.c.h.b16 %v2618
    %v3247 = vunpack.c.l.b16 %v2619
    %v3248 = vunpack.c.h.b16 %v2619
    %v3249 = vunpack.c.l.b16 %v2620
    %v3250 = vunpack.c.h.b16 %v2620
    %v3251 = vunpack.c.l.b16 %v2621
    %v3252 = vunpack.c.h.b16 %v2621
    %v3253 = vunpack.c.l.b16 %v2622
    %v3254 = vunpack.c.h.b16 %v2622
    %v3255 = vunpack.c.l.b16 %v2623
    %v3256 = vunpack.c.h.b16 %v2623
    %v3257 = vunpack.c.l.b16 %v2624
    %v3258 = vunpack.c.h.b16 %v2624
    %v3259 = vunpack.c.l.b16 %v2625
    %v3260 = vunpack.c.h.b16 %v2625
    %v3261 = vunpack.c.l.b16 %v2626
    %v3262 = vunpack.c.h.b16 %v2626
    %v3263 = vunpack.c.l.b16 %v2627
    %v3264 = vunpack.c.h.b16 %v2627
    %v3265 = vunpack.c.l.b16 %v2628
    %v3266 = vunpack.c.h.b16 %v2628
    %v3267 = vunpack.c.l.b16 %v2629
    %v3268 = vunpack.c.h.b16 %v2629
    %v3269 = vunpack.c.l.b16 %v2630
    %v3270 = vunpack.c.h.b16 %v2630
    %v3271 = vunpack.c.l.b16 %v2631
    %v3272 = vunpack.c.h.b16 %v2631
    %v3273 = vunpack.c.l.b16 %v2632
    %v3274 = vunpack.c.h.b16 %v2632
    %v3275 = vunpack.c.l.b16 %v2633
    %v3276 = vunpack.c.h.b16 %v2633
    %v3277 = vunpack.c.l.b16 %v2634
    %v3278 = vunpack.c.h.b16 %v2634
    %v3279 = vunpack.c.l.b16 %v2635
    %v3280 = vunpack.c.h.b16 %v2635
    %v3281 = vunpack.c.l.b16 %v2636
    %v3282 = vunpack.c.h.b16 %v2636
    %v3283 = vunpack.c.l.b16 %v2637
    %v3284 = vunpack.c.h.b16 %v2637
    %v3285 = vunpack.c.l.b16 %v2638
    %v3286 = vunpack.c.h.b16 %v2638
    %v3287 = vunpack.c.l.b16 %v2639
    %v3288 = vunpack.c.h.b16 %v2639
    %v3289 = vunpack.c.l.b16 %v2640
    %v3290 = vunpack.c.h.b16 %v2640
    %v3291 = vunpack.c.l.b16 %v2641
    %v3292 = vunpack.c.h.b16 %v2641
    %v3293 = vunpack.c.l.b16 %v2642
    %v3294 = vunpack.c.h.b16 %v2642
    %v3295 = vunpack.c.l.b16 %v2643
    %v3296 = vunpack.c.h.b16 %v2643
    %v3297 = vunpack.c.l.b16 %v2644
    %v3298 = vunpack.c.h.b16 %v2644
    %v3299 = vunpack.c.l.b16 %v2645
    %v3300 = vunpack.c.h.b16 %v2645
    %v3301 = vunpack.c.l.b16 %v2646
    %v3302 = vunpack.c.h.b16 %v2646
    %v3303 = vunpack.c.l.b16 %v2647
    %v3304 = vunpack.c.h.b16 %v2647
    %v3305 = vunpack.c.l.b16 %v2648
    %v3306 = vunpack.c.h.b16 %v2648
    %v3307 = vunpack.c.l.b16 %v2649
    %v3308 = vunpack.c.h.b16 %v2649
    %v3309 = vunpack.c.l.b16 %v2650
    %v3310 = vunpack.c.h.b16 %v2650
    %v3311 = vunpack.c.l.b16 %v2651
    %v3312 = vunpack.c.h.b16 %v2651
    %v3313 = vunpack.c.l.b16 %v2652
    %v3314 = vunpack.c.h.b16 %v2652
    %v3315 = vunpack.c.l.b16 %v2653
    %v3316 = vunpack.c.h.b16 %v2653
    %v3317 = vunpack.c.l.b16 %v2654
    %v3318 = vunpack.c.h.b16 %v2654
    %v3319 = vunpack.c.l.b16 %v2655
    %v3320 = vunpack.c.h.b16 %v2655
    %v3321 = vunpack.c.l.b16 %v2656
    %v3322 = vunpack.c.h.b16 %v2656
    %v3323 = vunpack.c.l.b16 %v2657
    %v3324 = vunpack.c.h.b16 %v2657
    %v3325 = vunpack.c.l.b16 %v2658
    %v3326 = vunpack.c.h.b16 %v2658
    %v3327 = vunpack.c.l.b16 %v2659
    %v3328 = vunpack.c.h.b16 %v2659
    %v3329 = vunpack.c.l.b16 %v2660
    %v3330 = vunpack.c.h.b16 %v2660
    %v3331 = vunpack.c.l.b16 %v2661
    %v3332 = vunpack.c.h.b16 %v2661
    %v3333 = vunpack.c.l.b16 %v2662
    %v3334 = vunpack.c.h.b16 %v2662
    %v3335 = vunpack.c.l.b16 %v2663
    %v3336 = vunpack.c.h.b16 %v2663
    %v3337 = vunpack.c.l.b16 %v2664
    %v3338 = vunpack.c.h.b16 %v2664
    %v3339 = vunpack.c.l.b16 %v2665
    %v3340 = vunpack.c.h.b16 %v2665
    %v3341 = vunpack.c.l.b16 %v2666
    %v3342 = vunpack.c.h.b16 %v2666
    %v3343 = vunpack.c.l.b16 %v2667
    %v3344 = vunpack.c.h.b16 %v2667
    %v3345 = vunpack.c.l.b16 %v2668
    %v3346 = vunpack.c.h.b16 %v2668
    %v3347 = vunpack.c.l.b16 %v2669
    %v3348 = vunpack.c.h.b16 %v2669
    %v3349 = vunpack.c.l.b16 %v2670
    %v3350 = vunpack.c.h.b16 %v2670
    %v3351 = vunpack.c.l.b16 %v2671
    %v3352 = vunpack.c.h.b16 %v2671
    %v3353 = vunpack.c.l.b16 %v2672
    %v3354 = vunpack.c.h.b16 %v2672
    %v3355 = vunpack.c.l.b16 %v2673
    %v3356 = vunpack.c.h.b16 %v2673
    %v3357 = vunpack.c.l.b16 %v2674
    %v3358 = vunpack.c.h.b16 %v2674
    %v3359 = vunpack.c.l.b16 %v2675
    %v3360 = vunpack.c.h.b16 %v2675
    %v3361 = vunpack.c.l.b16 %v2676
    %v3362 = vunpack.c.h.b16 %v2676
    %v3363 = vunpack.c.l.b16 %v2677
    %v3364 = vunpack.c.h.b16 %v2677
    %v3365 = vunpack.c.l.b16 %v2678
    %v3366 = vunpack.c.h.b16 %v2678
    %v3367 = vunpack.c.l.b16 %v2679
    %v3368 = vunpack.c.h.b16 %v2679
    %v3369 = vunpack.c.l.b16 %v2680
    %v3370 = vunpack.c.h.b16 %v2680
    %v3371 = vunpack.c.l.b16 %v2681
    %v3372 = vunpack.c.h.b16 %v2681
    %v3373 = vunpack.c.l.b16 %v2682
    %v3374 = vunpack.c.h.b16 %v2682
    %v3375 = vunpack.c.l.b16 %v2683
    %v3376 = vunpack.c.h.b16 %v2683
    %v3377 = vunpack.c.l.b16 %v2684
    %v3378 = vunpack.c.h.b16 %v2684
    %v3379 = vunpack.c.l.b16 %v2685
    %v3380 = vunpack.c.h.b16 %v2685
    %v3381 = vunpack.c.l.b16 %v2686
    %v3382 = vunpack.c.h.b16 %v2686
    %v3383 = vunpack.c.l.b16 %v2687
    %v3384 = vunpack.c.h.b16 %v2687
    %v3385 = vunpack.c.l.b16 %v2688
    %v3386 = vunpack.c.h.b16 %v2688
    %v3387 = vunpack.c.l.b16 %v2689
    %v3388 = vunpack.c.h.b16 %v2689
    %v3389 = vunpack.c.l.b16 %v2690
    %v3390 = vunpack.c.h.b16 %v2690
    %v3391 = vunpack.c.l.b16 %v2691
    %v3392 = vunpack.c.h.b16 %v2691
    %v3393 = vunpack.c.l.b16 %v2692
    %v3394 = vunpack.c.h.b16 %v2692
    %v3395 = vunpack.c.l.b16 %v2693
    %v3396 = vunpack.c.h.b16 %v2693
    %v3397 = vunpack.c.l.b16 %v2694
    %v3398 = vunpack.c.h.b16 %v2694
    %v3399 = vunpack.c.l.b16 %v2695
    %v3400 = vunpack.c.h.b16 %v2695
    %v3401 = vunpack.c.l.b16 %v2696
    %v3402 = vunpack.c.h.b16 %v2696
    %v3403 = vunpack.c.l.b16 %v2697
    %v3404 = vunpack.c.h.b16 %v2697
    %v3405 = vunpack.c.l.b16 %v2698
    %v3406 = vunpack.c.h.b16 %v2698
    %v3407 = vunpack.c.l.b16 %v2699
    %v3408 = vunpack.c.h.b16 %v2699
    %v3409 = vunpack.c.l.b16 %v2700
    %v3410 = vunpack.c.h.b16 %v2700
    %v3411 = vunpack.c.l.b16 %v2701
    %v3412 = vunpack.c.h.b16 %v2701
    %v3413 = vunpack.c.l.b16 %v2702
    %v3414 = vunpack.c.h.b16 %v2702
    %v3415 = vunpack.c.l.b16 %v2703
    %v3416 = vunpack.c.h.b16 %v2703
    %v3417 = vunpack.c.l.b16 %v2704
    %v3418 = vunpack.c.h.b16 %v2704
    %v3419 = vunpack.c.l.b16 %v2705
    %v3420 = vunpack.c.h.b16 %v2705
    %v3421 = vunpack.c.l.b16 %v2706
    %v3422 = vunpack.c.h.b16 %v2706
    %v3423 = vunpack.c.l.b16 %v2707
    %v3424 = vunpack.c.h.b16 %v2707
    %v3425 = vunpack.c.l.b16 %v2708
    %v3426 = vunpack.c.h.b16 %v2708
    %v3427 = vunpack.c.l.b16 %v2709
    %v3428 = vunpack.c.h.b16 %v2709
    %v3429 = vunpack.c.l.b16 %v2710
    %v3430 = vunpack.c.h.b16 %v2710
    %v3431 = vunpack.c.l.b16 %v2711
    %v3432 = vunpack.c.h.b16 %v2711
    %v3433 = vunpack.c.l.b16 %v2712
    %v3434 = vunpack.c.h.b16 %v2712
    %v3435 = vunpack.c.l.b16 %v2713
    %v3436 = vunpack.c.h.b16 %v2713
    %v3437 = vunpack.c.l.b16 %v2714
    %v3438 = vunpack.c.h.b16 %v2714
    %v3439 = vunpack.c.l.b16 %v2715
    %v3440 = vunpack.c.h.b16 %v2715
    %v3441 = vunpack.c.l.b16 %v2716
    %v3442 = vunpack.c.h.b16 %v2716
    %v3443 = vunpack.c.l.b16 %v2717
    %v3444 = vunpack.c.h.b16 %v2717
    %v3445 = vunpack.c.l.b16 %v2718
    %v3446 = vunpack.c.h.b16 %v2718
    %v3447 = vunpack.c.l.b16 %v2719
    %v3448 = vunpack.c.h.b16 %v2719
    %v3449 = vunpack.c.l.b16 %v2720
    %v3450 = vunpack.c.h.b16 %v2720
    %v3451 = vunpack.c.l.b16 %v2721
    %v3452 = vunpack.c.h.b16 %v2721
    %v3453 = vunpack.c.l.b16 %v2722
    %v3454 = vunpack.c.h.b16 %v2722
    %v3455 = vunpack.c.l.b16 %v2723
    %v3456 = vunpack.c.h.b16 %v2723
    %v3457 = vunpack.c.l.b16 %v2724
    %v3458 = vunpack.c.h.b16 %v2724
    %v3459 = vunpack.c.l.b16 %v2725
    %v3460 = vunpack.c.h.b16 %v2725
    %v3461 = vunpack.c.l.b16 %v2726
    %v3462 = vunpack.c.h.b16 %v2726
    %v3463 = vunpack.c.l.b16 %v2727
    %v3464 = vunpack.c.h.b16 %v2727
    %v3465 = vunpack.c.l.b16 %v2728
    %v3466 = vunpack.c.h.b16 %v2728
    %v3467 = vunpack.c.l.b16 %v2729
    %v3468 = vunpack.c.h.b16 %v2729
    %v3469 = vunpack.c.l.b16 %v2730
    %v3470 = vunpack.c.h.b16 %v2730
    %v3471 = vunpack.c.l.b16 %v2731
    %v3472 = vunpack.c.h.b16 %v2731
    %v3473 = vunpack.c.l.b16 %v2732
    %v3474 = vunpack.c.h.b16 %v2732
    %v3475 = vunpack.c.l.b16 %v2733
    %v3476 = vunpack.c.h.b16 %v2733
    %v3477 = vunpack.c.l.b16 %v2734
    %v3478 = vunpack.c.h.b16 %v2734
    %v3479 = vunpack.c.l.b16 %v2735
    %v3480 = vunpack.c.h.b16 %v2735
    %v3481 = vunpack.c.l.b16 %v2736
    %v3482 = vunpack.c.h.b16 %v2736
    %v3483 = vunpack.c.l.b16 %v2737
    %v3484 = vunpack.c.h.b16 %v2737
    %v3485 = vunpack.c.l.b16 %v2738
    %v3486 = vunpack.c.h.b16 %v2738
    %v3487 = vunpack.c.l.b16 %v2739
    %v3488 = vunpack.c.h.b16 %v2739
    %v3489 = vunpack.c.l.b16 %v2740
    %v3490 = vunpack.c.h.b16 %v2740
    %v3491 = vunpack.c.l.b16 %v2741
    %v3492 = vunpack.c.h.b16 %v2741
    %v3493 = vunpack.c.l.b16 %v2742
    %v3494 = vunpack.c.h.b16 %v2742
    %v3495 = vunpack.c.l.b16 %v2743
    %v3496 = vunpack.c.h.b16 %v2743
    %v3497 = vunpack.c.l.b16 %v2744
    %v3498 = vunpack.c.h.b16 %v2744
    %v3499 = vunpack.c.l.b16 %v2745
    %v3500 = vunpack.c.h.b16 %v2745
    %v3501 = vunpack.c.l.b16 %v2746
    %v3502 = vunpack.c.h.b16 %v2746
    %v3503 = vunpack.c.l.b16 %v2747
    %v3504 = vunpack.c.h.b16 %v2747
    %v3505 = vunpack.c.l.b16 %v2748
    %v3506 = vunpack.c.h.b16 %v2748
    %v3507 = vunpack.c.l.b16 %v2749
    %v3508 = vunpack.c.h.b16 %v2749
    %v3509 = vunpack.c.l.b16 %v2750
    %v3510 = vunpack.c.h.b16 %v2750
    %v3511 = vunpack.c.l.b16 %v2751
    %v3512 = vunpack.c.h.b16 %v2751
    %v3513 = vunpack.c.l.b16 %v2752
    %v3514 = vunpack.c.h.b16 %v2752
    %v3515 = vunpack.c.l.b16 %v2753
    %v3516 = vunpack.c.h.b16 %v2753
    %v3517 = vunpack.c.l.b16 %v2754
    %v3518 = vunpack.c.h.b16 %v2754
    %v3519 = vunpack.c.l.b16 %v2755
    %v3520 = vunpack.c.h.b16 %v2755
    %v3521 = vunpack.c.l.b16 %v2756
    %v3522 = vunpack.c.h.b16 %v2756
    %v3523 = vunpack.c.l.b16 %v2757
    %v3524 = vunpack.c.h.b16 %v2757
    %v3525 = vunpack.c.l.b16 %v2758
    %v3526 = vunpack.c.h.b16 %v2758
    %v3527 = vunpack.c.l.b16 %v2759
    %v3528 = vunpack.c.h.b16 %v2759
    %v3529 = vunpack.c.l.b16 %v2760
    %v3530 = vunpack.c.h.b16 %v2760
    %v3531 = vunpack.c.l.b16 %v2761
    %v3532 = vunpack.c.h.b16 %v2761
    %v3533 = vunpack.c.l.b16 %v2762
    %v3534 = vunpack.c.h.b16 %v2762
    %v3535 = vunpack.c.l.b16 %v2763
    %v3536 = vunpack.c.h.b16 %v2763
    %v3537 = vunpack.c.l.b16 %v2764
    %v3538 = vunpack.c.h.b16 %v2764
    %v3539 = vunpack.c.l.b16 %v2765
    %v3540 = vunpack.c.h.b16 %v2765
    %v3541 = vunpack.c.l.b16 %v2766
    %v3542 = vunpack.c.h.b16 %v2766
    %v3543 = vunpack.c.l.b16 %v2767
    %v3544 = vunpack.c.h.b16 %v2767
    %v3545 = vunpack.c.l.b16 %v2768
    %v3546 = vunpack.c.h.b16 %v2768
    %v3547 = vpack.c.b16 %v3039, %v3035
    %v3548 = vpack.c.b16 %v3040, %v3036
    %v3549 = vpack.c.b16 %v3041, %v3037
    %v3550 = vpack.c.b16 %v3042, %v3038
    %v3551 = vpack.c.b16 %v3047, %v3043
    %v3552 = vpack.c.b16 %v3048, %v3044
    %v3553 = vpack.c.b16 %v3049, %v3045
    %v3554 = vpack.c.b16 %v3050, %v3046
    %v3555 = vpack.c.b16 %v3055, %v3051
    %v3556 = vpack.c.b16 %v3056, %v3052
    %v3557 = vpack.c.b16 %v3057, %v3053
    %v3558 = vpack.c.b16 %v3058, %v3054
    %v3559 = vpack.c.b16 %v3063, %v3059
    %v3560 = vpack.c.b16 %v3064, %v3060
    %v3561 = vpack.c.b16 %v3065, %v3061
    %v3562 = vpack.c.b16 %v3066, %v3062
    %v3563 = vpack.c.b16 %v3071, %v3067
    %v3564 = vpack.c.b16 %v3072, %v3068
    %v3565 = vpack.c.b16 %v3073, %v3069
    %v3566 = vpack.c.b16 %v3074, %v3070
    %v3567 = vpack.c.b16 %v3079, %v3075
    %v3568 = vpack.c.b16 %v3080, %v3076
    %v3569 = vpack.c.b16 %v3081, %v3077
    %v3570 = vpack.c.b16 %v3082, %v3078
    %v3571 = vpack.c.b16 %v3087, %v3083
    %v3572 = vpack.c.b16 %v3088, %v3084
    %v3573 = vpack.c.b16 %v3089, %v3085
    %v3574 = vpack.c.b16 %v3090, %v3086
    %v3575 = vpack.c.b16 %v3095, %v3091
    %v3576 = vpack.c.b16 %v3096, %v3092
    %v3577 = vpack.c.b16 %v3097, %v3093
    %v3578 = vpack.c.b16 %v3098, %v3094
    %v3579 = vpack.c.b16 %v3103, %v3099
    %v3580 = vpack.c.b16 %v3104, %v3100
    %v3581 = vpack.c.b16 %v3105, %v3101
    %v3582 = vpack.c.b16 %v3106, %v3102
    %v3583 = vpack.c.b16 %v3111, %v3107
    %v3584 = vpack.c.b16 %v3112, %v3108
    %v3585 = vpack.c.b16 %v3113, %v3109
    %v3586 = vpack.c.b16 %v3114, %v3110
    %v3587 = vpack.c.b16 %v3119, %v3115
    %v3588 = vpack.c.b16 %v3120, %v3116
    %v3589 = vpack.c.b16 %v3121, %v3117
    %v3590 = vpack.c.b16 %v3122, %v3118
    %v3591 = vpack.c.b16 %v3127, %v3123
    %v3592 = vpack.c.b16 %v3128, %v3124
    %v3593 = vpack.c.b16 %v3129, %v3125
    %v3594 = vpack.c.b16 %v3130, %v3126
    %v3595 = vpack.c.b16 %v3135, %v3131
    %v3596 = vpack.c.b16 %v3136, %v3132
    %v3597 = vpack.c.b16 %v3137, %v3133
    %v3598 = vpack.c.b16 %v3138, %v3134
    %v3599 = vpack.c.b16 %v3143, %v3139
    %v3600 = vpack.c.b16 %v3144, %v3140
    %v3601 = vpack.c.b16 %v3145, %v3141
    %v3602 = vpack.c.b16 %v3146, %v3142
    %v3603 = vpack.c.b16 %v3151, %v3147
    %v3604 = vpack.c.b16 %v3152, %v3148
    %v3605 = vpack.c.b16 %v3153, %v3149
    %v3606 = vpack.c.b16 %v3154, %v3150
    %v3607 = vpack.c.b16 %v3159, %v3155
    %v3608 = vpack.c.b16 %v3160, %v3156
    %v3609 = vpack.c.b16 %v3161, %v3157
    %v3610 = vpack.c.b16 %v3162, %v3158
    %v3611 = vpack.c.b16 %v3167, %v3163
    %v3612 = vpack.c.b16 %v3168, %v3164
    %v3613 = vpack.c.b16 %v3169, %v3165
    %v3614 = vpack.c.b16 %v3170, %v3166
    %v3615 = vpack.c.b16 %v3175, %v3171
    %v3616 = vpack.c.b16 %v3176, %v3172
    %v3617 = vpack.c.b16 %v3177, %v3173
    %v3618 = vpack.c.b16 %v3178, %v3174
    %v3619 = vpack.c.b16 %v3183, %v3179
    %v3620 = vpack.c.b16 %v3184, %v3180
    %v3621 = vpack.c.b16 %v3185, %v3181
    %v3622 = vpack.c.b16 %v3186, %v3182
    %v3623 = vpack.c.b16 %v3191, %v3187
    %v3624 = vpack.c.b16 %v3192, %v3188
    %v3625 = vpack.c.b16 %v3193, %v3189
    %v3626 = vpack.c.b16 %v3194, %v3190
    %v3627 = vpack.c.b16 %v3199, %v3195
    %v3628 = vpack.c.b16 %v3200, %v3196
    %v3629 = vpack.c.b16 %v3201, %v3197
    %v3630 = vpack.c.b16 %v3202, %v3198
    %v3631 = vpack.c.b16 %v3207, %v3203
    %v3632 = vpack.c.b16 %v3208, %v3204
    %v3633 = vpack.c.b16 %v3209, %v3205
    %v3634 = vpack.c.b16 %v3210, %v3206
    %v3635 = vpack.c.b16 %v3215, %v3211
    %v3636 = vpack.c.b16 %v3216, %v3212
    %v3637 = vpack.c.b16 %v3217, %v3213
    %v3638 = vpack.c.b16 %v3218, %v3214
    %v3639 = vpack.c.b16 %v3223, %v3219
    %v3640 = vpack.c.b16 %v3224, %v3220
    %v3641 = vpack.c.b16 %v3225, %v3221
    %v3642 = vpack.c.b16 %v3226, %v3222
    %v3643 = vpack.c.b16 %v3231, %v3227
    %v3644 = vpack.c.b16 %v3232, %v3228
    %v3645 = vpack.c.b16 %v3233, %v3229
    %v3646 = vpack.c.b16 %v3234, %v3230
    %v3647 = vpack.c.b16 %v3239, %v3235
    %v3648 = vpack.c.b16 %v3240, %v3236
    %v3649 = vpack.c.b16 %v3241, %v3237
    %v3650 = vpack.c.b16 %v3242, %v3238
    %v3651 = vpack.c.b16 %v3247, %v3243
    %v3652 = vpack.c.b16 %v3248, %v3244
    %v3653 = vpack.c.b16 %v3249, %v3245
    %v3654 = vpack.c.b16 %v3250, %v3246
    %v3655 = vpack.c.b16 %v3255, %v3251
    %v3656 = vpack.c.b16 %v3256, %v3252
    %v3657 = vpack.c.b16 %v3257, %v3253
    %v3658 = vpack.c.b16 %v3258, %v3254
    %v3659 = vpack.c.b16 %v3263, %v3259
    %v3660 = vpack.c.b16 %v3264, %v3260
    %v3661 = vpack.c.b16 %v3265, %v3261
    %v3662 = vpack.c.b16 %v3266, %v3262
    %v3663 = vpack.c.b16 %v3271, %v3267
    %v3664 = vpack.c.b16 %v3272, %v3268
    %v3665 = vpack.c.b16 %v3273, %v3269
    %v3666 = vpack.c.b16 %v3274, %v3270
    %v3667 = vpack.c.b16 %v3279, %v3275
    %v3668 = vpack.c.b16 %v3280, %v3276
    %v3669 = vpack.c.b16 %v3281, %v3277
    %v3670 = vpack.c.b16 %v3282, %v3278
    %v3671 = vpack.c.b16 %v3287, %v3283
    %v3672 = vpack.c.b16 %v3288, %v3284
    %v3673 = vpack.c.b16 %v3289, %v3285
    %v3674 = vpack.c.b16 %v3290, %v3286
    %v3675 = vpack.c.b16 %v3295, %v3291
    %v3676 = vpack.c.b16 %v3296, %v3292
    %v3677 = vpack.c.b16 %v3297, %v3293
    %v3678 = vpack.c.b16 %v3298, %v3294
    %v3679 = vpack.c.b16 %v3303, %v3299
    %v3680 = vpack.c.b16 %v3304, %v3300
    %v3681 = vpack.c.b16 %v3305, %v3301
    %v3682 = vpack.c.b16 %v3306, %v3302
    %v3683 = vpack.c.b16 %v3311, %v3307
    %v3684 = vpack.c.b16 %v3312, %v3308
    %v3685 = vpack.c.b16 %v3313, %v3309
    %v3686 = vpack.c.b16 %v3314, %v3310
    %v3687 = vpack.c.b16 %v3319, %v3315
    %v3688 = vpack.c.b16 %v3320, %v3316
    %v3689 = vpack.c.b16 %v3321, %v3317
    %v3690 = vpack.c.b16 %v3322, %v3318
    %v3691 = vpack.c.b16 %v3327, %v3323
    %v3692 = vpack.c.b16 %v3328, %v3324
    %v3693 = vpack.c.b16 %v3329, %v3325
    %v3694 = vpack.c.b16 %v3330, %v3326
    %v3695 = vpack.c.b16 %v3335, %v3331
    %v3696 = vpack.c.b16 %v3336, %v3332
    %v3697 = vpack.c.b16 %v3337, %v3333
    %v3698 = vpack.c.b16 %v3338, %v3334
    %v3699 = vpack.c.b16 %v3343, %v3339
    %v3700 = vpack.c.b16 %v3344, %v3340
    %v3701 = vpack.c.b16 %v3345, %v3341
    %v3702 = vpack.c.b16 %v3346, %v3342
    %v3703 = vpack.c.b16 %v3351, %v3347
    %v3704 = vpack.c.b16 %v3352, %v3348
    %v3705 = vpack.c.b16 %v3353, %v3349
    %v3706 = vpack.c.b16 %v3354, %v3350
    %v3707 = vpack.c.b16 %v3359, %v3355
    %v3708 = vpack.c.b16 %v3360, %v3356
    %v3709 = vpack.c.b16 %v3361, %v3357
    %v3710 = vpack.c.b16 %v3362, %v3358
    %v3711 = vpack.c.b16 %v3367, %v3363
    %v3712 = vpack.c.b16 %v3368, %v3364
    %v3713 = vpack.c.b16 %v3369, %v3365
    %v3714 = vpack.c.b16 %v3370, %v3366
    %v3715 = vpack.c.b16 %v3375, %v3371
    %v3716 = vpack.c.b16 %v3376, %v3372
    %v3717 = vpack.c.b16 %v3377, %v3373
    %v3718 = vpack.c.b16 %v3378, %v3374
    %v3719 = vpack.c.b16 %v3383, %v3379
    %v3720 = vpack.c.b16 %v3384, %v3380
    %v3721 = vpack.c.b16 %v3385, %v3381
    %v3722 = vpack.c.b16 %v3386, %v3382
    %v3723 = vpack.c.b16 %v3391, %v3387
    %v3724 = vpack.c.b16 %v3392, %v3388
    %v3725 = vpack.c.b16 %v3393, %v3389
    %v3726 = vpack.c.b16 %v3394, %v3390
    %v3727 = vpack.c.b16 %v3399, %v3395
    %v3728 = vpack.c.b16 %v3400, %v3396
    %v3729 = vpack.c.b16 %v3401, %v3397
    %v3730 = vpack.c.b16 %v3402, %v3398
    %v3731 = vpack.c.b16 %v3407, %v3403
    %v3732 = vpack.c.b16 %v3408, %v3404
    %v3733 = vpack.c.b16 %v3409, %v3405
    %v3734 = vpack.c.b16 %v3410, %v3406
    %v3735 = vpack.c.b16 %v3415, %v3411
    %v3736 = vpack.c.b16 %v3416, %v3412
    %v3737 = vpack.c.b16 %v3417, %v3413
    %v3738 = vpack.c.b16 %v3418, %v3414
    %v3739 = vpack.c.b16 %v3423, %v3419
    %v3740 = vpack.c.b16 %v3424, %v3420
    %v3741 = vpack.c.b16 %v3425, %v3421
    %v3742 = vpack.c.b16 %v3426, %v3422
    %v3743 = vpack.c.b16 %v3431, %v3427
    %v3744 = vpack.c.b16 %v3432, %v3428
    %v3745 = vpack.c.b16 %v3433, %v3429
    %v3746 = vpack.c.b16 %v3434, %v3430
    %v3747 = vpack.c.b16 %v3439, %v3435
    %v3748 = vpack.c.b16 %v3440, %v3436
    %v3749 = vpack.c.b16 %v3441, %v3437
    %v3750 = vpack.c.b16 %v3442, %v3438
    %v3751 = vpack.c.b16 %v3447, %v3443
    %v3752 = vpack.c.b16 %v3448, %v3444
    %v3753 = vpack.c.b16 %v3449, %v3445
    %v3754 = vpack.c.b16 %v3450, %v3446
    %v3755 = vpack.c.b16 %v3455, %v3451
    %v3756 = vpack.c.b16 %v3456, %v3452
    %v3757 = vpack.c.b16 %v3457, %v3453
    %v3758 = vpack.c.b16 %v3458, %v3454
    %v3759 = vpack.c.b16 %v3463, %v3459
    %v3760 = vpack.c.b16 %v3464, %v3460
    %v3761 = vpack.c.b16 %v3465, %v3461
    %v3762 = vpack.c.b16 %v3466, %v3462
    %v3763 = vpack.c.b16 %v3471, %v3467
    %v3764 = vpack.c.b16 %v3472, %v3468
    %v3765 = vpack.c.b16 %v3473, %v3469
    %v3766 = vpack.c.b16 %v3474, %v3470
    %v3767 = vpack.c.b16 %v3479, %v3475
    %v3768 = vpack.c.b16 %v3480, %v3476
    %v3769 = vpack.c.b16 %v3481, %v3477
    %v3770 = vpack.c.b16 %v3482, %v3478
    %v3771 = vpack.c.b16 %v3487, %v3483
    %v3772 = vpack.c.b16 %v3488, %v3484
    %v3773 = vpack.c.b16 %v3489, %v3485
    %v3774 = vpack.c.b16 %v3490, %v3486
    %v3775 = vpack.c.b16 %v3495, %v3491
    %v3776 = vpack.c.b16 %v3496, %v3492
    %v3777 = vpack.c.b16 %v3497, %v3493
    %v3778 = vpack.c.b16 %v3498, %v3494
    %v3779 = vpack.c.b16 %v3503, %v3499
    %v3780 = vpack.c.b16 %v3504, %v3500
    %v3781 = vpack.c.b16 %v3505, %v3501
    %v3782 = vpack.c.b16 %v3506, %v3502
    %v3783 = vpack.c.b16 %v3511, %v3507
    %v3784 = vpack.c.b16 %v3512, %v3508
    %v3785 = vpack.c.b16 %v3513, %v3509
    %v3786 = vpack.c.b16 %v3514, %v3510
    %v3787 = vpack.c.b16 %v3519, %v3515
    %v3788 = vpack.c.b16 %v3520, %v3516
    %v3789 = vpack.c.b16 %v3521, %v3517
    %v3790 = vpack.c.b16 %v3522, %v3518
    %v3791 = vpack.c.b16 %v3527, %v3523
    %v3792 = vpack.c.b16 %v3528, %v3524
    %v3793 = vpack.c.b16 %v3529, %v3525
    %v3794 = vpack.c.b16 %v3530, %v3526
    %v3795 = vpack.c.b16 %v3535, %v3531
    %v3796 = vpack.c.b16 %v3536, %v3532
    %v3797 = vpack.c.b16 %v3537, %v3533
    %v3798 = vpack.c.b16 %v3538, %v3534
    %v3799 = vpack.c.b16 %v3543, %v3539
    %v3800 = vpack.c.b16 %v3544, %v3540
    %v3801 = vpack.c.b16 %v3545, %v3541
    %v3802 = vpack.c.b16 %v3546, %v3542
    %4059 = vmatpush.bf16.msra.mxu0 %v3575
    %4060 = vmatpush.bf16.msra.mxu0 %v3571
    %4061 = vmatpush.bf16.msra.mxu0 %v3567
    %4062 = vmatpush.bf16.msra.mxu0 %v3563
    %4063 = vmatpush.bf16.msra.mxu0 %v3559
    %4064 = vmatpush.bf16.msra.mxu0 %v3555
    %4065 = vmatpush.bf16.msra.mxu0 %v3551
    %4066 = vmatpush.bf16.msra.mxu0 %v3547
    %4067 = vmatmul.bf16.gmra.mxu0 %v2481
    %v4068 = vpop.f32.mrf.mxu0
    %v4069 = vadd.f32 %v2771, %v4068
    %v4070 = vpop.f32.mrf.mxu0
    %v4071 = vadd.f32 %v2771, %v4070
    %4072 = vmatmul.bf16.gmra.mxu0 %v2489
    %v4073 = vpop.f32.mrf.mxu0
    %v4074 = vadd.f32 %v2771, %v4073
    %v4075 = vpop.f32.mrf.mxu0
    %v4076 = vadd.f32 %v2771, %v4075
    %4077 = vmatmul.bf16.gmra.mxu0 %v2497
    %v4078 = vpop.f32.mrf.mxu0
    %v4079 = vadd.f32 %v2771, %v4078
    %v4080 = vpop.f32.mrf.mxu0
    %v4081 = vadd.f32 %v2771, %v4080
    %4082 = vmatmul.bf16.gmra.mxu0 %v2505
    %v4083 = vpop.f32.mrf.mxu0
    %v4084 = vadd.f32 %v2771, %v4083
    %v4085 = vpop.f32.mrf.mxu0
    %v4086 = vadd.f32 %v2771, %v4085
    %4087 = vdwg.mxu0
    %4088 = vmatpush.bf16.msra.mxu0 %v3607
    %4089 = vmatpush.bf16.msra.mxu0 %v3603
    %4090 = vmatpush.bf16.msra.mxu0 %v3599
    %4091 = vmatpush.bf16.msra.mxu0 %v3595
    %4092 = vmatpush.bf16.msra.mxu0 %v3591
    %4093 = vmatpush.bf16.msra.mxu0 %v3587
    %4094 = vmatpush.bf16.msra.mxu0 %v3583
    %4095 = vmatpush.bf16.msra.mxu0 %v3579
    %4096 = vmatmul.bf16.gmra.mxu0 %v2482
    %v4097 = vpop.f32.mrf.mxu0
    %v4098 = vadd.f32 %v4069, %v4097
    %v4099 = vpop.f32.mrf.mxu0
    %v4100 = vadd.f32 %v4071, %v4099
    %4101 = vmatmul.bf16.gmra.mxu0 %v2490
    %v4102 = vpop.f32.mrf.mxu0
    %v4103 = vadd.f32 %v4074, %v4102
    %v4104 = vpop.f32.mrf.mxu0
    %v4105 = vadd.f32 %v4076, %v4104
    %4106 = vmatmul.bf16.gmra.mxu0 %v2498
    %v4107 = vpop.f32.mrf.mxu0
    %v4108 = vadd.f32 %v4079, %v4107
    %v4109 = vpop.f32.mrf.mxu0
    %v4110 = vadd.f32 %v4081, %v4109
    %4111 = vmatmul.bf16.gmra.mxu0 %v2506
    %v4112 = vpop.f32.mrf.mxu0
    %v4113 = vadd.f32 %v4084, %v4112
    %v4114 = vpop.f32.mrf.mxu0
    %v4115 = vadd.f32 %v4086, %v4114
    %4116 = vdwg.mxu0
    %4117 = vmatpush.bf16.msra.mxu0 %v3639
    %4118 = vmatpush.bf16.msra.mxu0 %v3635
    %4119 = vmatpush.bf16.msra.mxu0 %v3631
    %4120 = vmatpush.bf16.msra.mxu0 %v3627
    %4121 = vmatpush.bf16.msra.mxu0 %v3623
    %4122 = vmatpush.bf16.msra.mxu0 %v3619
    %4123 = vmatpush.bf16.msra.mxu0 %v3615
    %4124 = vmatpush.bf16.msra.mxu0 %v3611
    %4125 = vmatmul.bf16.gmra.mxu0 %v2483
    %v4126 = vpop.f32.mrf.mxu0
    %v4127 = vadd.f32 %v4098, %v4126
    %v4128 = vpop.f32.mrf.mxu0
    %v4129 = vadd.f32 %v4100, %v4128
    %4130 = vmatmul.bf16.gmra.mxu0 %v2491
    %v4131 = vpop.f32.mrf.mxu0
    %v4132 = vadd.f32 %v4103, %v4131
    %v4133 = vpop.f32.mrf.mxu0
    %v4134 = vadd.f32 %v4105, %v4133
    %4135 = vmatmul.bf16.gmra.mxu0 %v2499
    %v4136 = vpop.f32.mrf.mxu0
    %v4137 = vadd.f32 %v4108, %v4136
    %v4138 = vpop.f32.mrf.mxu0
    %v4139 = vadd.f32 %v4110, %v4138
    %4140 = vmatmul.bf16.gmra.mxu0 %v2507
    %v4141 = vpop.f32.mrf.mxu0
    %v4142 = vadd.f32 %v4113, %v4141
    %v4143 = vpop.f32.mrf.mxu0
    %v4144 = vadd.f32 %v4115, %v4143
    %4145 = vdwg.mxu0
    %4146 = vmatpush.bf16.msra.mxu0 %v3671
    %4147 = vmatpush.bf16.msra.mxu0 %v3667
    %4148 = vmatpush.bf16.msra.mxu0 %v3663
    %4149 = vmatpush.bf16.msra.mxu0 %v3659
    %4150 = vmatpush.bf16.msra.mxu0 %v3655
    %4151 = vmatpush.bf16.msra.mxu0 %v3651
    %4152 = vmatpush.bf16.msra.mxu0 %v3647
    %4153 = vmatpush.bf16.msra.mxu0 %v3643
    %4154 = vmatmul.bf16.gmra.mxu0 %v2484
    %v4155 = vpop.f32.mrf.mxu0
    %v4156 = vadd.f32 %v4127, %v4155
    %v4157 = vpop.f32.mrf.mxu0
    %v4158 = vadd.f32 %v4129, %v4157
    %4159 = vmatmul.bf16.gmra.mxu0 %v2492
    %v4160 = vpop.f32.mrf.mxu0
    %v4161 = vadd.f32 %v4132, %v4160
    %v4162 = vpop.f32.mrf.mxu0
    %v4163 = vadd.f32 %v4134, %v4162
    %4164 = vmatmul.bf16.gmra.mxu0 %v2500
    %v4165 = vpop.f32.mrf.mxu0
    %v4166 = vadd.f32 %v4137, %v4165
    %v4167 = vpop.f32.mrf.mxu0
    %v4168 = vadd.f32 %v4139, %v4167
    %4169 = vmatmul.bf16.gmra.mxu0 %v2508
    %v4170 = vpop.f32.mrf.mxu0
    %v4171 = vadd.f32 %v4142, %v4170
    %v4172 = vpop.f32.mrf.mxu0
    %v4173 = vadd.f32 %v4144, %v4172
    %4174 = vdwg.mxu0
    %4175 = vmatpush.bf16.msra.mxu0 %v3703
    %4176 = vmatpush.bf16.msra.mxu0 %v3699
    %4177 = vmatpush.bf16.msra.mxu0 %v3695
    %4178 = vmatpush.bf16.msra.mxu0 %v3691
    %4179 = vmatpush.bf16.msra.mxu0 %v3687
    %4180 = vmatpush.bf16.msra.mxu0 %v3683
    %4181 = vmatpush.bf16.msra.mxu0 %v3679
    %4182 = vmatpush.bf16.msra.mxu0 %v3675
    %4183 = vmatmul.bf16.gmra.mxu0 %v2485
    %v4184 = vpop.f32.mrf.mxu0
    %v4185 = vadd.f32 %v4156, %v4184
    %v4186 = vpop.f32.mrf.mxu0
    %v4187 = vadd.f32 %v4158, %v4186
    %4188 = vmatmul.bf16.gmra.mxu0 %v2493
    %v4189 = vpop.f32.mrf.mxu0
    %v4190 = vadd.f32 %v4161, %v4189
    %v4191 = vpop.f32.mrf.mxu0
    %v4192 = vadd.f32 %v4163, %v4191
    %4193 = vmatmul.bf16.gmra.mxu0 %v2501
    %v4194 = vpop.f32.mrf.mxu0
    %v4195 = vadd.f32 %v4166, %v4194
    %v4196 = vpop.f32.mrf.mxu0
    %v4197 = vadd.f32 %v4168, %v4196
    %4198 = vmatmul.bf16.gmra.mxu0 %v2509
    %v4199 = vpop.f32.mrf.mxu0
    %v4200 = vadd.f32 %v4171, %v4199
    %v4201 = vpop.f32.mrf.mxu0
    %v4202 = vadd.f32 %v4173, %v4201
    %4203 = vdwg.mxu0
    %4204 = vmatpush.bf16.msra.mxu0 %v3735
    %4205 = vmatpush.bf16.msra.mxu0 %v3731
    %4206 = vmatpush.bf16.msra.mxu0 %v3727
    %4207 = vmatpush.bf16.msra.mxu0 %v3723
    %4208 = vmatpush.bf16.msra.mxu0 %v3719
    %4209 = vmatpush.bf16.msra.mxu0 %v3715
    %4210 = vmatpush.bf16.msra.mxu0 %v3711
    %4211 = vmatpush.bf16.msra.mxu0 %v3707
    %4212 = vmatmul.bf16.gmra.mxu0 %v2486
    %v4213 = vpop.f32.mrf.mxu0
    %v4214 = vadd.f32 %v4185, %v4213
    %v4215 = vpop.f32.mrf.mxu0
    %v4216 = vadd.f32 %v4187, %v4215
    %4217 = vmatmul.bf16.gmra.mxu0 %v2494
    %v4218 = vpop.f32.mrf.mxu0
    %v4219 = vadd.f32 %v4190, %v4218
    %v4220 = vpop.f32.mrf.mxu0
    %v4221 = vadd.f32 %v4192, %v4220
    %4222 = vmatmul.bf16.gmra.mxu0 %v2502
    %v4223 = vpop.f32.mrf.mxu0
    %v4224 = vadd.f32 %v4195, %v4223
    %v4225 = vpop.f32.mrf.mxu0
    %v4226 = vadd.f32 %v4197, %v4225
    %4227 = vmatmul.bf16.gmra.mxu0 %v2510
    %v4228 = vpop.f32.mrf.mxu0
    %v4229 = vadd.f32 %v4200, %v4228
    %v4230 = vpop.f32.mrf.mxu0
    %v4231 = vadd.f32 %v4202, %v4230
    %4232 = vdwg.mxu0
    %4233 = vmatpush.bf16.msra.mxu0 %v3767
    %4234 = vmatpush.bf16.msra.mxu0 %v3763
    %4235 = vmatpush.bf16.msra.mxu0 %v3759
    %4236 = vmatpush.bf16.msra.mxu0 %v3755
    %4237 = vmatpush.bf16.msra.mxu0 %v3751
    %4238 = vmatpush.bf16.msra.mxu0 %v3747
    %4239 = vmatpush.bf16.msra.mxu0 %v3743
    %4240 = vmatpush.bf16.msra.mxu0 %v3739
    %4241 = vmatmul.bf16.gmra.mxu0 %v2487
    %v4242 = vpop.f32.mrf.mxu0
    %v4243 = vadd.f32 %v4214, %v4242
    %v4244 = vpop.f32.mrf.mxu0
    %v4245 = vadd.f32 %v4216, %v4244
    %4246 = vmatmul.bf16.gmra.mxu0 %v2495
    %v4247 = vpop.f32.mrf.mxu0
    %v4248 = vadd.f32 %v4219, %v4247
    %v4249 = vpop.f32.mrf.mxu0
    %v4250 = vadd.f32 %v4221, %v4249
    %4251 = vmatmul.bf16.gmra.mxu0 %v2503
    %v4252 = vpop.f32.mrf.mxu0
    %v4253 = vadd.f32 %v4224, %v4252
    %v4254 = vpop.f32.mrf.mxu0
    %v4255 = vadd.f32 %v4226, %v4254
    %4256 = vmatmul.bf16.gmra.mxu0 %v2511
    %v4257 = vpop.f32.mrf.mxu0
    %v4258 = vadd.f32 %v4229, %v4257
    %v4259 = vpop.f32.mrf.mxu0
    %v4260 = vadd.f32 %v4231, %v4259
    %4261 = vdwg.mxu0
    %4262 = vmatpush.bf16.msra.mxu0 %v3799
    %4263 = vmatpush.bf16.msra.mxu0 %v3795
    %4264 = vmatpush.bf16.msra.mxu0 %v3791
    %4265 = vmatpush.bf16.msra.mxu0 %v3787
    %4266 = vmatpush.bf16.msra.mxu0 %v3783
    %4267 = vmatpush.bf16.msra.mxu0 %v3779
    %4268 = vmatpush.bf16.msra.mxu0 %v3775
    %4269 = vmatpush.bf16.msra.mxu0 %v3771
    %4270 = vmatmul.bf16.gmra.mxu0 %v2488
    %v4271 = vpop.f32.mrf.mxu0
    %v4272 = vadd.f32 %v4243, %v4271
    %v4273 = vpop.f32.mrf.mxu0
    %v4274 = vadd.f32 %v4245, %v4273
    %4275 = vmatmul.bf16.gmra.mxu0 %v2496
    %v4276 = vpop.f32.mrf.mxu0
    %v4277 = vadd.f32 %v4248, %v4276
    %v4278 = vpop.f32.mrf.mxu0
    %v4279 = vadd.f32 %v4250, %v4278
    %4280 = vmatmul.bf16.gmra.mxu0 %v2504
    %v4281 = vpop.f32.mrf.mxu0
    %v4282 = vadd.f32 %v4253, %v4281
    %v4283 = vpop.f32.mrf.mxu0
    %v4284 = vadd.f32 %v4255, %v4283
    %4285 = vmatmul.bf16.gmra.mxu0 %v2512
    %v4286 = vpop.f32.mrf.mxu0
    %v4287 = vadd.f32 %v4258, %v4286
    %v4288 = vpop.f32.mrf.mxu0
    %v4289 = vadd.f32 %v4260, %v4288
    %4290 = vdwg.mxu0
    %4291 = vmatpush.bf16.msra.mxu0 %v3576
    %4292 = vmatpush.bf16.msra.mxu0 %v3572
    %4293 = vmatpush.bf16.msra.mxu0 %v3568
    %4294 = vmatpush.bf16.msra.mxu0 %v3564
    %4295 = vmatpush.bf16.msra.mxu0 %v3560
    %4296 = vmatpush.bf16.msra.mxu0 %v3556
    %4297 = vmatpush.bf16.msra.mxu0 %v3552
    %4298 = vmatpush.bf16.msra.mxu0 %v3548
    %4299 = vmatmul.bf16.gmra.mxu0 %v2481
    %v4300 = vpop.f32.mrf.mxu0
    %v4301 = vadd.f32 %v2772, %v4300
    %v4302 = vpop.f32.mrf.mxu0
    %v4303 = vadd.f32 %v2772, %v4302
    %4304 = vmatmul.bf16.gmra.mxu0 %v2489
    %v4305 = vpop.f32.mrf.mxu0
    %v4306 = vadd.f32 %v2772, %v4305
    %v4307 = vpop.f32.mrf.mxu0
    %v4308 = vadd.f32 %v2772, %v4307
    %4309 = vmatmul.bf16.gmra.mxu0 %v2497
    %v4310 = vpop.f32.mrf.mxu0
    %v4311 = vadd.f32 %v2772, %v4310
    %v4312 = vpop.f32.mrf.mxu0
    %v4313 = vadd.f32 %v2772, %v4312
    %4314 = vmatmul.bf16.gmra.mxu0 %v2505
    %v4315 = vpop.f32.mrf.mxu0
    %v4316 = vadd.f32 %v2772, %v4315
    %v4317 = vpop.f32.mrf.mxu0
    %v4318 = vadd.f32 %v2772, %v4317
    %4319 = vdwg.mxu0
    %4320 = vmatpush.bf16.msra.mxu0 %v3608
    %4321 = vmatpush.bf16.msra.mxu0 %v3604
    %4322 = vmatpush.bf16.msra.mxu0 %v3600
    %4323 = vmatpush.bf16.msra.mxu0 %v3596
    %4324 = vmatpush.bf16.msra.mxu0 %v3592
    %4325 = vmatpush.bf16.msra.mxu0 %v3588
    %4326 = vmatpush.bf16.msra.mxu0 %v3584
    %4327 = vmatpush.bf16.msra.mxu0 %v3580
    %4328 = vmatmul.bf16.gmra.mxu0 %v2482
    %v4329 = vpop.f32.mrf.mxu0
    %v4330 = vadd.f32 %v4301, %v4329
    %v4331 = vpop.f32.mrf.mxu0
    %v4332 = vadd.f32 %v4303, %v4331
    %4333 = vmatmul.bf16.gmra.mxu0 %v2490
    %v4334 = vpop.f32.mrf.mxu0
    %v4335 = vadd.f32 %v4306, %v4334
    %v4336 = vpop.f32.mrf.mxu0
    %v4337 = vadd.f32 %v4308, %v4336
    %4338 = vmatmul.bf16.gmra.mxu0 %v2498
    %v4339 = vpop.f32.mrf.mxu0
    %v4340 = vadd.f32 %v4311, %v4339
    %v4341 = vpop.f32.mrf.mxu0
    %v4342 = vadd.f32 %v4313, %v4341
    %4343 = vmatmul.bf16.gmra.mxu0 %v2506
    %v4344 = vpop.f32.mrf.mxu0
    %v4345 = vadd.f32 %v4316, %v4344
    %v4346 = vpop.f32.mrf.mxu0
    %v4347 = vadd.f32 %v4318, %v4346
    %4348 = vdwg.mxu0
    %4349 = vmatpush.bf16.msra.mxu0 %v3640
    %4350 = vmatpush.bf16.msra.mxu0 %v3636
    %4351 = vmatpush.bf16.msra.mxu0 %v3632
    %4352 = vmatpush.bf16.msra.mxu0 %v3628
    %4353 = vmatpush.bf16.msra.mxu0 %v3624
    %4354 = vmatpush.bf16.msra.mxu0 %v3620
    %4355 = vmatpush.bf16.msra.mxu0 %v3616
    %4356 = vmatpush.bf16.msra.mxu0 %v3612
    %4357 = vmatmul.bf16.gmra.mxu0 %v2483
    %v4358 = vpop.f32.mrf.mxu0
    %v4359 = vadd.f32 %v4330, %v4358
    %v4360 = vpop.f32.mrf.mxu0
    %v4361 = vadd.f32 %v4332, %v4360
    %4362 = vmatmul.bf16.gmra.mxu0 %v2491
    %v4363 = vpop.f32.mrf.mxu0
    %v4364 = vadd.f32 %v4335, %v4363
    %v4365 = vpop.f32.mrf.mxu0
    %v4366 = vadd.f32 %v4337, %v4365
    %4367 = vmatmul.bf16.gmra.mxu0 %v2499
    %v4368 = vpop.f32.mrf.mxu0
    %v4369 = vadd.f32 %v4340, %v4368
    %v4370 = vpop.f32.mrf.mxu0
    %v4371 = vadd.f32 %v4342, %v4370
    %4372 = vmatmul.bf16.gmra.mxu0 %v2507
    %v4373 = vpop.f32.mrf.mxu0
    %v4374 = vadd.f32 %v4345, %v4373
    %v4375 = vpop.f32.mrf.mxu0
    %v4376 = vadd.f32 %v4347, %v4375
    %4377 = vdwg.mxu0
    %4378 = vmatpush.bf16.msra.mxu0 %v3672
    %4379 = vmatpush.bf16.msra.mxu0 %v3668
    %4380 = vmatpush.bf16.msra.mxu0 %v3664
    %4381 = vmatpush.bf16.msra.mxu0 %v3660
    %4382 = vmatpush.bf16.msra.mxu0 %v3656
    %4383 = vmatpush.bf16.msra.mxu0 %v3652
    %4384 = vmatpush.bf16.msra.mxu0 %v3648
    %4385 = vmatpush.bf16.msra.mxu0 %v3644
    %4386 = vmatmul.bf16.gmra.mxu0 %v2484
    %v4387 = vpop.f32.mrf.mxu0
    %v4388 = vadd.f32 %v4359, %v4387
    %v4389 = vpop.f32.mrf.mxu0
    %v4390 = vadd.f32 %v4361, %v4389
    %4391 = vmatmul.bf16.gmra.mxu0 %v2492
    %v4392 = vpop.f32.mrf.mxu0
    %v4393 = vadd.f32 %v4364, %v4392
    %v4394 = vpop.f32.mrf.mxu0
    %v4395 = vadd.f32 %v4366, %v4394
    %4396 = vmatmul.bf16.gmra.mxu0 %v2500
    %v4397 = vpop.f32.mrf.mxu0
    %v4398 = vadd.f32 %v4369, %v4397
    %v4399 = vpop.f32.mrf.mxu0
    %v4400 = vadd.f32 %v4371, %v4399
    %4401 = vmatmul.bf16.gmra.mxu0 %v2508
    %v4402 = vpop.f32.mrf.mxu0
    %v4403 = vadd.f32 %v4374, %v4402
    %v4404 = vpop.f32.mrf.mxu0
    %v4405 = vadd.f32 %v4376, %v4404
    %4406 = vdwg.mxu0
    %4407 = vmatpush.bf16.msra.mxu0 %v3704
    %4408 = vmatpush.bf16.msra.mxu0 %v3700
    %4409 = vmatpush.bf16.msra.mxu0 %v3696
    %4410 = vmatpush.bf16.msra.mxu0 %v3692
    %4411 = vmatpush.bf16.msra.mxu0 %v3688
    %4412 = vmatpush.bf16.msra.mxu0 %v3684
    %4413 = vmatpush.bf16.msra.mxu0 %v3680
    %4414 = vmatpush.bf16.msra.mxu0 %v3676
    %4415 = vmatmul.bf16.gmra.mxu0 %v2485
    %v4416 = vpop.f32.mrf.mxu0
    %v4417 = vadd.f32 %v4388, %v4416
    %v4418 = vpop.f32.mrf.mxu0
    %v4419 = vadd.f32 %v4390, %v4418
    %4420 = vmatmul.bf16.gmra.mxu0 %v2493
    %v4421 = vpop.f32.mrf.mxu0
    %v4422 = vadd.f32 %v4393, %v4421
    %v4423 = vpop.f32.mrf.mxu0
    %v4424 = vadd.f32 %v4395, %v4423
    %4425 = vmatmul.bf16.gmra.mxu0 %v2501
    %v4426 = vpop.f32.mrf.mxu0
    %v4427 = vadd.f32 %v4398, %v4426
    %v4428 = vpop.f32.mrf.mxu0
    %v4429 = vadd.f32 %v4400, %v4428
    %4430 = vmatmul.bf16.gmra.mxu0 %v2509
    %v4431 = vpop.f32.mrf.mxu0
    %v4432 = vadd.f32 %v4403, %v4431
    %v4433 = vpop.f32.mrf.mxu0
    %v4434 = vadd.f32 %v4405, %v4433
    %4435 = vdwg.mxu0
    %4436 = vmatpush.bf16.msra.mxu0 %v3736
    %4437 = vmatpush.bf16.msra.mxu0 %v3732
    %4438 = vmatpush.bf16.msra.mxu0 %v3728
    %4439 = vmatpush.bf16.msra.mxu0 %v3724
    %4440 = vmatpush.bf16.msra.mxu0 %v3720
    %4441 = vmatpush.bf16.msra.mxu0 %v3716
    %4442 = vmatpush.bf16.msra.mxu0 %v3712
    %4443 = vmatpush.bf16.msra.mxu0 %v3708
    %4444 = vmatmul.bf16.gmra.mxu0 %v2486
    %v4445 = vpop.f32.mrf.mxu0
    %v4446 = vadd.f32 %v4417, %v4445
    %v4447 = vpop.f32.mrf.mxu0
    %v4448 = vadd.f32 %v4419, %v4447
    %4449 = vmatmul.bf16.gmra.mxu0 %v2494
    %v4450 = vpop.f32.mrf.mxu0
    %v4451 = vadd.f32 %v4422, %v4450
    %v4452 = vpop.f32.mrf.mxu0
    %v4453 = vadd.f32 %v4424, %v4452
    %4454 = vmatmul.bf16.gmra.mxu0 %v2502
    %v4455 = vpop.f32.mrf.mxu0
    %v4456 = vadd.f32 %v4427, %v4455
    %v4457 = vpop.f32.mrf.mxu0
    %v4458 = vadd.f32 %v4429, %v4457
    %4459 = vmatmul.bf16.gmra.mxu0 %v2510
    %v4460 = vpop.f32.mrf.mxu0
    %v4461 = vadd.f32 %v4432, %v4460
    %v4462 = vpop.f32.mrf.mxu0
    %v4463 = vadd.f32 %v4434, %v4462
    %4464 = vdwg.mxu0
    %4465 = vmatpush.bf16.msra.mxu0 %v3768
    %4466 = vmatpush.bf16.msra.mxu0 %v3764
    %4467 = vmatpush.bf16.msra.mxu0 %v3760
    %4468 = vmatpush.bf16.msra.mxu0 %v3756
    %4469 = vmatpush.bf16.msra.mxu0 %v3752
    %4470 = vmatpush.bf16.msra.mxu0 %v3748
    %4471 = vmatpush.bf16.msra.mxu0 %v3744
    %4472 = vmatpush.bf16.msra.mxu0 %v3740
    %4473 = vmatmul.bf16.gmra.mxu0 %v2487
    %v4474 = vpop.f32.mrf.mxu0
    %v4475 = vadd.f32 %v4446, %v4474
    %v4476 = vpop.f32.mrf.mxu0
    %v4477 = vadd.f32 %v4448, %v4476
    %4478 = vmatmul.bf16.gmra.mxu0 %v2495
    %v4479 = vpop.f32.mrf.mxu0
    %v4480 = vadd.f32 %v4451, %v4479
    %v4481 = vpop.f32.mrf.mxu0
    %v4482 = vadd.f32 %v4453, %v4481
    %4483 = vmatmul.bf16.gmra.mxu0 %v2503
    %v4484 = vpop.f32.mrf.mxu0
    %v4485 = vadd.f32 %v4456, %v4484
    %v4486 = vpop.f32.mrf.mxu0
    %v4487 = vadd.f32 %v4458, %v4486
    %4488 = vmatmul.bf16.gmra.mxu0 %v2511
    %v4489 = vpop.f32.mrf.mxu0
    %v4490 = vadd.f32 %v4461, %v4489
    %v4491 = vpop.f32.mrf.mxu0
    %v4492 = vadd.f32 %v4463, %v4491
    %4493 = vdwg.mxu0
    %4494 = vmatpush.bf16.msra.mxu0 %v3800
    %4495 = vmatpush.bf16.msra.mxu0 %v3796
    %4496 = vmatpush.bf16.msra.mxu0 %v3792
    %4497 = vmatpush.bf16.msra.mxu0 %v3788
    %4498 = vmatpush.bf16.msra.mxu0 %v3784
    %4499 = vmatpush.bf16.msra.mxu0 %v3780
    %4500 = vmatpush.bf16.msra.mxu0 %v3776
    %4501 = vmatpush.bf16.msra.mxu0 %v3772
    %4502 = vmatmul.bf16.gmra.mxu0 %v2488
    %v4503 = vpop.f32.mrf.mxu0
    %v4504 = vadd.f32 %v4475, %v4503
    %v4505 = vpop.f32.mrf.mxu0
    %v4506 = vadd.f32 %v4477, %v4505
    %4507 = vmatmul.bf16.gmra.mxu0 %v2496
    %v4508 = vpop.f32.mrf.mxu0
    %v4509 = vadd.f32 %v4480, %v4508
    %v4510 = vpop.f32.mrf.mxu0
    %v4511 = vadd.f32 %v4482, %v4510
    %4512 = vmatmul.bf16.gmra.mxu0 %v2504
    %v4513 = vpop.f32.mrf.mxu0
    %v4514 = vadd.f32 %v4485, %v4513
    %v4515 = vpop.f32.mrf.mxu0
    %v4516 = vadd.f32 %v4487, %v4515
    %4517 = vmatmul.bf16.gmra.mxu0 %v2512
    %v4518 = vpop.f32.mrf.mxu0
    %v4519 = vadd.f32 %v4490, %v4518
    %v4520 = vpop.f32.mrf.mxu0
    %v4521 = vadd.f32 %v4492, %v4520
    %4522 = vdwg.mxu0
    %4523 = vmatpush.bf16.msra.mxu0 %v3577
    %4524 = vmatpush.bf16.msra.mxu0 %v3573
    %4525 = vmatpush.bf16.msra.mxu0 %v3569
    %4526 = vmatpush.bf16.msra.mxu0 %v3565
    %4527 = vmatpush.bf16.msra.mxu0 %v3561
    %4528 = vmatpush.bf16.msra.mxu0 %v3557
    %4529 = vmatpush.bf16.msra.mxu0 %v3553
    %4530 = vmatpush.bf16.msra.mxu0 %v3549
    %4531 = vmatmul.bf16.gmra.mxu0 %v2481
    %v4532 = vpop.f32.mrf.mxu0
    %v4533 = vadd.f32 %v2773, %v4532
    %v4534 = vpop.f32.mrf.mxu0
    %v4535 = vadd.f32 %v2773, %v4534
    %4536 = vmatmul.bf16.gmra.mxu0 %v2489
    %v4537 = vpop.f32.mrf.mxu0
    %v4538 = vadd.f32 %v2773, %v4537
    %v4539 = vpop.f32.mrf.mxu0
    %v4540 = vadd.f32 %v2773, %v4539
    %4541 = vmatmul.bf16.gmra.mxu0 %v2497
    %v4542 = vpop.f32.mrf.mxu0
    %v4543 = vadd.f32 %v2773, %v4542
    %v4544 = vpop.f32.mrf.mxu0
    %v4545 = vadd.f32 %v2773, %v4544
    %4546 = vmatmul.bf16.gmra.mxu0 %v2505
    %v4547 = vpop.f32.mrf.mxu0
    %v4548 = vadd.f32 %v2773, %v4547
    %v4549 = vpop.f32.mrf.mxu0
    %v4550 = vadd.f32 %v2773, %v4549
    %4551 = vdwg.mxu0
    %4552 = vmatpush.bf16.msra.mxu0 %v3609
    %4553 = vmatpush.bf16.msra.mxu0 %v3605
    %4554 = vmatpush.bf16.msra.mxu0 %v3601
    %4555 = vmatpush.bf16.msra.mxu0 %v3597
    %4556 = vmatpush.bf16.msra.mxu0 %v3593
    %4557 = vmatpush.bf16.msra.mxu0 %v3589
    %4558 = vmatpush.bf16.msra.mxu0 %v3585
    %4559 = vmatpush.bf16.msra.mxu0 %v3581
    %4560 = vmatmul.bf16.gmra.mxu0 %v2482
    %v4561 = vpop.f32.mrf.mxu0
    %v4562 = vadd.f32 %v4533, %v4561
    %v4563 = vpop.f32.mrf.mxu0
    %v4564 = vadd.f32 %v4535, %v4563
    %4565 = vmatmul.bf16.gmra.mxu0 %v2490
    %v4566 = vpop.f32.mrf.mxu0
    %v4567 = vadd.f32 %v4538, %v4566
    %v4568 = vpop.f32.mrf.mxu0
    %v4569 = vadd.f32 %v4540, %v4568
    %4570 = vmatmul.bf16.gmra.mxu0 %v2498
    %v4571 = vpop.f32.mrf.mxu0
    %v4572 = vadd.f32 %v4543, %v4571
    %v4573 = vpop.f32.mrf.mxu0
    %v4574 = vadd.f32 %v4545, %v4573
    %4575 = vmatmul.bf16.gmra.mxu0 %v2506
    %v4576 = vpop.f32.mrf.mxu0
    %v4577 = vadd.f32 %v4548, %v4576
    %v4578 = vpop.f32.mrf.mxu0
    %v4579 = vadd.f32 %v4550, %v4578
    %4580 = vdwg.mxu0
    %4581 = vmatpush.bf16.msra.mxu0 %v3641
    %4582 = vmatpush.bf16.msra.mxu0 %v3637
    %4583 = vmatpush.bf16.msra.mxu0 %v3633
    %4584 = vmatpush.bf16.msra.mxu0 %v3629
    %4585 = vmatpush.bf16.msra.mxu0 %v3625
    %4586 = vmatpush.bf16.msra.mxu0 %v3621
    %4587 = vmatpush.bf16.msra.mxu0 %v3617
    %4588 = vmatpush.bf16.msra.mxu0 %v3613
    %4589 = vmatmul.bf16.gmra.mxu0 %v2483
    %v4590 = vpop.f32.mrf.mxu0
    %v4591 = vadd.f32 %v4562, %v4590
    %v4592 = vpop.f32.mrf.mxu0
    %v4593 = vadd.f32 %v4564, %v4592
    %4594 = vmatmul.bf16.gmra.mxu0 %v2491
    %v4595 = vpop.f32.mrf.mxu0
    %v4596 = vadd.f32 %v4567, %v4595
    %v4597 = vpop.f32.mrf.mxu0
    %v4598 = vadd.f32 %v4569, %v4597
    %4599 = vmatmul.bf16.gmra.mxu0 %v2499
    %v4600 = vpop.f32.mrf.mxu0
    %v4601 = vadd.f32 %v4572, %v4600
    %v4602 = vpop.f32.mrf.mxu0
    %v4603 = vadd.f32 %v4574, %v4602
    %4604 = vmatmul.bf16.gmra.mxu0 %v2507
    %v4605 = vpop.f32.mrf.mxu0
    %v4606 = vadd.f32 %v4577, %v4605
    %v4607 = vpop.f32.mrf.mxu0
    %v4608 = vadd.f32 %v4579, %v4607
    %4609 = vdwg.mxu0
    %4610 = vmatpush.bf16.msra.mxu0 %v3673
    %4611 = vmatpush.bf16.msra.mxu0 %v3669
    %4612 = vmatpush.bf16.msra.mxu0 %v3665
    %4613 = vmatpush.bf16.msra.mxu0 %v3661
    %4614 = vmatpush.bf16.msra.mxu0 %v3657
    %4615 = vmatpush.bf16.msra.mxu0 %v3653
    %4616 = vmatpush.bf16.msra.mxu0 %v3649
    %4617 = vmatpush.bf16.msra.mxu0 %v3645
    %4618 = vmatmul.bf16.gmra.mxu0 %v2484
    %v4619 = vpop.f32.mrf.mxu0
    %v4620 = vadd.f32 %v4591, %v4619
    %v4621 = vpop.f32.mrf.mxu0
    %v4622 = vadd.f32 %v4593, %v4621
    %4623 = vmatmul.bf16.gmra.mxu0 %v2492
    %v4624 = vpop.f32.mrf.mxu0
    %v4625 = vadd.f32 %v4596, %v4624
    %v4626 = vpop.f32.mrf.mxu0
    %v4627 = vadd.f32 %v4598, %v4626
    %4628 = vmatmul.bf16.gmra.mxu0 %v2500
    %v4629 = vpop.f32.mrf.mxu0
    %v4630 = vadd.f32 %v4601, %v4629
    %v4631 = vpop.f32.mrf.mxu0
    %v4632 = vadd.f32 %v4603, %v4631
    %4633 = vmatmul.bf16.gmra.mxu0 %v2508
    %v4634 = vpop.f32.mrf.mxu0
    %v4635 = vadd.f32 %v4606, %v4634
    %v4636 = vpop.f32.mrf.mxu0
    %v4637 = vadd.f32 %v4608, %v4636
    %4638 = vdwg.mxu0
    %4639 = vmatpush.bf16.msra.mxu0 %v3705
    %4640 = vmatpush.bf16.msra.mxu0 %v3701
    %4641 = vmatpush.bf16.msra.mxu0 %v3697
    %4642 = vmatpush.bf16.msra.mxu0 %v3693
    %4643 = vmatpush.bf16.msra.mxu0 %v3689
    %4644 = vmatpush.bf16.msra.mxu0 %v3685
    %4645 = vmatpush.bf16.msra.mxu0 %v3681
    %4646 = vmatpush.bf16.msra.mxu0 %v3677
    %4647 = vmatmul.bf16.gmra.mxu0 %v2485
    %v4648 = vpop.f32.mrf.mxu0
    %v4649 = vadd.f32 %v4620, %v4648
    %v4650 = vpop.f32.mrf.mxu0
    %v4651 = vadd.f32 %v4622, %v4650
    %4652 = vmatmul.bf16.gmra.mxu0 %v2493
    %v4653 = vpop.f32.mrf.mxu0
    %v4654 = vadd.f32 %v4625, %v4653
    %v4655 = vpop.f32.mrf.mxu0
    %v4656 = vadd.f32 %v4627, %v4655
    %4657 = vmatmul.bf16.gmra.mxu0 %v2501
    %v4658 = vpop.f32.mrf.mxu0
    %v4659 = vadd.f32 %v4630, %v4658
    %v4660 = vpop.f32.mrf.mxu0
    %v4661 = vadd.f32 %v4632, %v4660
    %4662 = vmatmul.bf16.gmra.mxu0 %v2509
    %v4663 = vpop.f32.mrf.mxu0
    %v4664 = vadd.f32 %v4635, %v4663
    %v4665 = vpop.f32.mrf.mxu0
    %v4666 = vadd.f32 %v4637, %v4665
    %4667 = vdwg.mxu0
    %4668 = vmatpush.bf16.msra.mxu0 %v3737
    %4669 = vmatpush.bf16.msra.mxu0 %v3733
    %4670 = vmatpush.bf16.msra.mxu0 %v3729
    %4671 = vmatpush.bf16.msra.mxu0 %v3725
    %4672 = vmatpush.bf16.msra.mxu0 %v3721
    %4673 = vmatpush.bf16.msra.mxu0 %v3717
    %4674 = vmatpush.bf16.msra.mxu0 %v3713
    %4675 = vmatpush.bf16.msra.mxu0 %v3709
    %4676 = vmatmul.bf16.gmra.mxu0 %v2486
    %v4677 = vpop.f32.mrf.mxu0
    %v4678 = vadd.f32 %v4649, %v4677
    %v4679 = vpop.f32.mrf.mxu0
    %v4680 = vadd.f32 %v4651, %v4679
    %4681 = vmatmul.bf16.gmra.mxu0 %v2494
    %v4682 = vpop.f32.mrf.mxu0
    %v4683 = vadd.f32 %v4654, %v4682
    %v4684 = vpop.f32.mrf.mxu0
    %v4685 = vadd.f32 %v4656, %v4684
    %4686 = vmatmul.bf16.gmra.mxu0 %v2502
    %v4687 = vpop.f32.mrf.mxu0
    %v4688 = vadd.f32 %v4659, %v4687
    %v4689 = vpop.f32.mrf.mxu0
    %v4690 = vadd.f32 %v4661, %v4689
    %4691 = vmatmul.bf16.gmra.mxu0 %v2510
    %v4692 = vpop.f32.mrf.mxu0
    %v4693 = vadd.f32 %v4664, %v4692
    %v4694 = vpop.f32.mrf.mxu0
    %v4695 = vadd.f32 %v4666, %v4694
    %4696 = vdwg.mxu0
    %4697 = vmatpush.bf16.msra.mxu0 %v3769
    %4698 = vmatpush.bf16.msra.mxu0 %v3765
    %4699 = vmatpush.bf16.msra.mxu0 %v3761
    %4700 = vmatpush.bf16.msra.mxu0 %v3757
    %4701 = vmatpush.bf16.msra.mxu0 %v3753
    %4702 = vmatpush.bf16.msra.mxu0 %v3749
    %4703 = vmatpush.bf16.msra.mxu0 %v3745
    %4704 = vmatpush.bf16.msra.mxu0 %v3741
    %4705 = vmatmul.bf16.gmra.mxu0 %v2487
    %v4706 = vpop.f32.mrf.mxu0
    %v4707 = vadd.f32 %v4678, %v4706
    %v4708 = vpop.f32.mrf.mxu0
    %v4709 = vadd.f32 %v4680, %v4708
    %4710 = vmatmul.bf16.gmra.mxu0 %v2495
    %v4711 = vpop.f32.mrf.mxu0
    %v4712 = vadd.f32 %v4683, %v4711
    %v4713 = vpop.f32.mrf.mxu0
    %v4714 = vadd.f32 %v4685, %v4713
    %4715 = vmatmul.bf16.gmra.mxu0 %v2503
    %v4716 = vpop.f32.mrf.mxu0
    %v4717 = vadd.f32 %v4688, %v4716
    %v4718 = vpop.f32.mrf.mxu0
    %v4719 = vadd.f32 %v4690, %v4718
    %4720 = vmatmul.bf16.gmra.mxu0 %v2511
    %v4721 = vpop.f32.mrf.mxu0
    %v4722 = vadd.f32 %v4693, %v4721
    %v4723 = vpop.f32.mrf.mxu0
    %v4724 = vadd.f32 %v4695, %v4723
    %4725 = vdwg.mxu0
    %4726 = vmatpush.bf16.msra.mxu0 %v3801
    %4727 = vmatpush.bf16.msra.mxu0 %v3797
    %4728 = vmatpush.bf16.msra.mxu0 %v3793
    %4729 = vmatpush.bf16.msra.mxu0 %v3789
    %4730 = vmatpush.bf16.msra.mxu0 %v3785
    %4731 = vmatpush.bf16.msra.mxu0 %v3781
    %4732 = vmatpush.bf16.msra.mxu0 %v3777
    %4733 = vmatpush.bf16.msra.mxu0 %v3773
    %4734 = vmatmul.bf16.gmra.mxu0 %v2488
    %v4735 = vpop.f32.mrf.mxu0
    %v4736 = vadd.f32 %v4707, %v4735
    %v4737 = vpop.f32.mrf.mxu0
    %v4738 = vadd.f32 %v4709, %v4737
    %4739 = vmatmul.bf16.gmra.mxu0 %v2496
    %v4740 = vpop.f32.mrf.mxu0
    %v4741 = vadd.f32 %v4712, %v4740
    %v4742 = vpop.f32.mrf.mxu0
    %v4743 = vadd.f32 %v4714, %v4742
    %4744 = vmatmul.bf16.gmra.mxu0 %v2504
    %v4745 = vpop.f32.mrf.mxu0
    %v4746 = vadd.f32 %v4717, %v4745
    %v4747 = vpop.f32.mrf.mxu0
    %v4748 = vadd.f32 %v4719, %v4747
    %4749 = vmatmul.bf16.gmra.mxu0 %v2512
    %v4750 = vpop.f32.mrf.mxu0
    %v4751 = vadd.f32 %v4722, %v4750
    %v4752 = vpop.f32.mrf.mxu0
    %v4753 = vadd.f32 %v4724, %v4752
    %4754 = vdwg.mxu0
    %4755 = vmatpush.bf16.msra.mxu0 %v3578
    %4756 = vmatpush.bf16.msra.mxu0 %v3574
    %4757 = vmatpush.bf16.msra.mxu0 %v3570
    %4758 = vmatpush.bf16.msra.mxu0 %v3566
    %4759 = vmatpush.bf16.msra.mxu0 %v3562
    %4760 = vmatpush.bf16.msra.mxu0 %v3558
    %4761 = vmatpush.bf16.msra.mxu0 %v3554
    %4762 = vmatpush.bf16.msra.mxu0 %v3550
    %4763 = vmatmul.bf16.gmra.mxu0 %v2481
    %v4764 = vpop.f32.mrf.mxu0
    %v4765 = vadd.f32 %v2774, %v4764
    %v4766 = vpop.f32.mrf.mxu0
    %v4767 = vadd.f32 %v2774, %v4766
    %4768 = vmatmul.bf16.gmra.mxu0 %v2489
    %v4769 = vpop.f32.mrf.mxu0
    %v4770 = vadd.f32 %v2774, %v4769
    %v4771 = vpop.f32.mrf.mxu0
    %v4772 = vadd.f32 %v2774, %v4771
    %4773 = vmatmul.bf16.gmra.mxu0 %v2497
    %v4774 = vpop.f32.mrf.mxu0
    %v4775 = vadd.f32 %v2774, %v4774
    %v4776 = vpop.f32.mrf.mxu0
    %v4777 = vadd.f32 %v2774, %v4776
    %4778 = vmatmul.bf16.gmra.mxu0 %v2505
    %v4779 = vpop.f32.mrf.mxu0
    %v4780 = vadd.f32 %v2774, %v4779
    %v4781 = vpop.f32.mrf.mxu0
    %v4782 = vadd.f32 %v2774, %v4781
    %4783 = vdwg.mxu0
    %4784 = vmatpush.bf16.msra.mxu0 %v3610
    %4785 = vmatpush.bf16.msra.mxu0 %v3606
    %4786 = vmatpush.bf16.msra.mxu0 %v3602
    %4787 = vmatpush.bf16.msra.mxu0 %v3598
    %4788 = vmatpush.bf16.msra.mxu0 %v3594
    %4789 = vmatpush.bf16.msra.mxu0 %v3590
    %4790 = vmatpush.bf16.msra.mxu0 %v3586
    %4791 = vmatpush.bf16.msra.mxu0 %v3582
    %4792 = vmatmul.bf16.gmra.mxu0 %v2482
    %v4793 = vpop.f32.mrf.mxu0
    %v4794 = vadd.f32 %v4765, %v4793
    %v4795 = vpop.f32.mrf.mxu0
    %v4796 = vadd.f32 %v4767, %v4795
    %4797 = vmatmul.bf16.gmra.mxu0 %v2490
    %v4798 = vpop.f32.mrf.mxu0
    %v4799 = vadd.f32 %v4770, %v4798
    %v4800 = vpop.f32.mrf.mxu0
    %v4801 = vadd.f32 %v4772, %v4800
    %4802 = vmatmul.bf16.gmra.mxu0 %v2498
    %v4803 = vpop.f32.mrf.mxu0
    %v4804 = vadd.f32 %v4775, %v4803
    %v4805 = vpop.f32.mrf.mxu0
    %v4806 = vadd.f32 %v4777, %v4805
    %4807 = vmatmul.bf16.gmra.mxu0 %v2506
    %v4808 = vpop.f32.mrf.mxu0
    %v4809 = vadd.f32 %v4780, %v4808
    %v4810 = vpop.f32.mrf.mxu0
    %v4811 = vadd.f32 %v4782, %v4810
    %4812 = vdwg.mxu0
    %4813 = vmatpush.bf16.msra.mxu0 %v3642
    %4814 = vmatpush.bf16.msra.mxu0 %v3638
    %4815 = vmatpush.bf16.msra.mxu0 %v3634
    %4816 = vmatpush.bf16.msra.mxu0 %v3630
    %4817 = vmatpush.bf16.msra.mxu0 %v3626
    %4818 = vmatpush.bf16.msra.mxu0 %v3622
    %4819 = vmatpush.bf16.msra.mxu0 %v3618
    %4820 = vmatpush.bf16.msra.mxu0 %v3614
    %4821 = vmatmul.bf16.gmra.mxu0 %v2483
    %v4822 = vpop.f32.mrf.mxu0
    %v4823 = vadd.f32 %v4794, %v4822
    %v4824 = vpop.f32.mrf.mxu0
    %v4825 = vadd.f32 %v4796, %v4824
    %4826 = vmatmul.bf16.gmra.mxu0 %v2491
    %v4827 = vpop.f32.mrf.mxu0
    %v4828 = vadd.f32 %v4799, %v4827
    %v4829 = vpop.f32.mrf.mxu0
    %v4830 = vadd.f32 %v4801, %v4829
    %4831 = vmatmul.bf16.gmra.mxu0 %v2499
    %v4832 = vpop.f32.mrf.mxu0
    %v4833 = vadd.f32 %v4804, %v4832
    %v4834 = vpop.f32.mrf.mxu0
    %v4835 = vadd.f32 %v4806, %v4834
    %4836 = vmatmul.bf16.gmra.mxu0 %v2507
    %v4837 = vpop.f32.mrf.mxu0
    %v4838 = vadd.f32 %v4809, %v4837
    %v4839 = vpop.f32.mrf.mxu0
    %v4840 = vadd.f32 %v4811, %v4839
    %4841 = vdwg.mxu0
    %4842 = vmatpush.bf16.msra.mxu0 %v3674
    %4843 = vmatpush.bf16.msra.mxu0 %v3670
    %4844 = vmatpush.bf16.msra.mxu0 %v3666
    %4845 = vmatpush.bf16.msra.mxu0 %v3662
    %4846 = vmatpush.bf16.msra.mxu0 %v3658
    %4847 = vmatpush.bf16.msra.mxu0 %v3654
    %4848 = vmatpush.bf16.msra.mxu0 %v3650
    %4849 = vmatpush.bf16.msra.mxu0 %v3646
    %4850 = vmatmul.bf16.gmra.mxu0 %v2484
    %v4851 = vpop.f32.mrf.mxu0
    %v4852 = vadd.f32 %v4823, %v4851
    %v4853 = vpop.f32.mrf.mxu0
    %v4854 = vadd.f32 %v4825, %v4853
    %4855 = vmatmul.bf16.gmra.mxu0 %v2492
    %v4856 = vpop.f32.mrf.mxu0
    %v4857 = vadd.f32 %v4828, %v4856
    %v4858 = vpop.f32.mrf.mxu0
    %v4859 = vadd.f32 %v4830, %v4858
    %4860 = vmatmul.bf16.gmra.mxu0 %v2500
    %v4861 = vpop.f32.mrf.mxu0
    %v4862 = vadd.f32 %v4833, %v4861
    %v4863 = vpop.f32.mrf.mxu0
    %v4864 = vadd.f32 %v4835, %v4863
    %4865 = vmatmul.bf16.gmra.mxu0 %v2508
    %v4866 = vpop.f32.mrf.mxu0
    %v4867 = vadd.f32 %v4838, %v4866
    %v4868 = vpop.f32.mrf.mxu0
    %v4869 = vadd.f32 %v4840, %v4868
    %4870 = vdwg.mxu0
    %4871 = vmatpush.bf16.msra.mxu0 %v3706
    %4872 = vmatpush.bf16.msra.mxu0 %v3702
    %4873 = vmatpush.bf16.msra.mxu0 %v3698
    %4874 = vmatpush.bf16.msra.mxu0 %v3694
    %4875 = vmatpush.bf16.msra.mxu0 %v3690
    %4876 = vmatpush.bf16.msra.mxu0 %v3686
    %4877 = vmatpush.bf16.msra.mxu0 %v3682
    %4878 = vmatpush.bf16.msra.mxu0 %v3678
    %4879 = vmatmul.bf16.gmra.mxu0 %v2485
    %v4880 = vpop.f32.mrf.mxu0
    %v4881 = vadd.f32 %v4852, %v4880
    %v4882 = vpop.f32.mrf.mxu0
    %v4883 = vadd.f32 %v4854, %v4882
    %4884 = vmatmul.bf16.gmra.mxu0 %v2493
    %v4885 = vpop.f32.mrf.mxu0
    %v4886 = vadd.f32 %v4857, %v4885
    %v4887 = vpop.f32.mrf.mxu0
    %v4888 = vadd.f32 %v4859, %v4887
    %4889 = vmatmul.bf16.gmra.mxu0 %v2501
    %v4890 = vpop.f32.mrf.mxu0
    %v4891 = vadd.f32 %v4862, %v4890
    %v4892 = vpop.f32.mrf.mxu0
    %v4893 = vadd.f32 %v4864, %v4892
    %4894 = vmatmul.bf16.gmra.mxu0 %v2509
    %v4895 = vpop.f32.mrf.mxu0
    %v4896 = vadd.f32 %v4867, %v4895
    %v4897 = vpop.f32.mrf.mxu0
    %v4898 = vadd.f32 %v4869, %v4897
    %4899 = vdwg.mxu0
    %4900 = vmatpush.bf16.msra.mxu0 %v3738
    %4901 = vmatpush.bf16.msra.mxu0 %v3734
    %4902 = vmatpush.bf16.msra.mxu0 %v3730
    %4903 = vmatpush.bf16.msra.mxu0 %v3726
    %4904 = vmatpush.bf16.msra.mxu0 %v3722
    %4905 = vmatpush.bf16.msra.mxu0 %v3718
    %4906 = vmatpush.bf16.msra.mxu0 %v3714
    %4907 = vmatpush.bf16.msra.mxu0 %v3710
    %4908 = vmatmul.bf16.gmra.mxu0 %v2486
    %v4909 = vpop.f32.mrf.mxu0
    %v4910 = vadd.f32 %v4881, %v4909
    %v4911 = vpop.f32.mrf.mxu0
    %v4912 = vadd.f32 %v4883, %v4911
    %4913 = vmatmul.bf16.gmra.mxu0 %v2494
    %v4914 = vpop.f32.mrf.mxu0
    %v4915 = vadd.f32 %v4886, %v4914
    %v4916 = vpop.f32.mrf.mxu0
    %v4917 = vadd.f32 %v4888, %v4916
    %4918 = vmatmul.bf16.gmra.mxu0 %v2502
    %v4919 = vpop.f32.mrf.mxu0
    %v4920 = vadd.f32 %v4891, %v4919
    %v4921 = vpop.f32.mrf.mxu0
    %v4922 = vadd.f32 %v4893, %v4921
    %4923 = vmatmul.bf16.gmra.mxu0 %v2510
    %v4924 = vpop.f32.mrf.mxu0
    %v4925 = vadd.f32 %v4896, %v4924
    %v4926 = vpop.f32.mrf.mxu0
    %v4927 = vadd.f32 %v4898, %v4926
    %4928 = vdwg.mxu0
    %4929 = vmatpush.bf16.msra.mxu0 %v3770
    %4930 = vmatpush.bf16.msra.mxu0 %v3766
    %4931 = vmatpush.bf16.msra.mxu0 %v3762
    %4932 = vmatpush.bf16.msra.mxu0 %v3758
    %4933 = vmatpush.bf16.msra.mxu0 %v3754
    %4934 = vmatpush.bf16.msra.mxu0 %v3750
    %4935 = vmatpush.bf16.msra.mxu0 %v3746
    %4936 = vmatpush.bf16.msra.mxu0 %v3742
    %4937 = vmatmul.bf16.gmra.mxu0 %v2487
    %v4938 = vpop.f32.mrf.mxu0
    %v4939 = vadd.f32 %v4910, %v4938
    %v4940 = vpop.f32.mrf.mxu0
    %v4941 = vadd.f32 %v4912, %v4940
    %4942 = vmatmul.bf16.gmra.mxu0 %v2495
    %v4943 = vpop.f32.mrf.mxu0
    %v4944 = vadd.f32 %v4915, %v4943
    %v4945 = vpop.f32.mrf.mxu0
    %v4946 = vadd.f32 %v4917, %v4945
    %4947 = vmatmul.bf16.gmra.mxu0 %v2503
    %v4948 = vpop.f32.mrf.mxu0
    %v4949 = vadd.f32 %v4920, %v4948
    %v4950 = vpop.f32.mrf.mxu0
    %v4951 = vadd.f32 %v4922, %v4950
    %4952 = vmatmul.bf16.gmra.mxu0 %v2511
    %v4953 = vpop.f32.mrf.mxu0
    %v4954 = vadd.f32 %v4925, %v4953
    %v4955 = vpop.f32.mrf.mxu0
    %v4956 = vadd.f32 %v4927, %v4955
    %4957 = vdwg.mxu0
    %4958 = vmatpush.bf16.msra.mxu0 %v3802
    %4959 = vmatpush.bf16.msra.mxu0 %v3798
    %4960 = vmatpush.bf16.msra.mxu0 %v3794
    %4961 = vmatpush.bf16.msra.mxu0 %v3790
    %4962 = vmatpush.bf16.msra.mxu0 %v3786
    %4963 = vmatpush.bf16.msra.mxu0 %v3782
    %4964 = vmatpush.bf16.msra.mxu0 %v3778
    %4965 = vmatpush.bf16.msra.mxu0 %v3774
    %4966 = vmatmul.bf16.gmra.mxu0 %v2488
    %v4967 = vpop.f32.mrf.mxu0
    %v4968 = vadd.f32 %v4939, %v4967
    %v4969 = vpop.f32.mrf.mxu0
    %v4970 = vadd.f32 %v4941, %v4969
    %4971 = vmatmul.bf16.gmra.mxu0 %v2496
    %v4972 = vpop.f32.mrf.mxu0
    %v4973 = vadd.f32 %v4944, %v4972
    %v4974 = vpop.f32.mrf.mxu0
    %v4975 = vadd.f32 %v4946, %v4974
    %4976 = vmatmul.bf16.gmra.mxu0 %v2504
    %v4977 = vpop.f32.mrf.mxu0
    %v4978 = vadd.f32 %v4949, %v4977
    %v4979 = vpop.f32.mrf.mxu0
    %v4980 = vadd.f32 %v4951, %v4979
    %4981 = vmatmul.bf16.gmra.mxu0 %v2512
    %v4982 = vpop.f32.mrf.mxu0
    %v4983 = vadd.f32 %v4954, %v4982
    %v4984 = vpop.f32.mrf.mxu0
    %v4985 = vadd.f32 %v4956, %v4984
    %4986 = vdwg.mxu0
    %vm4987 = vcmp.ge.f32.partialorder %v4272, 0.0
    %vm4988 = vcmp.ge.f32.partialorder %v4504, 0.0
    %vm4989 = vcmp.ge.f32.partialorder %v4736, 0.0
    %vm4990 = vcmp.ge.f32.partialorder %v4968, 0.0
    %vm4991 = vcmp.ge.f32.partialorder %v4274, 0.0
    %vm4992 = vcmp.ge.f32.partialorder %v4506, 0.0
    %vm4993 = vcmp.ge.f32.partialorder %v4738, 0.0
    %vm4994 = vcmp.ge.f32.partialorder %v4970, 0.0
    %vm4995 = vcmp.ge.f32.partialorder %v4277, 0.0
    %vm4996 = vcmp.ge.f32.partialorder %v4509, 0.0
    %vm4997 = vcmp.ge.f32.partialorder %v4741, 0.0
    %vm4998 = vcmp.ge.f32.partialorder %v4973, 0.0
    %vm4999 = vcmp.ge.f32.partialorder %v4279, 0.0
    %vm5000 = vcmp.ge.f32.partialorder %v4511, 0.0
    %vm5001 = vcmp.ge.f32.partialorder %v4743, 0.0
    %vm5002 = vcmp.ge.f32.partialorder %v4975, 0.0
    %vm5003 = vcmp.ge.f32.partialorder %v4282, 0.0
    %vm5004 = vcmp.ge.f32.partialorder %v4514, 0.0
    %vm5005 = vcmp.ge.f32.partialorder %v4746, 0.0
    %vm5006 = vcmp.ge.f32.partialorder %v4978, 0.0
    %vm5007 = vcmp.ge.f32.partialorder %v4284, 0.0
    %vm5008 = vcmp.ge.f32.partialorder %v4516, 0.0
    %vm5009 = vcmp.ge.f32.partialorder %v4748, 0.0
    %vm5010 = vcmp.ge.f32.partialorder %v4980, 0.0
    %vm5011 = vcmp.ge.f32.partialorder %v4287, 0.0
    %vm5012 = vcmp.ge.f32.partialorder %v4519, 0.0
    %vm5013 = vcmp.ge.f32.partialorder %v4751, 0.0
    %vm5014 = vcmp.ge.f32.partialorder %v4983, 0.0
    %vm5015 = vcmp.ge.f32.partialorder %v4289, 0.0
    %vm5016 = vcmp.ge.f32.partialorder %v4521, 0.0
    %vm5017 = vcmp.ge.f32.partialorder %v4753, 0.0
    %vm5018 = vcmp.ge.f32.partialorder %v4985, 0.0
    %v5019 = vmul.f32 %v4272, 0.2
    %v5020 = vmul.f32 %v4504, 0.2
    %v5021 = vmul.f32 %v4736, 0.2
    %v5022 = vmul.f32 %v4968, 0.2
    %v5023 = vmul.f32 %v4274, 0.2
    %v5024 = vmul.f32 %v4506, 0.2
    %v5025 = vmul.f32 %v4738, 0.2
    %v5026 = vmul.f32 %v4970, 0.2
    %v5027 = vmul.f32 %v4277, 0.2
    %v5028 = vmul.f32 %v4509, 0.2
    %v5029 = vmul.f32 %v4741, 0.2
    %v5030 = vmul.f32 %v4973, 0.2
    %v5031 = vmul.f32 %v4279, 0.2
    %v5032 = vmul.f32 %v4511, 0.2
    %v5033 = vmul.f32 %v4743, 0.2
    %v5034 = vmul.f32 %v4975, 0.2
    %v5035 = vmul.f32 %v4282, 0.2
    %v5036 = vmul.f32 %v4514, 0.2
    %v5037 = vmul.f32 %v4746, 0.2
    %v5038 = vmul.f32 %v4978, 0.2
    %v5039 = vmul.f32 %v4284, 0.2
    %v5040 = vmul.f32 %v4516, 0.2
    %v5041 = vmul.f32 %v4748, 0.2
    %v5042 = vmul.f32 %v4980, 0.2
    %v5043 = vmul.f32 %v4287, 0.2
    %v5044 = vmul.f32 %v4519, 0.2
    %v5045 = vmul.f32 %v4751, 0.2
    %v5046 = vmul.f32 %v4983, 0.2
    %v5047 = vmul.f32 %v4289, 0.2
    %v5048 = vmul.f32 %v4521, 0.2
    %v5049 = vmul.f32 %v4753, 0.2
    %v5050 = vmul.f32 %v4985, 0.2
    %v5051 = vsel %vm4987, %v4272, %v5019
    %v5052 = vsel %vm4988, %v4504, %v5020
    %v5053 = vsel %vm4989, %v4736, %v5021
    %v5054 = vsel %vm4990, %v4968, %v5022
    %v5055 = vsel %vm4991, %v4274, %v5023
    %v5056 = vsel %vm4992, %v4506, %v5024
    %v5057 = vsel %vm4993, %v4738, %v5025
    %v5058 = vsel %vm4994, %v4970, %v5026
    %v5059 = vsel %vm4995, %v4277, %v5027
    %v5060 = vsel %vm4996, %v4509, %v5028
    %v5061 = vsel %vm4997, %v4741, %v5029
    %v5062 = vsel %vm4998, %v4973, %v5030
    %v5063 = vsel %vm4999, %v4279, %v5031
    %v5064 = vsel %vm5000, %v4511, %v5032
    %v5065 = vsel %vm5001, %v4743, %v5033
    %v5066 = vsel %vm5002, %v4975, %v5034
    %v5067 = vsel %vm5003, %v4282, %v5035
    %v5068 = vsel %vm5004, %v4514, %v5036
    %v5069 = vsel %vm5005, %v4746, %v5037
    %v5070 = vsel %vm5006, %v4978, %v5038
    %v5071 = vsel %vm5007, %v4284, %v5039
    %v5072 = vsel %vm5008, %v4516, %v5040
    %v5073 = vsel %vm5009, %v4748, %v5041
    %v5074 = vsel %vm5010, %v4980, %v5042
    %v5075 = vsel %vm5011, %v4287, %v5043
    %v5076 = vsel %vm5012, %v4519, %v5044
    %v5077 = vsel %vm5013, %v4751, %v5045
    %v5078 = vsel %vm5014, %v4983, %v5046
    %v5079 = vsel %vm5015, %v4289, %v5047
    %v5080 = vsel %vm5016, %v4521, %v5048
    %v5081 = vsel %vm5017, %v4753, %v5049
    %v5082 = vsel %vm5018, %v4985, %v5050
    %s5083 = sadd.s32 %s113, 33554835
    %v5084 = vstv %s5083
    %v5085 = vxor.u32 %v1623, %v5084
    %v5086 = vxor.u32 %v1624, %v5084
    %v5087 = vxor.u32 %v1625, %v5084
    %v5088 = vxor.u32 %v1626, %v5084
    %v5089 = vadd.s32 %v1631, %v5085
    %v5090 = vadd.s32 %v1631, %v5086
    %v5091 = vadd.s32 %v1631, %v5087
    %v5092 = vadd.s32 %v1631, %v5088
    %v5093 = vadd.s32 %v1632, %v5085
    %v5094 = vadd.s32 %v1632, %v5086
    %v5095 = vadd.s32 %v1632, %v5087
    %v5096 = vadd.s32 %v1632, %v5088
    %v5097 = vadd.s32 %v1633, %v5085
    %v5098 = vadd.s32 %v1633, %v5086
    %v5099 = vadd.s32 %v1633, %v5087
    %v5100 = vadd.s32 %v1633, %v5088
    %v5101 = vadd.s32 %v1634, %v5085
    %v5102 = vadd.s32 %v1634, %v5086
    %v5103 = vadd.s32 %v1634, %v5087
    %v5104 = vadd.s32 %v1634, %v5088
    %v5105 = vadd.s32 %v1635, %v5085
    %v5106 = vadd.s32 %v1635, %v5086
    %v5107 = vadd.s32 %v1635, %v5087
    %v5108 = vadd.s32 %v1635, %v5088
    %v5109 = vadd.s32 %v1636, %v5085
    %v5110 = vadd.s32 %v1636, %v5086
    %v5111 = vadd.s32 %v1636, %v5087
    %v5112 = vadd.s32 %v1636, %v5088
    %v5113 = vadd.s32 %v1637, %v5085
    %v5114 = vadd.s32 %v1637, %v5086
    %v5115 = vadd.s32 %v1637, %v5087
    %v5116 = vadd.s32 %v1637, %v5088
    %v5117 = vadd.s32 %v1638, %v5085
    %v5118 = vadd.s32 %v1638, %v5086
    %v5119 = vadd.s32 %v1638, %v5087
    %v5120 = vadd.s32 %v1638, %v5088
    %v5121 = vshrl.u32 %v5089, 16
    %v5122 = vshrl.u32 %v5090, 16
    %v5123 = vshrl.u32 %v5091, 16
    %v5124 = vshrl.u32 %v5092, 16
    %v5125 = vshrl.u32 %v5093, 16
    %v5126 = vshrl.u32 %v5094, 16
    %v5127 = vshrl.u32 %v5095, 16
    %v5128 = vshrl.u32 %v5096, 16
    %v5129 = vshrl.u32 %v5097, 16
    %v5130 = vshrl.u32 %v5098, 16
    %v5131 = vshrl.u32 %v5099, 16
    %v5132 = vshrl.u32 %v5100, 16
    %v5133 = vshrl.u32 %v5101, 16
    %v5134 = vshrl.u32 %v5102, 16
    %v5135 = vshrl.u32 %v5103, 16
    %v5136 = vshrl.u32 %v5104, 16
    %v5137 = vshrl.u32 %v5105, 16
    %v5138 = vshrl.u32 %v5106, 16
    %v5139 = vshrl.u32 %v5107, 16
    %v5140 = vshrl.u32 %v5108, 16
    %v5141 = vshrl.u32 %v5109, 16
    %v5142 = vshrl.u32 %v5110, 16
    %v5143 = vshrl.u32 %v5111, 16
    %v5144 = vshrl.u32 %v5112, 16
    %v5145 = vshrl.u32 %v5113, 16
    %v5146 = vshrl.u32 %v5114, 16
    %v5147 = vshrl.u32 %v5115, 16
    %v5148 = vshrl.u32 %v5116, 16
    %v5149 = vshrl.u32 %v5117, 16
    %v5150 = vshrl.u32 %v5118, 16
    %v5151 = vshrl.u32 %v5119, 16
    %v5152 = vshrl.u32 %v5120, 16
    %v5153 = vxor.u32 %v5089, %v5121
    %v5154 = vxor.u32 %v5090, %v5122
    %v5155 = vxor.u32 %v5091, %v5123
    %v5156 = vxor.u32 %v5092, %v5124
    %v5157 = vxor.u32 %v5093, %v5125
    %v5158 = vxor.u32 %v5094, %v5126
    %v5159 = vxor.u32 %v5095, %v5127
    %v5160 = vxor.u32 %v5096, %v5128
    %v5161 = vxor.u32 %v5097, %v5129
    %v5162 = vxor.u32 %v5098, %v5130
    %v5163 = vxor.u32 %v5099, %v5131
    %v5164 = vxor.u32 %v5100, %v5132
    %v5165 = vxor.u32 %v5101, %v5133
    %v5166 = vxor.u32 %v5102, %v5134
    %v5167 = vxor.u32 %v5103, %v5135
    %v5168 = vxor.u32 %v5104, %v5136
    %v5169 = vxor.u32 %v5105, %v5137
    %v5170 = vxor.u32 %v5106, %v5138
    %v5171 = vxor.u32 %v5107, %v5139
    %v5172 = vxor.u32 %v5108, %v5140
    %v5173 = vxor.u32 %v5109, %v5141
    %v5174 = vxor.u32 %v5110, %v5142
    %v5175 = vxor.u32 %v5111, %v5143
    %v5176 = vxor.u32 %v5112, %v5144
    %v5177 = vxor.u32 %v5113, %v5145
    %v5178 = vxor.u32 %v5114, %v5146
    %v5179 = vxor.u32 %v5115, %v5147
    %v5180 = vxor.u32 %v5116, %v5148
    %v5181 = vxor.u32 %v5117, %v5149
    %v5182 = vxor.u32 %v5118, %v5150
    %v5183 = vxor.u32 %v5119, %v5151
    %v5184 = vxor.u32 %v5120, %v5152
    %v5185 = vmul.u32 %v5153, 2146121005
    %v5186 = vmul.u32 %v5154, 2146121005
    %v5187 = vmul.u32 %v5155, 2146121005
    %v5188 = vmul.u32 %v5156, 2146121005
    %v5189 = vmul.u32 %v5157, 2146121005
    %v5190 = vmul.u32 %v5158, 2146121005
    %v5191 = vmul.u32 %v5159, 2146121005
    %v5192 = vmul.u32 %v5160, 2146121005
    %v5193 = vmul.u32 %v5161, 2146121005
    %v5194 = vmul.u32 %v5162, 2146121005
    %v5195 = vmul.u32 %v5163, 2146121005
    %v5196 = vmul.u32 %v5164, 2146121005
    %v5197 = vmul.u32 %v5165, 2146121005
    %v5198 = vmul.u32 %v5166, 2146121005
    %v5199 = vmul.u32 %v5167, 2146121005
    %v5200 = vmul.u32 %v5168, 2146121005
    %v5201 = vmul.u32 %v5169, 2146121005
    %v5202 = vmul.u32 %v5170, 2146121005
    %v5203 = vmul.u32 %v5171, 2146121005
    %v5204 = vmul.u32 %v5172, 2146121005
    %v5205 = vmul.u32 %v5173, 2146121005
    %v5206 = vmul.u32 %v5174, 2146121005
    %v5207 = vmul.u32 %v5175, 2146121005
    %v5208 = vmul.u32 %v5176, 2146121005
    %v5209 = vmul.u32 %v5177, 2146121005
    %v5210 = vmul.u32 %v5178, 2146121005
    %v5211 = vmul.u32 %v5179, 2146121005
    %v5212 = vmul.u32 %v5180, 2146121005
    %v5213 = vmul.u32 %v5181, 2146121005
    %v5214 = vmul.u32 %v5182, 2146121005
    %v5215 = vmul.u32 %v5183, 2146121005
    %v5216 = vmul.u32 %v5184, 2146121005
    %v5217 = vshrl.u32 %v5185, 15
    %v5218 = vshrl.u32 %v5186, 15
    %v5219 = vshrl.u32 %v5187, 15
    %v5220 = vshrl.u32 %v5188, 15
    %v5221 = vshrl.u32 %v5189, 15
    %v5222 = vshrl.u32 %v5190, 15
    %v5223 = vshrl.u32 %v5191, 15
    %v5224 = vshrl.u32 %v5192, 15
    %v5225 = vshrl.u32 %v5193, 15
    %v5226 = vshrl.u32 %v5194, 15
    %v5227 = vshrl.u32 %v5195, 15
    %v5228 = vshrl.u32 %v5196, 15
    %v5229 = vshrl.u32 %v5197, 15
    %v5230 = vshrl.u32 %v5198, 15
    %v5231 = vshrl.u32 %v5199, 15
    %v5232 = vshrl.u32 %v5200, 15
    %v5233 = vshrl.u32 %v5201, 15
    %v5234 = vshrl.u32 %v5202, 15
    %v5235 = vshrl.u32 %v5203, 15
    %v5236 = vshrl.u32 %v5204, 15
    %v5237 = vshrl.u32 %v5205, 15
    %v5238 = vshrl.u32 %v5206, 15
    %v5239 = vshrl.u32 %v5207, 15
    %v5240 = vshrl.u32 %v5208, 15
    %v5241 = vshrl.u32 %v5209, 15
    %v5242 = vshrl.u32 %v5210, 15
    %v5243 = vshrl.u32 %v5211, 15
    %v5244 = vshrl.u32 %v5212, 15
    %v5245 = vshrl.u32 %v5213, 15
    %v5246 = vshrl.u32 %v5214, 15
    %v5247 = vshrl.u32 %v5215, 15
    %v5248 = vshrl.u32 %v5216, 15
    %v5249 = vxor.u32 %v5185, %v5217
    %v5250 = vxor.u32 %v5186, %v5218
    %v5251 = vxor.u32 %v5187, %v5219
    %v5252 = vxor.u32 %v5188, %v5220
    %v5253 = vxor.u32 %v5189, %v5221
    %v5254 = vxor.u32 %v5190, %v5222
    %v5255 = vxor.u32 %v5191, %v5223
    %v5256 = vxor.u32 %v5192, %v5224
    %v5257 = vxor.u32 %v5193, %v5225
    %v5258 = vxor.u32 %v5194, %v5226
    %v5259 = vxor.u32 %v5195, %v5227
    %v5260 = vxor.u32 %v5196, %v5228
    %v5261 = vxor.u32 %v5197, %v5229
    %v5262 = vxor.u32 %v5198, %v5230
    %v5263 = vxor.u32 %v5199, %v5231
    %v5264 = vxor.u32 %v5200, %v5232
    %v5265 = vxor.u32 %v5201, %v5233
    %v5266 = vxor.u32 %v5202, %v5234
    %v5267 = vxor.u32 %v5203, %v5235
    %v5268 = vxor.u32 %v5204, %v5236
    %v5269 = vxor.u32 %v5205, %v5237
    %v5270 = vxor.u32 %v5206, %v5238
    %v5271 = vxor.u32 %v5207, %v5239
    %v5272 = vxor.u32 %v5208, %v5240
    %v5273 = vxor.u32 %v5209, %v5241
    %v5274 = vxor.u32 %v5210, %v5242
    %v5275 = vxor.u32 %v5211, %v5243
    %v5276 = vxor.u32 %v5212, %v5244
    %v5277 = vxor.u32 %v5213, %v5245
    %v5278 = vxor.u32 %v5214, %v5246
    %v5279 = vxor.u32 %v5215, %v5247
    %v5280 = vxor.u32 %v5216, %v5248
    %v5281 = vmul.u32 %v5249, 2221713035
    %v5282 = vmul.u32 %v5250, 2221713035
    %v5283 = vmul.u32 %v5251, 2221713035
    %v5284 = vmul.u32 %v5252, 2221713035
    %v5285 = vmul.u32 %v5253, 2221713035
    %v5286 = vmul.u32 %v5254, 2221713035
    %v5287 = vmul.u32 %v5255, 2221713035
    %v5288 = vmul.u32 %v5256, 2221713035
    %v5289 = vmul.u32 %v5257, 2221713035
    %v5290 = vmul.u32 %v5258, 2221713035
    %v5291 = vmul.u32 %v5259, 2221713035
    %v5292 = vmul.u32 %v5260, 2221713035
    %v5293 = vmul.u32 %v5261, 2221713035
    %v5294 = vmul.u32 %v5262, 2221713035
    %v5295 = vmul.u32 %v5263, 2221713035
    %v5296 = vmul.u32 %v5264, 2221713035
    %v5297 = vmul.u32 %v5265, 2221713035
    %v5298 = vmul.u32 %v5266, 2221713035
    %v5299 = vmul.u32 %v5267, 2221713035
    %v5300 = vmul.u32 %v5268, 2221713035
    %v5301 = vmul.u32 %v5269, 2221713035
    %v5302 = vmul.u32 %v5270, 2221713035
    %v5303 = vmul.u32 %v5271, 2221713035
    %v5304 = vmul.u32 %v5272, 2221713035
    %v5305 = vmul.u32 %v5273, 2221713035
    %v5306 = vmul.u32 %v5274, 2221713035
    %v5307 = vmul.u32 %v5275, 2221713035
    %v5308 = vmul.u32 %v5276, 2221713035
    %v5309 = vmul.u32 %v5277, 2221713035
    %v5310 = vmul.u32 %v5278, 2221713035
    %v5311 = vmul.u32 %v5279, 2221713035
    %v5312 = vmul.u32 %v5280, 2221713035
    %v5313 = vshrl.u32 %v5281, 16
    %v5314 = vshrl.u32 %v5282, 16
    %v5315 = vshrl.u32 %v5283, 16
    %v5316 = vshrl.u32 %v5284, 16
    %v5317 = vshrl.u32 %v5285, 16
    %v5318 = vshrl.u32 %v5286, 16
    %v5319 = vshrl.u32 %v5287, 16
    %v5320 = vshrl.u32 %v5288, 16
    %v5321 = vshrl.u32 %v5289, 16
    %v5322 = vshrl.u32 %v5290, 16
    %v5323 = vshrl.u32 %v5291, 16
    %v5324 = vshrl.u32 %v5292, 16
    %v5325 = vshrl.u32 %v5293, 16
    %v5326 = vshrl.u32 %v5294, 16
    %v5327 = vshrl.u32 %v5295, 16
    %v5328 = vshrl.u32 %v5296, 16
    %v5329 = vshrl.u32 %v5297, 16
    %v5330 = vshrl.u32 %v5298, 16
    %v5331 = vshrl.u32 %v5299, 16
    %v5332 = vshrl.u32 %v5300, 16
    %v5333 = vshrl.u32 %v5301, 16
    %v5334 = vshrl.u32 %v5302, 16
    %v5335 = vshrl.u32 %v5303, 16
    %v5336 = vshrl.u32 %v5304, 16
    %v5337 = vshrl.u32 %v5305, 16
    %v5338 = vshrl.u32 %v5306, 16
    %v5339 = vshrl.u32 %v5307, 16
    %v5340 = vshrl.u32 %v5308, 16
    %v5341 = vshrl.u32 %v5309, 16
    %v5342 = vshrl.u32 %v5310, 16
    %v5343 = vshrl.u32 %v5311, 16
    %v5344 = vshrl.u32 %v5312, 16
    %v5345 = vxor.u32 %v5281, %v5313
    %v5346 = vxor.u32 %v5282, %v5314
    %v5347 = vxor.u32 %v5283, %v5315
    %v5348 = vxor.u32 %v5284, %v5316
    %v5349 = vxor.u32 %v5285, %v5317
    %v5350 = vxor.u32 %v5286, %v5318
    %v5351 = vxor.u32 %v5287, %v5319
    %v5352 = vxor.u32 %v5288, %v5320
    %v5353 = vxor.u32 %v5289, %v5321
    %v5354 = vxor.u32 %v5290, %v5322
    %v5355 = vxor.u32 %v5291, %v5323
    %v5356 = vxor.u32 %v5292, %v5324
    %v5357 = vxor.u32 %v5293, %v5325
    %v5358 = vxor.u32 %v5294, %v5326
    %v5359 = vxor.u32 %v5295, %v5327
    %v5360 = vxor.u32 %v5296, %v5328
    %v5361 = vxor.u32 %v5297, %v5329
    %v5362 = vxor.u32 %v5298, %v5330
    %v5363 = vxor.u32 %v5299, %v5331
    %v5364 = vxor.u32 %v5300, %v5332
    %v5365 = vxor.u32 %v5301, %v5333
    %v5366 = vxor.u32 %v5302, %v5334
    %v5367 = vxor.u32 %v5303, %v5335
    %v5368 = vxor.u32 %v5304, %v5336
    %v5369 = vxor.u32 %v5305, %v5337
    %v5370 = vxor.u32 %v5306, %v5338
    %v5371 = vxor.u32 %v5307, %v5339
    %v5372 = vxor.u32 %v5308, %v5340
    %v5373 = vxor.u32 %v5309, %v5341
    %v5374 = vxor.u32 %v5310, %v5342
    %v5375 = vxor.u32 %v5311, %v5343
    %v5376 = vxor.u32 %v5312, %v5344
    %v5377 = vadd.s32 %v5345, 2147483648
    %vm5379 = vcmp.ge.s32.totalorder %v5377, 3435973837
    %v5380 = vadd.s32 %v5346, 2147483648
    %vm5382 = vcmp.ge.s32.totalorder %v5380, 3435973837
    %v5383 = vadd.s32 %v5347, 2147483648
    %vm5385 = vcmp.ge.s32.totalorder %v5383, 3435973837
    %v5386 = vadd.s32 %v5348, 2147483648
    %vm5388 = vcmp.ge.s32.totalorder %v5386, 3435973837
    %v5389 = vadd.s32 %v5349, 2147483648
    %vm5391 = vcmp.ge.s32.totalorder %v5389, 3435973837
    %v5392 = vadd.s32 %v5350, 2147483648
    %vm5394 = vcmp.ge.s32.totalorder %v5392, 3435973837
    %v5395 = vadd.s32 %v5351, 2147483648
    %vm5397 = vcmp.ge.s32.totalorder %v5395, 3435973837
    %v5398 = vadd.s32 %v5352, 2147483648
    %vm5400 = vcmp.ge.s32.totalorder %v5398, 3435973837
    %v5401 = vadd.s32 %v5353, 2147483648
    %vm5403 = vcmp.ge.s32.totalorder %v5401, 3435973837
    %v5404 = vadd.s32 %v5354, 2147483648
    %vm5406 = vcmp.ge.s32.totalorder %v5404, 3435973837
    %v5407 = vadd.s32 %v5355, 2147483648
    %vm5409 = vcmp.ge.s32.totalorder %v5407, 3435973837
    %v5410 = vadd.s32 %v5356, 2147483648
    %vm5412 = vcmp.ge.s32.totalorder %v5410, 3435973837
    %v5413 = vadd.s32 %v5357, 2147483648
    %vm5415 = vcmp.ge.s32.totalorder %v5413, 3435973837
    %v5416 = vadd.s32 %v5358, 2147483648
    %vm5418 = vcmp.ge.s32.totalorder %v5416, 3435973837
    %v5419 = vadd.s32 %v5359, 2147483648
    %vm5421 = vcmp.ge.s32.totalorder %v5419, 3435973837
    %v5422 = vadd.s32 %v5360, 2147483648
    %vm5424 = vcmp.ge.s32.totalorder %v5422, 3435973837
    %v5425 = vadd.s32 %v5361, 2147483648
    %vm5427 = vcmp.ge.s32.totalorder %v5425, 3435973837
    %v5428 = vadd.s32 %v5362, 2147483648
    %vm5430 = vcmp.ge.s32.totalorder %v5428, 3435973837
    %v5431 = vadd.s32 %v5363, 2147483648
    %vm5433 = vcmp.ge.s32.totalorder %v5431, 3435973837
    %v5434 = vadd.s32 %v5364, 2147483648
    %vm5436 = vcmp.ge.s32.totalorder %v5434, 3435973837
    %v5437 = vadd.s32 %v5365, 2147483648
    %vm5439 = vcmp.ge.s32.totalorder %v5437, 3435973837
    %v5440 = vadd.s32 %v5366, 2147483648
    %vm5442 = vcmp.ge.s32.totalorder %v5440, 3435973837
    %v5443 = vadd.s32 %v5367, 2147483648
    %vm5445 = vcmp.ge.s32.totalorder %v5443, 3435973837
    %v5446 = vadd.s32 %v5368, 2147483648
    %vm5448 = vcmp.ge.s32.totalorder %v5446, 3435973837
    %v5449 = vadd.s32 %v5369, 2147483648
    %vm5451 = vcmp.ge.s32.totalorder %v5449, 3435973837
    %v5452 = vadd.s32 %v5370, 2147483648
    %vm5454 = vcmp.ge.s32.totalorder %v5452, 3435973837
    %v5455 = vadd.s32 %v5371, 2147483648
    %vm5457 = vcmp.ge.s32.totalorder %v5455, 3435973837
    %v5458 = vadd.s32 %v5372, 2147483648
    %vm5460 = vcmp.ge.s32.totalorder %v5458, 3435973837
    %v5461 = vadd.s32 %v5373, 2147483648
    %vm5463 = vcmp.ge.s32.totalorder %v5461, 3435973837
    %v5464 = vadd.s32 %v5374, 2147483648
    %vm5466 = vcmp.ge.s32.totalorder %v5464, 3435973837
    %v5467 = vadd.s32 %v5375, 2147483648
    %vm5469 = vcmp.ge.s32.totalorder %v5467, 3435973837
    %v5470 = vadd.s32 %v5376, 2147483648
    %vm5472 = vcmp.ge.s32.totalorder %v5470, 3435973837
    %v5473 = vsel %vm5379, %v5051, 0.0
    %v5474 = vsel %vm5382, %v5052, 0.0
    %v5475 = vsel %vm5385, %v5053, 0.0
    %v5476 = vsel %vm5388, %v5054, 0.0
    %v5477 = vsel %vm5391, %v5055, 0.0
    %v5478 = vsel %vm5394, %v5056, 0.0
    %v5479 = vsel %vm5397, %v5057, 0.0
    %v5480 = vsel %vm5400, %v5058, 0.0
    %v5481 = vsel %vm5403, %v5059, 0.0
    %v5482 = vsel %vm5406, %v5060, 0.0
    %v5483 = vsel %vm5409, %v5061, 0.0
    %v5484 = vsel %vm5412, %v5062, 0.0
    %v5485 = vsel %vm5415, %v5063, 0.0
    %v5486 = vsel %vm5418, %v5064, 0.0
    %v5487 = vsel %vm5421, %v5065, 0.0
    %v5488 = vsel %vm5424, %v5066, 0.0
    %v5489 = vsel %vm5427, %v5067, 0.0
    %v5490 = vsel %vm5430, %v5068, 0.0
    %v5491 = vsel %vm5433, %v5069, 0.0
    %v5492 = vsel %vm5436, %v5070, 0.0
    %v5493 = vsel %vm5439, %v5071, 0.0
    %v5494 = vsel %vm5442, %v5072, 0.0
    %v5495 = vsel %vm5445, %v5073, 0.0
    %v5496 = vsel %vm5448, %v5074, 0.0
    %v5497 = vsel %vm5451, %v5075, 0.0
    %v5498 = vsel %vm5454, %v5076, 0.0
    %v5499 = vsel %vm5457, %v5077, 0.0
    %v5500 = vsel %vm5460, %v5078, 0.0
    %v5501 = vsel %vm5463, %v5079, 0.0
    %v5502 = vsel %vm5466, %v5080, 0.0
    %v5503 = vsel %vm5469, %v5081, 0.0
    %v5504 = vsel %vm5472, %v5082, 0.0
    %v5505 = vpack.c.bf16 %v5477, %v5473
    %v5506 = vpack.c.bf16 %v5478, %v5474
    %v5507 = vpack.c.bf16 %v5479, %v5475
    %v5508 = vpack.c.bf16 %v5480, %v5476
    %v5509 = vpack.c.bf16 %v5485, %v5481
    %v5510 = vpack.c.bf16 %v5486, %v5482
    %v5511 = vpack.c.bf16 %v5487, %v5483
    %v5512 = vpack.c.bf16 %v5488, %v5484
    %v5513 = vpack.c.bf16 %v5493, %v5489
    %v5514 = vpack.c.bf16 %v5494, %v5490
    %v5515 = vpack.c.bf16 %v5495, %v5491
    %v5516 = vpack.c.bf16 %v5496, %v5492
    %v5517 = vpack.c.bf16 %v5501, %v5497
    %v5518 = vpack.c.bf16 %v5502, %v5498
    %v5519 = vpack.c.bf16 %v5503, %v5499
    %v5520 = vpack.c.bf16 %v5504, %v5500
    %v5521 = vld [vmem:[#allocation12] sm:$0xff]
    %v5522 = vld [vmem:[#allocation12 + $0x8] sm:$0xff]
    %v5523 = vld [vmem:[#allocation12 + $0x10] sm:$0xff]
    %v5524 = vld [vmem:[#allocation12 + $0x18] sm:$0xff]
    %v5525 = vld [vmem:[#allocation12 + $0x20] sm:$0xff]
    %v5526 = vld [vmem:[#allocation12 + $0x28] sm:$0xff]
    %v5527 = vld [vmem:[#allocation12 + $0x30] sm:$0xff]
    %v5528 = vld [vmem:[#allocation12 + $0x38] sm:$0xff]
    %v5529 = vld [vmem:[#allocation12 + $0x40] sm:$0xff]
    %v5530 = vld [vmem:[#allocation12 + $0x48] sm:$0xff]
    %v5531 = vld [vmem:[#allocation12 + $0x50] sm:$0xff]
    %v5532 = vld [vmem:[#allocation12 + $0x58] sm:$0xff]
    %v5533 = vld [vmem:[#allocation12 + $0x60] sm:$0xff]
    %v5534 = vld [vmem:[#allocation12 + $0x68] sm:$0xff]
    %v5535 = vld [vmem:[#allocation12 + $0x70] sm:$0xff]
    %v5536 = vld [vmem:[#allocation12 + $0x78] sm:$0xff]
    %v5537 = vld [vmem:[#allocation12 + $0x80] sm:$0xff]
    %v5538 = vld [vmem:[#allocation12 + $0x88] sm:$0xff]
    %v5539 = vld [vmem:[#allocation12 + $0x90] sm:$0xff]
    %v5540 = vld [vmem:[#allocation12 + $0x98] sm:$0xff]
    %v5541 = vld [vmem:[#allocation12 + $0xa0] sm:$0xff]
    %v5542 = vld [vmem:[#allocation12 + $0xa8] sm:$0xff]
    %v5543 = vld [vmem:[#allocation12 + $0xb0] sm:$0xff]
    %v5544 = vld [vmem:[#allocation12 + $0xb8] sm:$0xff]
    %v5545 = vld [vmem:[#allocation12 + $0xc0] sm:$0xff]
    %v5546 = vld [vmem:[#allocation12 + $0xc8] sm:$0xff]
    %v5547 = vld [vmem:[#allocation12 + $0xd0] sm:$0xff]
    %v5548 = vld [vmem:[#allocation12 + $0xd8] sm:$0xff]
    %v5549 = vld [vmem:[#allocation12 + $0xe0] sm:$0xff]
    %v5550 = vld [vmem:[#allocation12 + $0xe8] sm:$0xff]
    %v5551 = vld [vmem:[#allocation12 + $0xf0] sm:$0xff]
    %v5552 = vld [vmem:[#allocation12 + $0xf8] sm:$0xff]
    %v5553 = vld [vmem:[#allocation12 + $0x100] sm:$0xff]
    %v5554 = vld [vmem:[#allocation12 + $0x108] sm:$0xff]
    %v5555 = vld [vmem:[#allocation12 + $0x110] sm:$0xff]
    %v5556 = vld [vmem:[#allocation12 + $0x118] sm:$0xff]
    %v5557 = vld [vmem:[#allocation12 + $0x120] sm:$0xff]
    %v5558 = vld [vmem:[#allocation12 + $0x128] sm:$0xff]
    %v5559 = vld [vmem:[#allocation12 + $0x130] sm:$0xff]
    %v5560 = vld [vmem:[#allocation12 + $0x138] sm:$0xff]
    %v5561 = vld [vmem:[#allocation12 + $0x140] sm:$0xff]
    %v5562 = vld [vmem:[#allocation12 + $0x148] sm:$0xff]
    %v5563 = vld [vmem:[#allocation12 + $0x150] sm:$0xff]
    %v5564 = vld [vmem:[#allocation12 + $0x158] sm:$0xff]
    %v5565 = vld [vmem:[#allocation12 + $0x160] sm:$0xff]
    %v5566 = vld [vmem:[#allocation12 + $0x168] sm:$0xff]
    %v5567 = vld [vmem:[#allocation12 + $0x170] sm:$0xff]
    %v5568 = vld [vmem:[#allocation12 + $0x178] sm:$0xff]
    %v5569 = vld [vmem:[#allocation12 + $0x180] sm:$0xff]
    %v5570 = vld [vmem:[#allocation12 + $0x188] sm:$0xff]
    %v5571 = vld [vmem:[#allocation12 + $0x190] sm:$0xff]
    %v5572 = vld [vmem:[#allocation12 + $0x198] sm:$0xff]
    %v5573 = vld [vmem:[#allocation12 + $0x1a0] sm:$0xff]
    %v5574 = vld [vmem:[#allocation12 + $0x1a8] sm:$0xff]
    %v5575 = vld [vmem:[#allocation12 + $0x1b0] sm:$0xff]
    %v5576 = vld [vmem:[#allocation12 + $0x1b8] sm:$0xff]
    %v5577 = vld [vmem:[#allocation12 + $0x1c0] sm:$0xff]
    %v5578 = vld [vmem:[#allocation12 + $0x1c8] sm:$0xff]
    %v5579 = vld [vmem:[#allocation12 + $0x1d0] sm:$0xff]
    %v5580 = vld [vmem:[#allocation12 + $0x1d8] sm:$0xff]
    %v5581 = vld [vmem:[#allocation12 + $0x1e0] sm:$0xff]
    %v5582 = vld [vmem:[#allocation12 + $0x1e8] sm:$0xff]
    %v5583 = vld [vmem:[#allocation12 + $0x1f0] sm:$0xff]
    %v5584 = vld [vmem:[#allocation12 + $0x1f8] sm:$0xff]
    %v5585 = vld [vmem:[%s7] sm:$0x3]
    %v5587 = vperm.slane %v5585, 0
    %v5588 = vperm.slane %v5585, 1
    %v5655 = vunpack.c.l.b16 %v5521
    %v5656 = vunpack.c.h.b16 %v5521
    %v5657 = vunpack.c.l.b16 %v5522
    %v5658 = vunpack.c.h.b16 %v5522
    %v5659 = vunpack.c.l.b16 %v5523
    %v5660 = vunpack.c.h.b16 %v5523
    %v5661 = vunpack.c.l.b16 %v5524
    %v5662 = vunpack.c.h.b16 %v5524
    %v5663 = vunpack.c.l.b16 %v5525
    %v5664 = vunpack.c.h.b16 %v5525
    %v5665 = vunpack.c.l.b16 %v5526
    %v5666 = vunpack.c.h.b16 %v5526
    %v5667 = vunpack.c.l.b16 %v5527
    %v5668 = vunpack.c.h.b16 %v5527
    %v5669 = vunpack.c.l.b16 %v5528
    %v5670 = vunpack.c.h.b16 %v5528
    %v5671 = vunpack.c.l.b16 %v5529
    %v5672 = vunpack.c.h.b16 %v5529
    %v5673 = vunpack.c.l.b16 %v5530
    %v5674 = vunpack.c.h.b16 %v5530
    %v5675 = vunpack.c.l.b16 %v5531
    %v5676 = vunpack.c.h.b16 %v5531
    %v5677 = vunpack.c.l.b16 %v5532
    %v5678 = vunpack.c.h.b16 %v5532
    %v5679 = vunpack.c.l.b16 %v5533
    %v5680 = vunpack.c.h.b16 %v5533
    %v5681 = vunpack.c.l.b16 %v5534
    %v5682 = vunpack.c.h.b16 %v5534
    %v5683 = vunpack.c.l.b16 %v5535
    %v5684 = vunpack.c.h.b16 %v5535
    %v5685 = vunpack.c.l.b16 %v5536
    %v5686 = vunpack.c.h.b16 %v5536
    %v5687 = vunpack.c.l.b16 %v5537
    %v5688 = vunpack.c.h.b16 %v5537
    %v5689 = vunpack.c.l.b16 %v5538
    %v5690 = vunpack.c.h.b16 %v5538
    %v5691 = vunpack.c.l.b16 %v5539
    %v5692 = vunpack.c.h.b16 %v5539
    %v5693 = vunpack.c.l.b16 %v5540
    %v5694 = vunpack.c.h.b16 %v5540
    %v5695 = vunpack.c.l.b16 %v5541
    %v5696 = vunpack.c.h.b16 %v5541
    %v5697 = vunpack.c.l.b16 %v5542
    %v5698 = vunpack.c.h.b16 %v5542
    %v5699 = vunpack.c.l.b16 %v5543
    %v5700 = vunpack.c.h.b16 %v5543
    %v5701 = vunpack.c.l.b16 %v5544
    %v5702 = vunpack.c.h.b16 %v5544
    %v5703 = vunpack.c.l.b16 %v5545
    %v5704 = vunpack.c.h.b16 %v5545
    %v5705 = vunpack.c.l.b16 %v5546
    %v5706 = vunpack.c.h.b16 %v5546
    %v5707 = vunpack.c.l.b16 %v5547
    %v5708 = vunpack.c.h.b16 %v5547
    %v5709 = vunpack.c.l.b16 %v5548
    %v5710 = vunpack.c.h.b16 %v5548
    %v5711 = vunpack.c.l.b16 %v5549
    %v5712 = vunpack.c.h.b16 %v5549
    %v5713 = vunpack.c.l.b16 %v5550
    %v5714 = vunpack.c.h.b16 %v5550
    %v5715 = vunpack.c.l.b16 %v5551
    %v5716 = vunpack.c.h.b16 %v5551
    %v5717 = vunpack.c.l.b16 %v5552
    %v5718 = vunpack.c.h.b16 %v5552
    %v5719 = vunpack.c.l.b16 %v5553
    %v5720 = vunpack.c.h.b16 %v5553
    %v5721 = vunpack.c.l.b16 %v5554
    %v5722 = vunpack.c.h.b16 %v5554
    %v5723 = vunpack.c.l.b16 %v5555
    %v5724 = vunpack.c.h.b16 %v5555
    %v5725 = vunpack.c.l.b16 %v5556
    %v5726 = vunpack.c.h.b16 %v5556
    %v5727 = vunpack.c.l.b16 %v5557
    %v5728 = vunpack.c.h.b16 %v5557
    %v5729 = vunpack.c.l.b16 %v5558
    %v5730 = vunpack.c.h.b16 %v5558
    %v5731 = vunpack.c.l.b16 %v5559
    %v5732 = vunpack.c.h.b16 %v5559
    %v5733 = vunpack.c.l.b16 %v5560
    %v5734 = vunpack.c.h.b16 %v5560
    %v5735 = vunpack.c.l.b16 %v5561
    %v5736 = vunpack.c.h.b16 %v5561
    %v5737 = vunpack.c.l.b16 %v5562
    %v5738 = vunpack.c.h.b16 %v5562
    %v5739 = vunpack.c.l.b16 %v5563
    %v5740 = vunpack.c.h.b16 %v5563
    %v5741 = vunpack.c.l.b16 %v5564
    %v5742 = vunpack.c.h.b16 %v5564
    %v5743 = vunpack.c.l.b16 %v5565
    %v5744 = vunpack.c.h.b16 %v5565
    %v5745 = vunpack.c.l.b16 %v5566
    %v5746 = vunpack.c.h.b16 %v5566
    %v5747 = vunpack.c.l.b16 %v5567
    %v5748 = vunpack.c.h.b16 %v5567
    %v5749 = vunpack.c.l.b16 %v5568
    %v5750 = vunpack.c.h.b16 %v5568
    %v5751 = vunpack.c.l.b16 %v5569
    %v5752 = vunpack.c.h.b16 %v5569
    %v5753 = vunpack.c.l.b16 %v5570
    %v5754 = vunpack.c.h.b16 %v5570
    %v5755 = vunpack.c.l.b16 %v5571
    %v5756 = vunpack.c.h.b16 %v5571
    %v5757 = vunpack.c.l.b16 %v5572
    %v5758 = vunpack.c.h.b16 %v5572
    %v5759 = vunpack.c.l.b16 %v5573
    %v5760 = vunpack.c.h.b16 %v5573
    %v5761 = vunpack.c.l.b16 %v5574
    %v5762 = vunpack.c.h.b16 %v5574
    %v5763 = vunpack.c.l.b16 %v5575
    %v5764 = vunpack.c.h.b16 %v5575
    %v5765 = vunpack.c.l.b16 %v5576
    %v5766 = vunpack.c.h.b16 %v5576
    %v5767 = vunpack.c.l.b16 %v5577
    %v5768 = vunpack.c.h.b16 %v5577
    %v5769 = vunpack.c.l.b16 %v5578
    %v5770 = vunpack.c.h.b16 %v5578
    %v5771 = vunpack.c.l.b16 %v5579
    %v5772 = vunpack.c.h.b16 %v5579
    %v5773 = vunpack.c.l.b16 %v5580
    %v5774 = vunpack.c.h.b16 %v5580
    %v5775 = vunpack.c.l.b16 %v5581
    %v5776 = vunpack.c.h.b16 %v5581
    %v5777 = vunpack.c.l.b16 %v5582
    %v5778 = vunpack.c.h.b16 %v5582
    %v5779 = vunpack.c.l.b16 %v5583
    %v5780 = vunpack.c.h.b16 %v5583
    %v5781 = vunpack.c.l.b16 %v5584
    %v5782 = vunpack.c.h.b16 %v5584
    %v5783 = vpack.c.b16 %v5657, %v5655
    %v5784 = vpack.c.b16 %v5658, %v5656
    %v5785 = vpack.c.b16 %v5661, %v5659
    %v5786 = vpack.c.b16 %v5662, %v5660
    %v5787 = vpack.c.b16 %v5665, %v5663
    %v5788 = vpack.c.b16 %v5666, %v5664
    %v5789 = vpack.c.b16 %v5669, %v5667
    %v5790 = vpack.c.b16 %v5670, %v5668
    %v5791 = vpack.c.b16 %v5673, %v5671
    %v5792 = vpack.c.b16 %v5674, %v5672
    %v5793 = vpack.c.b16 %v5677, %v5675
    %v5794 = vpack.c.b16 %v5678, %v5676
    %v5795 = vpack.c.b16 %v5681, %v5679
    %v5796 = vpack.c.b16 %v5682, %v5680
    %v5797 = vpack.c.b16 %v5685, %v5683
    %v5798 = vpack.c.b16 %v5686, %v5684
    %v5799 = vpack.c.b16 %v5689, %v5687
    %v5800 = vpack.c.b16 %v5690, %v5688
    %v5801 = vpack.c.b16 %v5693, %v5691
    %v5802 = vpack.c.b16 %v5694, %v5692
    %v5803 = vpack.c.b16 %v5697, %v5695
    %v5804 = vpack.c.b16 %v5698, %v5696
    %v5805 = vpack.c.b16 %v5701, %v5699
    %v5806 = vpack.c.b16 %v5702, %v5700
    %v5807 = vpack.c.b16 %v5705, %v5703
    %v5808 = vpack.c.b16 %v5706, %v5704
    %v5809 = vpack.c.b16 %v5709, %v5707
    %v5810 = vpack.c.b16 %v5710, %v5708
    %v5811 = vpack.c.b16 %v5713, %v5711
    %v5812 = vpack.c.b16 %v5714, %v5712
    %v5813 = vpack.c.b16 %v5717, %v5715
    %v5814 = vpack.c.b16 %v5718, %v5716
    %v5815 = vpack.c.b16 %v5721, %v5719
    %v5816 = vpack.c.b16 %v5722, %v5720
    %v5817 = vpack.c.b16 %v5725, %v5723
    %v5818 = vpack.c.b16 %v5726, %v5724
    %v5819 = vpack.c.b16 %v5729, %v5727
    %v5820 = vpack.c.b16 %v5730, %v5728
    %v5821 = vpack.c.b16 %v5733, %v5731
    %v5822 = vpack.c.b16 %v5734, %v5732
    %v5823 = vpack.c.b16 %v5737, %v5735
    %v5824 = vpack.c.b16 %v5738, %v5736
    %v5825 = vpack.c.b16 %v5741, %v5739
    %v5826 = vpack.c.b16 %v5742, %v5740
    %v5827 = vpack.c.b16 %v5745, %v5743
    %v5828 = vpack.c.b16 %v5746, %v5744
    %v5829 = vpack.c.b16 %v5749, %v5747
    %v5830 = vpack.c.b16 %v5750, %v5748
    %v5831 = vpack.c.b16 %v5753, %v5751
    %v5832 = vpack.c.b16 %v5754, %v5752
    %v5833 = vpack.c.b16 %v5757, %v5755
    %v5834 = vpack.c.b16 %v5758, %v5756
    %v5835 = vpack.c.b16 %v5761, %v5759
    %v5836 = vpack.c.b16 %v5762, %v5760
    %v5837 = vpack.c.b16 %v5765, %v5763
    %v5838 = vpack.c.b16 %v5766, %v5764
    %v5839 = vpack.c.b16 %v5769, %v5767
    %v5840 = vpack.c.b16 %v5770, %v5768
    %v5841 = vpack.c.b16 %v5773, %v5771
    %v5842 = vpack.c.b16 %v5774, %v5772
    %v5843 = vpack.c.b16 %v5777, %v5775
    %v5844 = vpack.c.b16 %v5778, %v5776
    %v5845 = vpack.c.b16 %v5781, %v5779
    %v5846 = vpack.c.b16 %v5782, %v5780
    %5911 = vmatpush.bf16.msra.mxu0 %v5797
    %5912 = vmatpush.bf16.msra.mxu0 %v5795
    %5913 = vmatpush.bf16.msra.mxu0 %v5793
    %5914 = vmatpush.bf16.msra.mxu0 %v5791
    %5915 = vmatpush.bf16.msra.mxu0 %v5789
    %5916 = vmatpush.bf16.msra.mxu0 %v5787
    %5917 = vmatpush.bf16.msra.mxu0 %v5785
    %5918 = vmatpush.bf16.msra.mxu0 %v5783
    %5919 = vmatmul.bf16.gmra.mxu0 %v5505
    %v5920 = vpop.f32.mrf.mxu0
    %v5921 = vadd.f32 %v5587, %v5920
    %v5922 = vpop.f32.mrf.mxu0
    %v5923 = vadd.f32 %v5587, %v5922
    %5924 = vmatmul.bf16.gmra.mxu0 %v5509
    %v5925 = vpop.f32.mrf.mxu0
    %v5926 = vadd.f32 %v5587, %v5925
    %v5927 = vpop.f32.mrf.mxu0
    %v5928 = vadd.f32 %v5587, %v5927
    %5929 = vmatmul.bf16.gmra.mxu0 %v5513
    %v5930 = vpop.f32.mrf.mxu0
    %v5931 = vadd.f32 %v5587, %v5930
    %v5932 = vpop.f32.mrf.mxu0
    %v5933 = vadd.f32 %v5587, %v5932
    %5934 = vmatmul.bf16.gmra.mxu0 %v5517
    %v5935 = vpop.f32.mrf.mxu0
    %v5936 = vadd.f32 %v5587, %v5935
    %v5937 = vpop.f32.mrf.mxu0
    %v5938 = vadd.f32 %v5587, %v5937
    %5939 = vdwg.mxu0
    %5940 = vmatpush.bf16.msra.mxu0 %v5813
    %5941 = vmatpush.bf16.msra.mxu0 %v5811
    %5942 = vmatpush.bf16.msra.mxu0 %v5809
    %5943 = vmatpush.bf16.msra.mxu0 %v5807
    %5944 = vmatpush.bf16.msra.mxu0 %v5805
    %5945 = vmatpush.bf16.msra.mxu0 %v5803
    %5946 = vmatpush.bf16.msra.mxu0 %v5801
    %5947 = vmatpush.bf16.msra.mxu0 %v5799
    %5948 = vmatmul.bf16.gmra.mxu0 %v5506
    %v5949 = vpop.f32.mrf.mxu0
    %v5950 = vadd.f32 %v5921, %v5949
    %v5951 = vpop.f32.mrf.mxu0
    %v5952 = vadd.f32 %v5923, %v5951
    %5953 = vmatmul.bf16.gmra.mxu0 %v5510
    %v5954 = vpop.f32.mrf.mxu0
    %v5955 = vadd.f32 %v5926, %v5954
    %v5956 = vpop.f32.mrf.mxu0
    %v5957 = vadd.f32 %v5928, %v5956
    %5958 = vmatmul.bf16.gmra.mxu0 %v5514
    %v5959 = vpop.f32.mrf.mxu0
    %v5960 = vadd.f32 %v5931, %v5959
    %v5961 = vpop.f32.mrf.mxu0
    %v5962 = vadd.f32 %v5933, %v5961
    %5963 = vmatmul.bf16.gmra.mxu0 %v5518
    %v5964 = vpop.f32.mrf.mxu0
    %v5965 = vadd.f32 %v5936, %v5964
    %v5966 = vpop.f32.mrf.mxu0
    %v5967 = vadd.f32 %v5938, %v5966
    %5968 = vdwg.mxu0
    %5969 = vmatpush.bf16.msra.mxu0 %v5829
    %5970 = vmatpush.bf16.msra.mxu0 %v5827
    %5971 = vmatpush.bf16.msra.mxu0 %v5825
    %5972 = vmatpush.bf16.msra.mxu0 %v5823
    %5973 = vmatpush.bf16.msra.mxu0 %v5821
    %5974 = vmatpush.bf16.msra.mxu0 %v5819
    %5975 = vmatpush.bf16.msra.mxu0 %v5817
    %5976 = vmatpush.bf16.msra.mxu0 %v5815
    %5977 = vmatmul.bf16.gmra.mxu0 %v5507
    %v5978 = vpop.f32.mrf.mxu0
    %v5979 = vadd.f32 %v5950, %v5978
    %v5980 = vpop.f32.mrf.mxu0
    %v5981 = vadd.f32 %v5952, %v5980
    %5982 = vmatmul.bf16.gmra.mxu0 %v5511
    %v5983 = vpop.f32.mrf.mxu0
    %v5984 = vadd.f32 %v5955, %v5983
    %v5985 = vpop.f32.mrf.mxu0
    %v5986 = vadd.f32 %v5957, %v5985
    %5987 = vmatmul.bf16.gmra.mxu0 %v5515
    %v5988 = vpop.f32.mrf.mxu0
    %v5989 = vadd.f32 %v5960, %v5988
    %v5990 = vpop.f32.mrf.mxu0
    %v5991 = vadd.f32 %v5962, %v5990
    %5992 = vmatmul.bf16.gmra.mxu0 %v5519
    %v5993 = vpop.f32.mrf.mxu0
    %v5994 = vadd.f32 %v5965, %v5993
    %v5995 = vpop.f32.mrf.mxu0
    %v5996 = vadd.f32 %v5967, %v5995
    %5997 = vdwg.mxu0
    %5998 = vmatpush.bf16.msra.mxu0 %v5845
    %5999 = vmatpush.bf16.msra.mxu0 %v5843
    %6000 = vmatpush.bf16.msra.mxu0 %v5841
    %6001 = vmatpush.bf16.msra.mxu0 %v5839
    %6002 = vmatpush.bf16.msra.mxu0 %v5837
    %6003 = vmatpush.bf16.msra.mxu0 %v5835
    %6004 = vmatpush.bf16.msra.mxu0 %v5833
    %6005 = vmatpush.bf16.msra.mxu0 %v5831
    %6006 = vmatmul.bf16.gmra.mxu0 %v5508
    %v6007 = vpop.f32.mrf.mxu0
    %v6008 = vadd.f32 %v5979, %v6007
    %v6009 = vpop.f32.mrf.mxu0
    %v6010 = vadd.f32 %v5981, %v6009
    %6011 = vmatmul.bf16.gmra.mxu0 %v5512
    %v6012 = vpop.f32.mrf.mxu0
    %v6013 = vadd.f32 %v5984, %v6012
    %v6014 = vpop.f32.mrf.mxu0
    %v6015 = vadd.f32 %v5986, %v6014
    %6016 = vmatmul.bf16.gmra.mxu0 %v5516
    %v6017 = vpop.f32.mrf.mxu0
    %v6018 = vadd.f32 %v5989, %v6017
    %v6019 = vpop.f32.mrf.mxu0
    %v6020 = vadd.f32 %v5991, %v6019
    %6021 = vmatmul.bf16.gmra.mxu0 %v5520
    %v6022 = vpop.f32.mrf.mxu0
    %v6023 = vadd.f32 %v5994, %v6022
    %v6024 = vpop.f32.mrf.mxu0
    %v6025 = vadd.f32 %v5996, %v6024
    %6026 = vdwg.mxu0
    %6027 = vmatpush.bf16.msra.mxu0 %v5798
    %6028 = vmatpush.bf16.msra.mxu0 %v5796
    %6029 = vmatpush.bf16.msra.mxu0 %v5794
    %6030 = vmatpush.bf16.msra.mxu0 %v5792
    %6031 = vmatpush.bf16.msra.mxu0 %v5790
    %6032 = vmatpush.bf16.msra.mxu0 %v5788
    %6033 = vmatpush.bf16.msra.mxu0 %v5786
    %6034 = vmatpush.bf16.msra.mxu0 %v5784
    %6035 = vmatmul.bf16.gmra.mxu0 %v5505
    %v6036 = vpop.f32.mrf.mxu0
    %v6037 = vadd.f32 %v5588, %v6036
    %v6038 = vpop.f32.mrf.mxu0
    %v6039 = vadd.f32 %v5588, %v6038
    %6040 = vmatmul.bf16.gmra.mxu0 %v5509
    %v6041 = vpop.f32.mrf.mxu0
    %v6042 = vadd.f32 %v5588, %v6041
    %v6043 = vpop.f32.mrf.mxu0
    %v6044 = vadd.f32 %v5588, %v6043
    %6045 = vmatmul.bf16.gmra.mxu0 %v5513
    %v6046 = vpop.f32.mrf.mxu0
    %v6047 = vadd.f32 %v5588, %v6046
    %v6048 = vpop.f32.mrf.mxu0
    %v6049 = vadd.f32 %v5588, %v6048
    %6050 = vmatmul.bf16.gmra.mxu0 %v5517
    %v6051 = vpop.f32.mrf.mxu0
    %v6052 = vadd.f32 %v5588, %v6051
    %v6053 = vpop.f32.mrf.mxu0
    %v6054 = vadd.f32 %v5588, %v6053
    %6055 = vdwg.mxu0
    %6056 = vmatpush.bf16.msra.mxu0 %v5814
    %6057 = vmatpush.bf16.msra.mxu0 %v5812
    %6058 = vmatpush.bf16.msra.mxu0 %v5810
    %6059 = vmatpush.bf16.msra.mxu0 %v5808
    %6060 = vmatpush.bf16.msra.mxu0 %v5806
    %6061 = vmatpush.bf16.msra.mxu0 %v5804
    %6062 = vmatpush.bf16.msra.mxu0 %v5802
    %6063 = vmatpush.bf16.msra.mxu0 %v5800
    %6064 = vmatmul.bf16.gmra.mxu0 %v5506
    %v6065 = vpop.f32.mrf.mxu0
    %v6066 = vadd.f32 %v6037, %v6065
    %v6067 = vpop.f32.mrf.mxu0
    %v6068 = vadd.f32 %v6039, %v6067
    %6069 = vmatmul.bf16.gmra.mxu0 %v5510
    %v6070 = vpop.f32.mrf.mxu0
    %v6071 = vadd.f32 %v6042, %v6070
    %v6072 = vpop.f32.mrf.mxu0
    %v6073 = vadd.f32 %v6044, %v6072
    %6074 = vmatmul.bf16.gmra.mxu0 %v5514
    %v6075 = vpop.f32.mrf.mxu0
    %v6076 = vadd.f32 %v6047, %v6075
    %v6077 = vpop.f32.mrf.mxu0
    %v6078 = vadd.f32 %v6049, %v6077
    %6079 = vmatmul.bf16.gmra.mxu0 %v5518
    %v6080 = vpop.f32.mrf.mxu0
    %v6081 = vadd.f32 %v6052, %v6080
    %v6082 = vpop.f32.mrf.mxu0
    %v6083 = vadd.f32 %v6054, %v6082
    %6084 = vdwg.mxu0
    %6085 = vmatpush.bf16.msra.mxu0 %v5830
    %6086 = vmatpush.bf16.msra.mxu0 %v5828
    %6087 = vmatpush.bf16.msra.mxu0 %v5826
    %6088 = vmatpush.bf16.msra.mxu0 %v5824
    %6089 = vmatpush.bf16.msra.mxu0 %v5822
    %6090 = vmatpush.bf16.msra.mxu0 %v5820
    %6091 = vmatpush.bf16.msra.mxu0 %v5818
    %6092 = vmatpush.bf16.msra.mxu0 %v5816
    %6093 = vmatmul.bf16.gmra.mxu0 %v5507
    %v6094 = vpop.f32.mrf.mxu0
    %v6095 = vadd.f32 %v6066, %v6094
    %v6096 = vpop.f32.mrf.mxu0
    %v6097 = vadd.f32 %v6068, %v6096
    %6098 = vmatmul.bf16.gmra.mxu0 %v5511
    %v6099 = vpop.f32.mrf.mxu0
    %v6100 = vadd.f32 %v6071, %v6099
    %v6101 = vpop.f32.mrf.mxu0
    %v6102 = vadd.f32 %v6073, %v6101
    %6103 = vmatmul.bf16.gmra.mxu0 %v5515
    %v6104 = vpop.f32.mrf.mxu0
    %v6105 = vadd.f32 %v6076, %v6104
    %v6106 = vpop.f32.mrf.mxu0
    %v6107 = vadd.f32 %v6078, %v6106
    %6108 = vmatmul.bf16.gmra.mxu0 %v5519
    %v6109 = vpop.f32.mrf.mxu0
    %v6110 = vadd.f32 %v6081, %v6109
    %v6111 = vpop.f32.mrf.mxu0
    %v6112 = vadd.f32 %v6083, %v6111
    %6113 = vdwg.mxu0
    %6114 = vmatpush.bf16.msra.mxu0 %v5846
    %6115 = vmatpush.bf16.msra.mxu0 %v5844
    %6116 = vmatpush.bf16.msra.mxu0 %v5842
    %6117 = vmatpush.bf16.msra.mxu0 %v5840
    %6118 = vmatpush.bf16.msra.mxu0 %v5838
    %6119 = vmatpush.bf16.msra.mxu0 %v5836
    %6120 = vmatpush.bf16.msra.mxu0 %v5834
    %6121 = vmatpush.bf16.msra.mxu0 %v5832
    %6122 = vmatmul.bf16.gmra.mxu0 %v5508
    %v6123 = vpop.f32.mrf.mxu0
    %v6124 = vadd.f32 %v6095, %v6123
    %v6125 = vpop.f32.mrf.mxu0
    %v6126 = vadd.f32 %v6097, %v6125
    %6127 = vmatmul.bf16.gmra.mxu0 %v5512
    %v6128 = vpop.f32.mrf.mxu0
    %v6129 = vadd.f32 %v6100, %v6128
    %v6130 = vpop.f32.mrf.mxu0
    %v6131 = vadd.f32 %v6102, %v6130
    %6132 = vmatmul.bf16.gmra.mxu0 %v5516
    %v6133 = vpop.f32.mrf.mxu0
    %v6134 = vadd.f32 %v6105, %v6133
    %v6135 = vpop.f32.mrf.mxu0
    %v6136 = vadd.f32 %v6107, %v6135
    %6137 = vmatmul.bf16.gmra.mxu0 %v5520
    %v6138 = vpop.f32.mrf.mxu0
    %v6139 = vadd.f32 %v6110, %v6138
    %v6140 = vpop.f32.mrf.mxu0
    %v6141 = vadd.f32 %v6112, %v6140
    %6142 = vdwg.mxu0
    %vm6143 = vcmp.ge.f32.partialorder %v6008, 0.0
    %vm6144 = vcmp.ge.f32.partialorder %v6124, 0.0
    %vm6145 = vcmp.ge.f32.partialorder %v6010, 0.0
    %vm6146 = vcmp.ge.f32.partialorder %v6126, 0.0
    %vm6147 = vcmp.ge.f32.partialorder %v6013, 0.0
    %vm6148 = vcmp.ge.f32.partialorder %v6129, 0.0
    %vm6149 = vcmp.ge.f32.partialorder %v6015, 0.0
    %vm6150 = vcmp.ge.f32.partialorder %v6131, 0.0
    %vm6151 = vcmp.ge.f32.partialorder %v6018, 0.0
    %vm6152 = vcmp.ge.f32.partialorder %v6134, 0.0
    %vm6153 = vcmp.ge.f32.partialorder %v6020, 0.0
    %vm6154 = vcmp.ge.f32.partialorder %v6136, 0.0
    %vm6155 = vcmp.ge.f32.partialorder %v6023, 0.0
    %vm6156 = vcmp.ge.f32.partialorder %v6139, 0.0
    %vm6157 = vcmp.ge.f32.partialorder %v6025, 0.0
    %vm6158 = vcmp.ge.f32.partialorder %v6141, 0.0
    %v6159 = vmul.f32 %v6008, 0.2
    %v6160 = vmul.f32 %v6124, 0.2
    %v6161 = vmul.f32 %v6010, 0.2
    %v6162 = vmul.f32 %v6126, 0.2
    %v6163 = vmul.f32 %v6013, 0.2
    %v6164 = vmul.f32 %v6129, 0.2
    %v6165 = vmul.f32 %v6015, 0.2
    %v6166 = vmul.f32 %v6131, 0.2
    %v6167 = vmul.f32 %v6018, 0.2
    %v6168 = vmul.f32 %v6134, 0.2
    %v6169 = vmul.f32 %v6020, 0.2
    %v6170 = vmul.f32 %v6136, 0.2
    %v6171 = vmul.f32 %v6023, 0.2
    %v6172 = vmul.f32 %v6139, 0.2
    %v6173 = vmul.f32 %v6025, 0.2
    %v6174 = vmul.f32 %v6141, 0.2
    %v6175 = vsel %vm6143, %v6008, %v6159
    %v6176 = vsel %vm6144, %v6124, %v6160
    %v6177 = vsel %vm6145, %v6010, %v6161
    %v6178 = vsel %vm6146, %v6126, %v6162
    %v6179 = vsel %vm6147, %v6013, %v6163
    %v6180 = vsel %vm6148, %v6129, %v6164
    %v6181 = vsel %vm6149, %v6015, %v6165
    %v6182 = vsel %vm6150, %v6131, %v6166
    %v6183 = vsel %vm6151, %v6018, %v6167
    %v6184 = vsel %vm6152, %v6134, %v6168
    %v6185 = vsel %vm6153, %v6020, %v6169
    %v6186 = vsel %vm6154, %v6136, %v6170
    %v6187 = vsel %vm6155, %v6023, %v6171
    %v6188 = vsel %vm6156, %v6139, %v6172
    %v6189 = vsel %vm6157, %v6025, %v6173
    %v6190 = vsel %vm6158, %v6141, %v6174
    %s6191 = sadd.s32 %s113, 50332051
    %v6192 = vstv %s6191
    %v6193 = vxor.u32 %v1623, %v6192
    %v6194 = vxor.u32 %v1624, %v6192
    %v6195 = vadd.s32 %v1631, %v6193
    %v6196 = vadd.s32 %v1631, %v6194
    %v6197 = vadd.s32 %v1632, %v6193
    %v6198 = vadd.s32 %v1632, %v6194
    %v6199 = vadd.s32 %v1633, %v6193
    %v6200 = vadd.s32 %v1633, %v6194
    %v6201 = vadd.s32 %v1634, %v6193
    %v6202 = vadd.s32 %v1634, %v6194
    %v6203 = vadd.s32 %v1635, %v6193
    %v6204 = vadd.s32 %v1635, %v6194
    %v6205 = vadd.s32 %v1636, %v6193
    %v6206 = vadd.s32 %v1636, %v6194
    %v6207 = vadd.s32 %v1637, %v6193
    %v6208 = vadd.s32 %v1637, %v6194
    %v6209 = vadd.s32 %v1638, %v6193
    %v6210 = vadd.s32 %v1638, %v6194
    %v6211 = vshrl.u32 %v6195, 16
    %v6212 = vshrl.u32 %v6196, 16
    %v6213 = vshrl.u32 %v6197, 16
    %v6214 = vshrl.u32 %v6198, 16
    %v6215 = vshrl.u32 %v6199, 16
    %v6216 = vshrl.u32 %v6200, 16
    %v6217 = vshrl.u32 %v6201, 16
    %v6218 = vshrl.u32 %v6202, 16
    %v6219 = vshrl.u32 %v6203, 16
    %v6220 = vshrl.u32 %v6204, 16
    %v6221 = vshrl.u32 %v6205, 16
    %v6222 = vshrl.u32 %v6206, 16
    %v6223 = vshrl.u32 %v6207, 16
    %v6224 = vshrl.u32 %v6208, 16
    %v6225 = vshrl.u32 %v6209, 16
    %v6226 = vshrl.u32 %v6210, 16
    %v6227 = vxor.u32 %v6195, %v6211
    %v6228 = vxor.u32 %v6196, %v6212
    %v6229 = vxor.u32 %v6197, %v6213
    %v6230 = vxor.u32 %v6198, %v6214
    %v6231 = vxor.u32 %v6199, %v6215
    %v6232 = vxor.u32 %v6200, %v6216
    %v6233 = vxor.u32 %v6201, %v6217
    %v6234 = vxor.u32 %v6202, %v6218
    %v6235 = vxor.u32 %v6203, %v6219
    %v6236 = vxor.u32 %v6204, %v6220
    %v6237 = vxor.u32 %v6205, %v6221
    %v6238 = vxor.u32 %v6206, %v6222
    %v6239 = vxor.u32 %v6207, %v6223
    %v6240 = vxor.u32 %v6208, %v6224
    %v6241 = vxor.u32 %v6209, %v6225
    %v6242 = vxor.u32 %v6210, %v6226
    %v6243 = vmul.u32 %v6227, 2146121005
    %v6244 = vmul.u32 %v6228, 2146121005
    %v6245 = vmul.u32 %v6229, 2146121005
    %v6246 = vmul.u32 %v6230, 2146121005
    %v6247 = vmul.u32 %v6231, 2146121005
    %v6248 = vmul.u32 %v6232, 2146121005
    %v6249 = vmul.u32 %v6233, 2146121005
    %v6250 = vmul.u32 %v6234, 2146121005
    %v6251 = vmul.u32 %v6235, 2146121005
    %v6252 = vmul.u32 %v6236, 2146121005
    %v6253 = vmul.u32 %v6237, 2146121005
    %v6254 = vmul.u32 %v6238, 2146121005
    %v6255 = vmul.u32 %v6239, 2146121005
    %v6256 = vmul.u32 %v6240, 2146121005
    %v6257 = vmul.u32 %v6241, 2146121005
    %v6258 = vmul.u32 %v6242, 2146121005
    %v6259 = vshrl.u32 %v6243, 15
    %v6260 = vshrl.u32 %v6244, 15
    %v6261 = vshrl.u32 %v6245, 15
    %v6262 = vshrl.u32 %v6246, 15
    %v6263 = vshrl.u32 %v6247, 15
    %v6264 = vshrl.u32 %v6248, 15
    %v6265 = vshrl.u32 %v6249, 15
    %v6266 = vshrl.u32 %v6250, 15
    %v6267 = vshrl.u32 %v6251, 15
    %v6268 = vshrl.u32 %v6252, 15
    %v6269 = vshrl.u32 %v6253, 15
    %v6270 = vshrl.u32 %v6254, 15
    %v6271 = vshrl.u32 %v6255, 15
    %v6272 = vshrl.u32 %v6256, 15
    %v6273 = vshrl.u32 %v6257, 15
    %v6274 = vshrl.u32 %v6258, 15
    %v6275 = vxor.u32 %v6243, %v6259
    %v6276 = vxor.u32 %v6244, %v6260
    %v6277 = vxor.u32 %v6245, %v6261
    %v6278 = vxor.u32 %v6246, %v6262
    %v6279 = vxor.u32 %v6247, %v6263
    %v6280 = vxor.u32 %v6248, %v6264
    %v6281 = vxor.u32 %v6249, %v6265
    %v6282 = vxor.u32 %v6250, %v6266
    %v6283 = vxor.u32 %v6251, %v6267
    %v6284 = vxor.u32 %v6252, %v6268
    %v6285 = vxor.u32 %v6253, %v6269
    %v6286 = vxor.u32 %v6254, %v6270
    %v6287 = vxor.u32 %v6255, %v6271
    %v6288 = vxor.u32 %v6256, %v6272
    %v6289 = vxor.u32 %v6257, %v6273
    %v6290 = vxor.u32 %v6258, %v6274
    %v6291 = vmul.u32 %v6275, 2221713035
    %v6292 = vmul.u32 %v6276, 2221713035
    %v6293 = vmul.u32 %v6277, 2221713035
    %v6294 = vmul.u32 %v6278, 2221713035
    %v6295 = vmul.u32 %v6279, 2221713035
    %v6296 = vmul.u32 %v6280, 2221713035
    %v6297 = vmul.u32 %v6281, 2221713035
    %v6298 = vmul.u32 %v6282, 2221713035
    %v6299 = vmul.u32 %v6283, 2221713035
    %v6300 = vmul.u32 %v6284, 2221713035
    %v6301 = vmul.u32 %v6285, 2221713035
    %v6302 = vmul.u32 %v6286, 2221713035
    %v6303 = vmul.u32 %v6287, 2221713035
    %v6304 = vmul.u32 %v6288, 2221713035
    %v6305 = vmul.u32 %v6289, 2221713035
    %v6306 = vmul.u32 %v6290, 2221713035
    %v6307 = vshrl.u32 %v6291, 16
    %v6308 = vshrl.u32 %v6292, 16
    %v6309 = vshrl.u32 %v6293, 16
    %v6310 = vshrl.u32 %v6294, 16
    %v6311 = vshrl.u32 %v6295, 16
    %v6312 = vshrl.u32 %v6296, 16
    %v6313 = vshrl.u32 %v6297, 16
    %v6314 = vshrl.u32 %v6298, 16
    %v6315 = vshrl.u32 %v6299, 16
    %v6316 = vshrl.u32 %v6300, 16
    %v6317 = vshrl.u32 %v6301, 16
    %v6318 = vshrl.u32 %v6302, 16
    %v6319 = vshrl.u32 %v6303, 16
    %v6320 = vshrl.u32 %v6304, 16
    %v6321 = vshrl.u32 %v6305, 16
    %v6322 = vshrl.u32 %v6306, 16
    %v6323 = vxor.u32 %v6291, %v6307
    %v6324 = vxor.u32 %v6292, %v6308
    %v6325 = vxor.u32 %v6293, %v6309
    %v6326 = vxor.u32 %v6294, %v6310
    %v6327 = vxor.u32 %v6295, %v6311
    %v6328 = vxor.u32 %v6296, %v6312
    %v6329 = vxor.u32 %v6297, %v6313
    %v6330 = vxor.u32 %v6298, %v6314
    %v6331 = vxor.u32 %v6299, %v6315
    %v6332 = vxor.u32 %v6300, %v6316
    %v6333 = vxor.u32 %v6301, %v6317
    %v6334 = vxor.u32 %v6302, %v6318
    %v6335 = vxor.u32 %v6303, %v6319
    %v6336 = vxor.u32 %v6304, %v6320
    %v6337 = vxor.u32 %v6305, %v6321
    %v6338 = vxor.u32 %v6306, %v6322
    %v6339 = vadd.s32 %v6323, 2147483648
    %vm6341 = vcmp.ge.s32.totalorder %v6339, 3435973837
    %v6342 = vadd.s32 %v6324, 2147483648
    %vm6344 = vcmp.ge.s32.totalorder %v6342, 3435973837
    %v6345 = vadd.s32 %v6325, 2147483648
    %vm6347 = vcmp.ge.s32.totalorder %v6345, 3435973837
    %v6348 = vadd.s32 %v6326, 2147483648
    %vm6350 = vcmp.ge.s32.totalorder %v6348, 3435973837
    %v6351 = vadd.s32 %v6327, 2147483648
    %vm6353 = vcmp.ge.s32.totalorder %v6351, 3435973837
    %v6354 = vadd.s32 %v6328, 2147483648
    %vm6356 = vcmp.ge.s32.totalorder %v6354, 3435973837
    %v6357 = vadd.s32 %v6329, 2147483648
    %vm6359 = vcmp.ge.s32.totalorder %v6357, 3435973837
    %v6360 = vadd.s32 %v6330, 2147483648
    %vm6362 = vcmp.ge.s32.totalorder %v6360, 3435973837
    %v6363 = vadd.s32 %v6331, 2147483648
    %vm6365 = vcmp.ge.s32.totalorder %v6363, 3435973837
    %v6366 = vadd.s32 %v6332, 2147483648
    %vm6368 = vcmp.ge.s32.totalorder %v6366, 3435973837
    %v6369 = vadd.s32 %v6333, 2147483648
    %vm6371 = vcmp.ge.s32.totalorder %v6369, 3435973837
    %v6372 = vadd.s32 %v6334, 2147483648
    %vm6374 = vcmp.ge.s32.totalorder %v6372, 3435973837
    %v6375 = vadd.s32 %v6335, 2147483648
    %vm6377 = vcmp.ge.s32.totalorder %v6375, 3435973837
    %v6378 = vadd.s32 %v6336, 2147483648
    %vm6380 = vcmp.ge.s32.totalorder %v6378, 3435973837
    %v6381 = vadd.s32 %v6337, 2147483648
    %vm6383 = vcmp.ge.s32.totalorder %v6381, 3435973837
    %v6384 = vadd.s32 %v6338, 2147483648
    %vm6386 = vcmp.ge.s32.totalorder %v6384, 3435973837
    %v6387 = vsel %vm6341, %v6175, 0.0
    %v6388 = vsel %vm6344, %v6176, 0.0
    %v6389 = vsel %vm6347, %v6177, 0.0
    %v6390 = vsel %vm6350, %v6178, 0.0
    %v6391 = vsel %vm6353, %v6179, 0.0
    %v6392 = vsel %vm6356, %v6180, 0.0
    %v6393 = vsel %vm6359, %v6181, 0.0
    %v6394 = vsel %vm6362, %v6182, 0.0
    %v6395 = vsel %vm6365, %v6183, 0.0
    %v6396 = vsel %vm6368, %v6184, 0.0
    %v6397 = vsel %vm6371, %v6185, 0.0
    %v6398 = vsel %vm6374, %v6186, 0.0
    %v6399 = vsel %vm6377, %v6187, 0.0
    %v6400 = vsel %vm6380, %v6188, 0.0
    %v6401 = vsel %vm6383, %v6189, 0.0
    %v6402 = vsel %vm6386, %v6190, 0.0
    %v6403 = vld [vmem:[%s8] sm:$0x3]
    %v6405 = vperm.slane %v6403, 0
    %v6406 = vperm.slane %v6403, 1
    %v6409 = vmul.f32 %v6387, %v6405
    %v6410 = vmul.f32 %v6388, %v6406
    %v6411 = vmul.f32 %v6389, %v6405
    %v6412 = vmul.f32 %v6390, %v6406
    %v6413 = vmul.f32 %v6391, %v6405
    %v6414 = vmul.f32 %v6392, %v6406
    %v6415 = vmul.f32 %v6393, %v6405
    %v6416 = vmul.f32 %v6394, %v6406
    %v6417 = vmul.f32 %v6395, %v6405
    %v6418 = vmul.f32 %v6396, %v6406
    %v6419 = vmul.f32 %v6397, %v6405
    %v6420 = vmul.f32 %v6398, %v6406
    %v6421 = vmul.f32 %v6399, %v6405
    %v6422 = vmul.f32 %v6400, %v6406
    %v6423 = vmul.f32 %v6401, %v6405
    %v6424 = vmul.f32 %v6402, %v6406
    %v6425 = vadd.f32 %v6409, %v6410
    %6426 = vadd.xlane.f32.xlu0 %v6425
    %v6427 = vpop.xlane.xlu0 %6426
    %v6428 = vadd.f32 %v6411, %v6412
    %6429 = vadd.xlane.f32.xlu0 %v6428
    %v6430 = vpop.xlane.xlu0 %6429
    %v6431 = vadd.f32 %v6413, %v6414
    %6432 = vadd.xlane.f32.xlu0 %v6431
    %v6433 = vpop.xlane.xlu0 %6432
    %v6434 = vadd.f32 %v6415, %v6416
    %6435 = vadd.xlane.f32.xlu0 %v6434
    %v6436 = vpop.xlane.xlu0 %6435
    %v6437 = vadd.f32 %v6417, %v6418
    %6438 = vadd.xlane.f32.xlu0 %v6437
    %v6439 = vpop.xlane.xlu0 %6438
    %v6440 = vadd.f32 %v6419, %v6420
    %6441 = vadd.xlane.f32.xlu0 %v6440
    %v6442 = vpop.xlane.xlu0 %6441
    %v6443 = vadd.f32 %v6421, %v6422
    %6444 = vadd.xlane.f32.xlu0 %v6443
    %v6445 = vpop.xlane.xlu0 %6444
    %v6446 = vadd.f32 %v6423, %v6424
    %6447 = vadd.xlane.f32.xlu0 %v6446
    %v6448 = vpop.xlane.xlu0 %6447
    %v6449 = vld [vmem:[#allocation4] sm:$0x1]
    %v6451 = vperm.slane %v6449, 0
    %v6453 = vadd.f32 %v6427, %v6451
    %v6454 = vadd.f32 %v6430, %v6451
    %v6455 = vadd.f32 %v6433, %v6451
    %v6456 = vadd.f32 %v6436, %v6451
    %v6457 = vadd.f32 %v6439, %v6451
    %v6458 = vadd.f32 %v6442, %v6451
    %v6459 = vadd.f32 %v6445, %v6451
    %v6460 = vadd.f32 %v6448, %v6451
    %v6461 = vsub.f32 0.0, %v6453
    %v6462 = vsub.f32 0.0, %v6454
    %v6463 = vsub.f32 0.0, %v6455
    %v6464 = vsub.f32 0.0, %v6456
    %v6465 = vsub.f32 0.0, %v6457
    %v6466 = vsub.f32 0.0, %v6458
    %v6467 = vsub.f32 0.0, %v6459
    %v6468 = vsub.f32 0.0, %v6460
    %v6469 = vmul.f32 %v6461, 1.442695
    %v6470 = vpow.pop %v6469
    %v6471 = vmul.f32 %v6462, 1.442695
    %v6472 = vpow.pop %v6471
    %v6473 = vmul.f32 %v6463, 1.442695
    %v6474 = vpow.pop %v6473
    %v6475 = vmul.f32 %v6464, 1.442695
    %v6476 = vpow.pop %v6475
    %v6477 = vmul.f32 %v6465, 1.442695
    %v6478 = vpow.pop %v6477
    %v6479 = vmul.f32 %v6466, 1.442695
    %v6480 = vpow.pop %v6479
    %v6481 = vmul.f32 %v6467, 1.442695
    %v6482 = vpow.pop %v6481
    %v6483 = vmul.f32 %v6468, 1.442695
    %v6484 = vpow.pop %v6483
    %v6485 = vadd.f32 %v6470, 1.0
    %v6486 = vadd.f32 %v6472, 1.0
    %v6487 = vadd.f32 %v6474, 1.0
    %v6488 = vadd.f32 %v6476, 1.0
    %v6489 = vadd.f32 %v6478, 1.0
    %v6490 = vadd.f32 %v6480, 1.0
    %v6491 = vadd.f32 %v6482, 1.0
    %v6492 = vadd.f32 %v6484, 1.0
    %v6493 = vrcp.pop %v6485
    %v6494 = vmul.f32 %v6485, %v6493
    %v6495 = vsub.f32 1.0, %v6494
    %v6496 = vmul.f32 %v6493, %v6495
    %v6497 = vadd.f32 %v6493, %v6496
    %vm6498 = vweird.f32 %v6485
    %vm6499 = vweird.f32 %v6493
    %vm6500 = vmor %vm6498, %vm6499
    %v6501 = vsel %vm6500, %v6493, %v6497
    %v6502 = vand.u32 2147483647, %v6485
    %vm6503 = vcmp.eq.f32.partialorder %v6502, 8.507059e+37
    %v6504 = vand.u32 %v6485, 2147483648
    %v6505 = vor.u32 1.1754944e-38, %v6504
    %v6506 = vsel %vm6503, %v6505, %v6501
    %v6507 = vmul.f32 1.0, %v6506
    %v6508 = vrcp.pop %v6486
    %v6509 = vmul.f32 %v6486, %v6508
    %v6510 = vsub.f32 1.0, %v6509
    %v6511 = vmul.f32 %v6508, %v6510
    %v6512 = vadd.f32 %v6508, %v6511
    %vm6513 = vweird.f32 %v6486
    %vm6514 = vweird.f32 %v6508
    %vm6515 = vmor %vm6513, %vm6514
    %v6516 = vsel %vm6515, %v6508, %v6512
    %v6517 = vand.u32 2147483647, %v6486
    %vm6518 = vcmp.eq.f32.partialorder %v6517, 8.507059e+37
    %v6519 = vand.u32 %v6486, 2147483648
    %v6520 = vor.u32 1.1754944e-38, %v6519
    %v6521 = vsel %vm6518, %v6520, %v6516
    %v6522 = vmul.f32 1.0, %v6521
    %v6523 = vrcp.pop %v6487
    %v6524 = vmul.f32 %v6487, %v6523
    %v6525 = vsub.f32 1.0, %v6524
    %v6526 = vmul.f32 %v6523, %v6525
    %v6527 = vadd.f32 %v6523, %v6526
    %vm6528 = vweird.f32 %v6487
    %vm6529 = vweird.f32 %v6523
    %vm6530 = vmor %vm6528, %vm6529
    %v6531 = vsel %vm6530, %v6523, %v6527
    %v6532 = vand.u32 2147483647, %v6487
    %vm6533 = vcmp.eq.f32.partialorder %v6532, 8.507059e+37
    %v6534 = vand.u32 %v6487, 2147483648
    %v6535 = vor.u32 1.1754944e-38, %v6534
    %v6536 = vsel %vm6533, %v6535, %v6531
    %v6537 = vmul.f32 1.0, %v6536
    %v6538 = vrcp.pop %v6488
    %v6539 = vmul.f32 %v6488, %v6538
    %v6540 = vsub.f32 1.0, %v6539
    %v6541 = vmul.f32 %v6538, %v6540
    %v6542 = vadd.f32 %v6538, %v6541
    %vm6543 = vweird.f32 %v6488
    %vm6544 = vweird.f32 %v6538
    %vm6545 = vmor %vm6543, %vm6544
    %v6546 = vsel %vm6545, %v6538, %v6542
    %v6547 = vand.u32 2147483647, %v6488
    %vm6548 = vcmp.eq.f32.partialorder %v6547, 8.507059e+37
    %v6549 = vand.u32 %v6488, 2147483648
    %v6550 = vor.u32 1.1754944e-38, %v6549
    %v6551 = vsel %vm6548, %v6550, %v6546
    %v6552 = vmul.f32 1.0, %v6551
    %v6553 = vrcp.pop %v6489
    %v6554 = vmul.f32 %v6489, %v6553
    %v6555 = vsub.f32 1.0, %v6554
    %v6556 = vmul.f32 %v6553, %v6555
    %v6557 = vadd.f32 %v6553, %v6556
    %vm6558 = vweird.f32 %v6489
    %vm6559 = vweird.f32 %v6553
    %vm6560 = vmor %vm6558, %vm6559
    %v6561 = vsel %vm6560, %v6553, %v6557
    %v6562 = vand.u32 2147483647, %v6489
    %vm6563 = vcmp.eq.f32.partialorder %v6562, 8.507059e+37
    %v6564 = vand.u32 %v6489, 2147483648
    %v6565 = vor.u32 1.1754944e-38, %v6564
    %v6566 = vsel %vm6563, %v6565, %v6561
    %v6567 = vmul.f32 1.0, %v6566
    %v6568 = vrcp.pop %v6490
    %v6569 = vmul.f32 %v6490, %v6568
    %v6570 = vsub.f32 1.0, %v6569
    %v6571 = vmul.f32 %v6568, %v6570
    %v6572 = vadd.f32 %v6568, %v6571
    %vm6573 = vweird.f32 %v6490
    %vm6574 = vweird.f32 %v6568
    %vm6575 = vmor %vm6573, %vm6574
    %v6576 = vsel %vm6575, %v6568, %v6572
    %v6577 = vand.u32 2147483647, %v6490
    %vm6578 = vcmp.eq.f32.partialorder %v6577, 8.507059e+37
    %v6579 = vand.u32 %v6490, 2147483648
    %v6580 = vor.u32 1.1754944e-38, %v6579
    %v6581 = vsel %vm6578, %v6580, %v6576
    %v6582 = vmul.f32 1.0, %v6581
    %v6583 = vrcp.pop %v6491
    %v6584 = vmul.f32 %v6491, %v6583
    %v6585 = vsub.f32 1.0, %v6584
    %v6586 = vmul.f32 %v6583, %v6585
    %v6587 = vadd.f32 %v6583, %v6586
    %vm6588 = vweird.f32 %v6491
    %vm6589 = vweird.f32 %v6583
    %vm6590 = vmor %vm6588, %vm6589
    %v6591 = vsel %vm6590, %v6583, %v6587
    %v6592 = vand.u32 2147483647, %v6491
    %vm6593 = vcmp.eq.f32.partialorder %v6592, 8.507059e+37
    %v6594 = vand.u32 %v6491, 2147483648
    %v6595 = vor.u32 1.1754944e-38, %v6594
    %v6596 = vsel %vm6593, %v6595, %v6591
    %v6597 = vmul.f32 1.0, %v6596
    %v6598 = vrcp.pop %v6492
    %v6599 = vmul.f32 %v6492, %v6598
    %v6600 = vsub.f32 1.0, %v6599
    %v6601 = vmul.f32 %v6598, %v6600
    %v6602 = vadd.f32 %v6598, %v6601
    %vm6603 = vweird.f32 %v6492
    %vm6604 = vweird.f32 %v6598
    %vm6605 = vmor %vm6603, %vm6604
    %v6606 = vsel %vm6605, %v6598, %v6602
    %v6607 = vand.u32 2147483647, %v6492
    %vm6608 = vcmp.eq.f32.partialorder %v6607, 8.507059e+37
    %v6609 = vand.u32 %v6492, 2147483648
    %v6610 = vor.u32 1.1754944e-38, %v6609
    %v6611 = vsel %vm6608, %v6610, %v6606
    %v6612 = vmul.f32 1.0, %v6611
    %vm6613 = vcmask 7168
    %6614 = vst.msk [vmem:[%s10] sm:$0xff] %vm6613, %v6507
    %6615 = vst.msk [vmem:[%s10 + $0x8] sm:$0xff] %vm6613, %v6522
    %6616 = vst.msk [vmem:[%s10 + $0x10] sm:$0xff] %vm6613, %v6537
    %6617 = vst.msk [vmem:[%s10 + $0x18] sm:$0xff] %vm6613, %v6552
    %6618 = vst.msk [vmem:[%s10 + $0x20] sm:$0xff] %vm6613, %v6567
    %6619 = vst.msk [vmem:[%s10 + $0x28] sm:$0xff] %vm6613, %v6582
    %6620 = vst.msk [vmem:[%s10 + $0x30] sm:$0xff] %vm6613, %v6597
    %6621 = vst.msk [vmem:[%s10 + $0x38] sm:$0xff] %vm6613, %v6612
    // Predicated region
    $region58: #{tpu_custom_call.1} parent=1 // pred_check
      _
    $region59: #{tpu_custom_call.1} parent=1 // pred_check_branch
      %6623 = sbr.rel (0) target = $region61
    $region60: #{tpu_custom_call.1} parent=1 // pred_region
      _
    $region61: #{tpu_custom_call.1} parent=1 // pred_fallthru
      _
    // Predicated region
    $region62: #{tpu_custom_call.1} parent=1 // pred_check
      _
    $region63: #{tpu_custom_call.1} parent=1 // pred_check_branch
      %6625 = sbr.rel (0) target = $region65
    $region64: #{tpu_custom_call.1} parent=1 // pred_region
      _
    $region65: #{tpu_custom_call.1} parent=1 // pred_fallthru
      _
    %6626 = vsyncpa [#allocation6], 1
    %6627 = vsyncpa [#allocation8], 1
    %6628 = vsyncpa [#allocation11], 1

</llo_original>
